<compile_context>
chip_gen: v7x
topology: tpu7x:2x2x1
jax: 0.10.0
libtpu: 0.0.40
codegen_flags: <defaults>
</compile_context>

<pallas_src>
import jax
import jax.numpy as jnp
from jax.experimental import pallas as pl
from jax.experimental.pallas import tpu as pltpu


C = 128  # padded (lane-dense) channel width

# --- packed-parameter slab layout (static, known at trace time) ---
MAT_NAMES = ("wn", "we", "w1a", "w2a", "w1b", "w2b", "wl1", "wl2")  # each [C, C]
VEC_NAMES = ("bn", "be",
             "b1a", "b2a", "ga", "bta", "ma", "va",
             "b1b", "b2b", "gb", "btb", "mb", "vb",
             "bl1", "bl2")                                           # each [1, C]
MAT_IDX = {n: i for i, n in enumerate(MAT_NAMES)}
VEC_IDX = {n: i for i, n in enumerate(VEC_NAMES)}


def mutagnet_kernel(x_ref, ea_ref, gsrc_ref, sdst_ref, pool_ref,
                    mat_ref, vec_ref, out_ref):
    f32 = jnp.float32
    dot = lambda a, b: jnp.dot(a, b, preferred_element_type=f32)

    def mat(name):                       # static slice: zero-cost address offset
        i = MAT_IDX[name]
        return mat_ref[i * C:(i + 1) * C, :]

    def vec(name):
        i = VEC_IDX[name]
        return vec_ref[i:i + 1, :]

    # Structural one-hot matrices stored bf16 (exact 0/1); promote to f32 once
    # (hoisted out of the layer loop) so all arithmetic stays f32-exact.
    gsrc = gsrc_ref[...].astype(f32)     # [E, N] one-hot source gather
    sdst = sdst_ref[...].astype(f32)     # [N, E] one-hot target scatter

    # node / edge embeddings (Linear(14,32), Linear(3,32), zero-padded to 128)
    h = dot(x_ref[...], mat("wn")) + vec("bn")        # [N, 128]
    ea = dot(ea_ref[...], mat("we")) + vec("be")      # [E, 128]

    def gine_layer(h, tag):
        src = dot(gsrc, h)                            # x_j per edge      [E, 128]
        msg = jnp.maximum(src + ea, 0.0)              # relu(x_j + edge_attr)
        agg = dot(sdst, msg)                          # sum over incoming [N, 128]
        out = agg + h                                 # + (1+eps)*x_i, eps = 0
        hid = jnp.maximum(dot(out, mat("w1" + tag)) + vec("b1" + tag), 0.0)
        out = dot(hid, mat("w2" + tag)) + vec("b2" + tag)
        out = (vec("g" + tag) * (out - vec("m" + tag))
               * jax.lax.rsqrt(vec("v" + tag) + 1e-5) + vec("bt" + tag))
        return jnp.maximum(out, 0.0)                  # ReLU

    h = gine_layer(h, "a")
    h = gine_layer(h, "b")

    pooled = dot(pool_ref[...], h)                    # global_mean_pool  [G, 128]
    p1 = jnp.maximum(dot(pooled, mat("wl1")) + vec("bl1"), 0.0)   # lin1 + ReLU
    out_ref[...] = dot(p1, mat("wl2")) + vec("bl2")               # lin2 (pre-softmax)
    # TODO(synk): self.softmax(pred) is stored as self.readout but not returned
    # by forward(); the kernel returns pred (pre-softmax) exactly like forward().
    # TODO(synk): for very large batched graphs (N,E in the tens of thousands)
    # the dense E x N gather/scatter should become a tiled scalar-prefetch
    # gather (PrefetchScalarGridSpec) with a "parallel" graph-batch grid axis so
    # v7x's 64 MiB VMEM and second TensorCore are used; at this scale a single
    # fused call is optimal.


# ---------------------------------------------------------------- wrapper glue

def _round_up(n, m):
    return (n + m - 1) // m * m


def _pad_mat(w):
    out = jnp.zeros((C, C), jnp.float32)
    return out.at[:w.shape[0], :w.shape[1]].set(w.astype(jnp.float32))


def _pad_vec(v, fill=0.0):
    out = jnp.full((1, C), fill, jnp.float32)
    return out.at[:, :v.shape[1]].set(v.astype(jnp.float32))


def pack_params(params):
    (wn, bn_, we, be,
     w1a, b1a, w2a, b2a, ga, bta, ma, va,
     w1b, b1b, w2b, b2b, gb, btb, mb, vb,
     wl1, bl1, wl2, bl2) = params
    mats = dict(wn=wn, we=we, w1a=w1a, w2a=w2a, w1b=w1b, w2b=w2b,
                wl1=wl1, wl2=wl2)
    vecs = dict(bn=bn_, be=be, b1a=b1a, b2a=b2a, ga=ga, bta=bta, ma=ma, va=va,
                b1b=b1b, b2b=b2b, gb=gb, btb=btb, mb=mb, vb=vb,
                bl1=bl1, bl2=bl2)
    mat_slab = jnp.concatenate([_pad_mat(mats[n]) for n in MAT_NAMES], axis=0)
    # Pad BatchNorm variance lanes with 1.0 (padded lanes have (x-mean)=0, so
    # any positive value is exact; 1.0 keeps rsqrt well conditioned).
    vec_slab = jnp.concatenate(
        [_pad_vec(vecs[n], fill=1.0 if n in ("va", "vb") else 0.0)
         for n in VEC_NAMES], axis=0)
    return mat_slab, vec_slab                       # [8*128, 128], [16, 128]


def mutagnet_forward(x, edge_index, edge_attr, batch, num_graphs, params):
    f32, bf16 = jnp.float32, jnp.bfloat16
    N, E, G = x.shape[0], edge_attr.shape[0], int(num_graphs)
    Np = _round_up(N, C)      # lane-dense last dim for gsrc / pool
    Ep = _round_up(E, C)      # lane-dense last dim for sdst
    Gp = _round_up(G, 8)

    # lane-dense zero padding of the raw features (exact through padded weights)
    x_p = jnp.zeros((Np, C), f32).at[:N, :x.shape[1]].set(x.astype(f32))
    ea_p = jnp.zeros((Ep, C), f32).at[:E, :edge_attr.shape[1]].set(
        edge_attr.astype(f32))

    # dense gather / scatter / pooling matrices; padded rows/cols are zero so
    # padded nodes/edges/graphs never contaminate the real outputs.
    src, dst = edge_index[0], edge_index[1]
    gsrc = jnp.zeros((Ep, Np), bf16).at[:E, :N].set(
        (src[:, None] == jnp.arange(N)[None, :]).astype(bf16))       # [E, N]
    sdst = jnp.zeros((Np, Ep), bf16).at[:N, :E].set(
        (dst[None, :] == jnp.arange(N)[:, None]).astype(bf16))       # [N, E]
    onehot = (batch[None, :] == jnp.arange(G)[:, None]).astype(f32)  # [G, N]
    pool_real = onehot / jnp.maximum(onehot.sum(axis=1, keepdims=True), 1.0)
    pool = jnp.zeros((Gp, Np), f32).at[:G, :N].set(pool_real)

    mat_slab, vec_slab = pack_params(params)

    inputs = (x_p, ea_p, gsrc, sdst, pool, mat_slab, vec_slab)
    vmem = pl.BlockSpec(memory_space=pltpu.MemorySpace.VMEM)
    out = pl.pallas_call(
        mutagnet_kernel,
        out_shape=jax.ShapeDtypeStruct((Gp, C), f32),   # lane-dense output slab
        in_specs=[vmem] * len(inputs),
        out_specs=vmem,
        compiler_params=pltpu.CompilerParams(vmem_limit_bytes=16 * 1024 * 1024),
    )(*inputs)
    return out[:G, :2]


# ---------------------------------------------------------------- parameters

def init_params(key):
    """Deterministic synthetic parameters (shapes from MutagNet.__init__)."""
    keys = iter(jax.random.split(key, 64))

    def lin(din, dout):
        w = jax.random.uniform(next(keys), (din, dout), jnp.float32, -0.5, 0.5)
        b = jax.random.uniform(next(keys), (1, dout), jnp.float32, -0.5, 0.5)
        return w, b

    def bn(d):
        gamma = jax.random.uniform(next(keys), (1, d), jnp.float32, 0.5, 1.5)
        beta = jax.random.uniform(next(keys), (1, d), jnp.float32, -0.5, 0.5)
        mean = jax.random.uniform(next(keys), (1, d), jnp.float32, -0.5, 0.5)
        var = jax.random.uniform(next(keys), (1, d), jnp.float32, 0.5, 1.5)
        return gamma, beta, mean, var

    params = []
    params += lin(14, 32)           # node_emb
    params += lin(3, 32)            # edge_emb
    for _ in range(2):              # 2 GINEConv units
        params += lin(32, 75)       # conv nn Linear(32,75)
        params += lin(75, 32)       # conv nn Linear(75,32)
        params += bn(32)            # BatchNorm(32)
    params += lin(32, 16)           # lin1
    params += lin(16, 2)            # lin2
    return tuple(params)


def reference_forward(x, edge_index, edge_attr, batch, num_graphs, params):
    """Pure-JAX reference for correctness checking."""
    hp = jax.lax.Precision.HIGHEST
    mm = lambda a, b: jnp.dot(a, b, precision=hp)
    p = list(params)
    wn, bn_, we, be = p[0], p[1], p[2], p[3]
    convs = [p[4:12], p[12:20]]
    wl1, bl1, wl2, bl2 = p[20], p[21], p[22], p[23]

    h = mm(x, wn) + bn_
    ea = mm(edge_attr, we) + be
    src, dst = edge_index[0], edge_index[1]
    for (w1, b1, w2, b2, gamma, beta, mean, var) in convs:
        msg = jax.nn.relu(h[src] + ea)
        agg = jax.ops.segment_sum(msg, dst, num_segments=h.shape[0])
        out = agg + h
        out = mm(jax.nn.relu(mm(out, w1) + b1), w2) + b2
        out = gamma * (out - mean) * jax.lax.rsqrt(var + 1e-5) + beta
        h = jax.nn.relu(out)
    sums = jax.ops.segment_sum(h, batch, num_segments=num_graphs)
    counts = jax.ops.segment_sum(jnp.ones_like(batch, jnp.float32), batch,
                                 num_segments=num_graphs)
    pooled = sums / jnp.maximum(counts, 1.0)[:, None]
    p1 = jax.nn.relu(mm(pooled, wl1) + bl1)
    return mm(p1, wl2) + bl2


if __name__ == "__main__":
    key = jax.random.PRNGKey(0)
    k_src, k_dst, k_x, k_ea, k_p = jax.random.split(key, 5)

    # Batched problem: 8 graphs x 32 nodes x 64 edges per graph
    # (amortizes the fixed pallas_call / DMA-descriptor overhead).
    G, nodes_per_graph, edges_per_graph = 8, 32, 64
    N, E = G * nodes_per_graph, G * edges_per_graph

    x = jax.random.uniform(k_x, (N, 14), jnp.float32)
    edge_attr = jax.random.uniform(k_ea, (E, 3), jnp.float32)
    src_l = jax.random.randint(k_src, (G, edges_per_graph), 0, nodes_per_graph,
                               dtype=jnp.int32)
    dst_l = jax.random.randint(k_dst, (G, edges_per_graph), 0, nodes_per_graph,
                               dtype=jnp.int32)
    offs = (jnp.arange(G, dtype=jnp.int32) * nodes_per_graph)[:, None]
    edge_index = jnp.stack([(src_l + offs).reshape(-1),
                            (dst_l + offs).reshape(-1)])
    batch = jnp.repeat(jnp.arange(G, dtype=jnp.int32), nodes_per_graph)

    params = init_params(k_p)

    pred = mutagnet_forward(x, edge_index, edge_attr, batch, G, params)
    pred = jax.block_until_ready(pred)

    ref = reference_forward(x, edge_index, edge_attr, batch, G, params)
    assert pred.shape == (G, 2)
    assert jnp.allclose(pred, ref, atol=2e-3, rtol=2e-3), (pred, ref)

    print("KERNEL_OK")
</pallas_src>

<mosaic_0001>
module attributes {stable_mosaic.version = 11 : i64} {
  func.func @mutagnet_kernel(%arg0: memref<256x128xf32, #tpu.memory_space<vmem>>, %arg1: memref<512x128xf32, #tpu.memory_space<vmem>>, %arg2: memref<512x256xbf16, #tpu.memory_space<vmem>>, %arg3: memref<256x512xbf16, #tpu.memory_space<vmem>>, %arg4: memref<8x256xf32, #tpu.memory_space<vmem>>, %arg5: memref<1024x128xf32, #tpu.memory_space<vmem>>, %arg6: memref<16x128xf32, #tpu.memory_space<vmem>>, %arg7: memref<8x128xf32, #tpu.memory_space<vmem>>) attributes {dimension_semantics = [], scalar_prefetch = 0 : i64, scratch_operands = 0 : i64, tpu.core_type = #tpu.core_type<tc>} {
    %c0 = arith.constant 0 : index
    %c0_0 = arith.constant 0 : index
    %0 = vector.load %arg2[%c0, %c0_0] : memref<512x256xbf16, #tpu.memory_space<vmem>>, vector<512x256xbf16>
    %1 = arith.extf %0 : vector<512x256xbf16> to vector<512x256xf32>
    %c0_1 = arith.constant 0 : index
    %c0_2 = arith.constant 0 : index
    %2 = vector.load %arg3[%c0_1, %c0_2] : memref<256x512xbf16, #tpu.memory_space<vmem>>, vector<256x512xbf16>
    %3 = arith.extf %2 : vector<256x512xbf16> to vector<256x512xf32>
    %c0_3 = arith.constant 0 : index
    %c0_4 = arith.constant 0 : index
    %4 = vector.load %arg0[%c0_3, %c0_4] : memref<256x128xf32, #tpu.memory_space<vmem>>, vector<256x128xf32>
    %c0_5 = arith.constant 0 : index
    %c0_6 = arith.constant 0 : index
    %5 = vector.load %arg5[%c0_5, %c0_6] : memref<1024x128xf32, #tpu.memory_space<vmem>>, vector<128x128xf32>
    %cst = arith.constant dense<0.000000e+00> : vector<256x128xf32>
    %6 = tpu.matmul %4, %5, %cst {dimension_numbers = #tpu.dot_dimension_numbers<[1], [0], [0], [1], [0, 0, 1, 1], [], []>} : vector<256x128xf32>, vector<128x128xf32>, vector<256x128xf32> -> vector<256x128xf32>
    %c0_7 = arith.constant 0 : index
    %c0_8 = arith.constant 0 : index
    %7 = vector.load %arg6[%c0_7, %c0_8] : memref<16x128xf32, #tpu.memory_space<vmem>>, vector<1x128xf32>
    %8 = vector.broadcast %7 : vector<1x128xf32> to vector<256x128xf32>
    %9 = arith.addf %6, %8 : vector<256x128xf32>
    %c0_9 = arith.constant 0 : index
    %c0_10 = arith.constant 0 : index
    %10 = vector.load %arg1[%c0_9, %c0_10] : memref<512x128xf32, #tpu.memory_space<vmem>>, vector<512x128xf32>
    %c128 = arith.constant 128 : index
    %c0_11 = arith.constant 0 : index
    %11 = vector.load %arg5[%c128, %c0_11] : memref<1024x128xf32, #tpu.memory_space<vmem>>, vector<128x128xf32>
    %cst_12 = arith.constant dense<0.000000e+00> : vector<512x128xf32>
    %12 = tpu.matmul %10, %11, %cst_12 {dimension_numbers = #tpu.dot_dimension_numbers<[1], [0], [0], [1], [0, 0, 1, 1], [], []>} : vector<512x128xf32>, vector<128x128xf32>, vector<512x128xf32> -> vector<512x128xf32>
    %c1 = arith.constant 1 : index
    %c0_13 = arith.constant 0 : index
    %13 = vector.load %arg6[%c1, %c0_13] : memref<16x128xf32, #tpu.memory_space<vmem>>, vector<1x128xf32>
    %14 = vector.broadcast %13 : vector<1x128xf32> to vector<512x128xf32>
    %15 = arith.addf %12, %14 : vector<512x128xf32>
    %cst_14 = arith.constant dense<0.000000e+00> : vector<512x128xf32>
    %16 = tpu.matmul %1, %9, %cst_14 {dimension_numbers = #tpu.dot_dimension_numbers<[1], [0], [0], [1], [0, 0, 1, 1], [], []>} : vector<512x256xf32>, vector<256x128xf32>, vector<512x128xf32> -> vector<512x128xf32>
    %17 = arith.addf %16, %15 : vector<512x128xf32>
    %cst_15 = arith.constant 0.000000e+00 : f32
    %18 = vector.broadcast %cst_15 : f32 to vector<512x128xf32>
    %19 = arith.maximumf %17, %18 : vector<512x128xf32>
    %cst_16 = arith.constant dense<0.000000e+00> : vector<256x128xf32>
    %20 = tpu.matmul %3, %19, %cst_16 {dimension_numbers = #tpu.dot_dimension_numbers<[1], [0], [0], [1], [0, 0, 1, 1], [], []>} : vector<256x512xf32>, vector<512x128xf32>, vector<256x128xf32> -> vector<256x128xf32>
    %21 = arith.addf %20, %9 : vector<256x128xf32>
    %c256 = arith.constant 256 : index
    %c0_17 = arith.constant 0 : index
    %22 = vector.load %arg5[%c256, %c0_17] : memref<1024x128xf32, #tpu.memory_space<vmem>>, vector<128x128xf32>
    %cst_18 = arith.constant dense<0.000000e+00> : vector<256x128xf32>
    %23 = tpu.matmul %21, %22, %cst_18 {dimension_numbers = #tpu.dot_dimension_numbers<[1], [0], [0], [1], [0, 0, 1, 1], [], []>} : vector<256x128xf32>, vector<128x128xf32>, vector<256x128xf32> -> vector<256x128xf32>
    %c2 = arith.constant 2 : index
    %c0_19 = arith.constant 0 : index
    %24 = vector.load %arg6[%c2, %c0_19] : memref<16x128xf32, #tpu.memory_space<vmem>>, vector<1x128xf32>
    %25 = vector.broadcast %24 : vector<1x128xf32> to vector<256x128xf32>
    %26 = arith.addf %23, %25 : vector<256x128xf32>
    %cst_20 = arith.constant 0.000000e+00 : f32
    %27 = vector.broadcast %cst_20 : f32 to vector<256x128xf32>
    %28 = arith.maximumf %26, %27 : vector<256x128xf32>
    %c384 = arith.constant 384 : index
    %c0_21 = arith.constant 0 : index
    %29 = vector.load %arg5[%c384, %c0_21] : memref<1024x128xf32, #tpu.memory_space<vmem>>, vector<128x128xf32>
    %cst_22 = arith.constant dense<0.000000e+00> : vector<256x128xf32>
    %30 = tpu.matmul %28, %29, %cst_22 {dimension_numbers = #tpu.dot_dimension_numbers<[1], [0], [0], [1], [0, 0, 1, 1], [], []>} : vector<256x128xf32>, vector<128x128xf32>, vector<256x128xf32> -> vector<256x128xf32>
    %c3 = arith.constant 3 : index
    %c0_23 = arith.constant 0 : index
    %31 = vector.load %arg6[%c3, %c0_23] : memref<16x128xf32, #tpu.memory_space<vmem>>, vector<1x128xf32>
    %32 = vector.broadcast %31 : vector<1x128xf32> to vector<256x128xf32>
    %33 = arith.addf %30, %32 : vector<256x128xf32>
    %c4 = arith.constant 4 : index
    %c0_24 = arith.constant 0 : index
    %34 = vector.load %arg6[%c4, %c0_24] : memref<16x128xf32, #tpu.memory_space<vmem>>, vector<1x128xf32>
    %c6 = arith.constant 6 : index
    %c0_25 = arith.constant 0 : index
    %35 = vector.load %arg6[%c6, %c0_25] : memref<16x128xf32, #tpu.memory_space<vmem>>, vector<1x128xf32>
    %36 = vector.broadcast %35 : vector<1x128xf32> to vector<256x128xf32>
    %37 = arith.subf %33, %36 : vector<256x128xf32>
    %38 = vector.broadcast %34 : vector<1x128xf32> to vector<256x128xf32>
    %39 = arith.mulf %38, %37 : vector<256x128xf32>
    %c7 = arith.constant 7 : index
    %c0_26 = arith.constant 0 : index
    %40 = vector.load %arg6[%c7, %c0_26] : memref<16x128xf32, #tpu.memory_space<vmem>>, vector<1x128xf32>
    %cst_27 = arith.constant 9.99999974E-6 : f32
    %41 = vector.broadcast %cst_27 : f32 to vector<1x128xf32>
    %42 = arith.addf %40, %41 : vector<1x128xf32>
    %43 = math.rsqrt %42 : vector<1x128xf32>
    %44 = vector.broadcast %43 : vector<1x128xf32> to vector<256x128xf32>
    %45 = arith.mulf %39, %44 : vector<256x128xf32>
    %c5 = arith.constant 5 : index
    %c0_28 = arith.constant 0 : index
    %46 = vector.load %arg6[%c5, %c0_28] : memref<16x128xf32, #tpu.memory_space<vmem>>, vector<1x128xf32>
    %47 = vector.broadcast %46 : vector<1x128xf32> to vector<256x128xf32>
    %48 = arith.addf %45, %47 : vector<256x128xf32>
    %cst_29 = arith.constant 0.000000e+00 : f32
    %49 = vector.broadcast %cst_29 : f32 to vector<256x128xf32>
    %50 = arith.maximumf %48, %49 : vector<256x128xf32>
    %cst_30 = arith.constant dense<0.000000e+00> : vector<512x128xf32>
    %51 = tpu.matmul %1, %50, %cst_30 {dimension_numbers = #tpu.dot_dimension_numbers<[1], [0], [0], [1], [0, 0, 1, 1], [], []>} : vector<512x256xf32>, vector<256x128xf32>, vector<512x128xf32> -> vector<512x128xf32>
    %52 = arith.addf %51, %15 : vector<512x128xf32>
    %cst_31 = arith.constant 0.000000e+00 : f32
    %53 = vector.broadcast %cst_31 : f32 to vector<512x128xf32>
    %54 = arith.maximumf %52, %53 : vector<512x128xf32>
    %cst_32 = arith.constant dense<0.000000e+00> : vector<256x128xf32>
    %55 = tpu.matmul %3, %54, %cst_32 {dimension_numbers = #tpu.dot_dimension_numbers<[1], [0], [0], [1], [0, 0, 1, 1], [], []>} : vector<256x512xf32>, vector<512x128xf32>, vector<256x128xf32> -> vector<256x128xf32>
    %56 = arith.addf %55, %50 : vector<256x128xf32>
    %c512 = arith.constant 512 : index
    %c0_33 = arith.constant 0 : index
    %57 = vector.load %arg5[%c512, %c0_33] : memref<1024x128xf32, #tpu.memory_space<vmem>>, vector<128x128xf32>
    %cst_34 = arith.constant dense<0.000000e+00> : vector<256x128xf32>
    %58 = tpu.matmul %56, %57, %cst_34 {dimension_numbers = #tpu.dot_dimension_numbers<[1], [0], [0], [1], [0, 0, 1, 1], [], []>} : vector<256x128xf32>, vector<128x128xf32>, vector<256x128xf32> -> vector<256x128xf32>
    %c8 = arith.constant 8 : index
    %c0_35 = arith.constant 0 : index
    %59 = vector.load %arg6[%c8, %c0_35] : memref<16x128xf32, #tpu.memory_space<vmem>>, vector<1x128xf32>
    %60 = vector.broadcast %59 : vector<1x128xf32> to vector<256x128xf32>
    %61 = arith.addf %58, %60 : vector<256x128xf32>
    %cst_36 = arith.constant 0.000000e+00 : f32
    %62 = vector.broadcast %cst_36 : f32 to vector<256x128xf32>
    %63 = arith.maximumf %61, %62 : vector<256x128xf32>
    %c640 = arith.constant 640 : index
    %c0_37 = arith.constant 0 : index
    %64 = vector.load %arg5[%c640, %c0_37] : memref<1024x128xf32, #tpu.memory_space<vmem>>, vector<128x128xf32>
    %cst_38 = arith.constant dense<0.000000e+00> : vector<256x128xf32>
    %65 = tpu.matmul %63, %64, %cst_38 {dimension_numbers = #tpu.dot_dimension_numbers<[1], [0], [0], [1], [0, 0, 1, 1], [], []>} : vector<256x128xf32>, vector<128x128xf32>, vector<256x128xf32> -> vector<256x128xf32>
    %c9 = arith.constant 9 : index
    %c0_39 = arith.constant 0 : index
    %66 = vector.load %arg6[%c9, %c0_39] : memref<16x128xf32, #tpu.memory_space<vmem>>, vector<1x128xf32>
    %67 = vector.broadcast %66 : vector<1x128xf32> to vector<256x128xf32>
    %68 = arith.addf %65, %67 : vector<256x128xf32>
    %c10 = arith.constant 10 : index
    %c0_40 = arith.constant 0 : index
    %69 = vector.load %arg6[%c10, %c0_40] : memref<16x128xf32, #tpu.memory_space<vmem>>, vector<1x128xf32>
    %c12 = arith.constant 12 : index
    %c0_41 = arith.constant 0 : index
    %70 = vector.load %arg6[%c12, %c0_41] : memref<16x128xf32, #tpu.memory_space<vmem>>, vector<1x128xf32>
    %71 = vector.broadcast %70 : vector<1x128xf32> to vector<256x128xf32>
    %72 = arith.subf %68, %71 : vector<256x128xf32>
    %73 = vector.broadcast %69 : vector<1x128xf32> to vector<256x128xf32>
    %74 = arith.mulf %73, %72 : vector<256x128xf32>
    %c13 = arith.constant 13 : index
    %c0_42 = arith.constant 0 : index
    %75 = vector.load %arg6[%c13, %c0_42] : memref<16x128xf32, #tpu.memory_space<vmem>>, vector<1x128xf32>
    %cst_43 = arith.constant 9.99999974E-6 : f32
    %76 = vector.broadcast %cst_43 : f32 to vector<1x128xf32>
    %77 = arith.addf %75, %76 : vector<1x128xf32>
    %78 = math.rsqrt %77 : vector<1x128xf32>
    %79 = vector.broadcast %78 : vector<1x128xf32> to vector<256x128xf32>
    %80 = arith.mulf %74, %79 : vector<256x128xf32>
    %c11 = arith.constant 11 : index
    %c0_44 = arith.constant 0 : index
    %81 = vector.load %arg6[%c11, %c0_44] : memref<16x128xf32, #tpu.memory_space<vmem>>, vector<1x128xf32>
    %82 = vector.broadcast %81 : vector<1x128xf32> to vector<256x128xf32>
    %83 = arith.addf %80, %82 : vector<256x128xf32>
    %cst_45 = arith.constant 0.000000e+00 : f32
    %84 = vector.broadcast %cst_45 : f32 to vector<256x128xf32>
    %85 = arith.maximumf %83, %84 : vector<256x128xf32>
    %c0_46 = arith.constant 0 : index
    %c0_47 = arith.constant 0 : index
    %86 = vector.load %arg4[%c0_46, %c0_47] : memref<8x256xf32, #tpu.memory_space<vmem>>, vector<8x256xf32>
    %cst_48 = arith.constant dense<0.000000e+00> : vector<8x128xf32>
    %87 = tpu.matmul %86, %85, %cst_48 {dimension_numbers = #tpu.dot_dimension_numbers<[1], [0], [0], [1], [0, 0, 1, 1], [], []>} : vector<8x256xf32>, vector<256x128xf32>, vector<8x128xf32> -> vector<8x128xf32>
    %c768 = arith.constant 768 : index
    %c0_49 = arith.constant 0 : index
    %88 = vector.load %arg5[%c768, %c0_49] : memref<1024x128xf32, #tpu.memory_space<vmem>>, vector<128x128xf32>
    %cst_50 = arith.constant dense<0.000000e+00> : vector<8x128xf32>
    %89 = tpu.matmul %87, %88, %cst_50 {dimension_numbers = #tpu.dot_dimension_numbers<[1], [0], [0], [1], [0, 0, 1, 1], [], []>} : vector<8x128xf32>, vector<128x128xf32>, vector<8x128xf32> -> vector<8x128xf32>
    %c14 = arith.constant 14 : index
    %c0_51 = arith.constant 0 : index
    %90 = vector.load %arg6[%c14, %c0_51] : memref<16x128xf32, #tpu.memory_space<vmem>>, vector<1x128xf32>
    %91 = vector.broadcast %90 : vector<1x128xf32> to vector<8x128xf32>
    %92 = arith.addf %89, %91 : vector<8x128xf32>
    %cst_52 = arith.constant 0.000000e+00 : f32
    %93 = vector.broadcast %cst_52 : f32 to vector<8x128xf32>
    %94 = arith.maximumf %92, %93 : vector<8x128xf32>
    %c896 = arith.constant 896 : index
    %c0_53 = arith.constant 0 : index
    %95 = vector.load %arg5[%c896, %c0_53] : memref<1024x128xf32, #tpu.memory_space<vmem>>, vector<128x128xf32>
    %cst_54 = arith.constant dense<0.000000e+00> : vector<8x128xf32>
    %96 = tpu.matmul %94, %95, %cst_54 {dimension_numbers = #tpu.dot_dimension_numbers<[1], [0], [0], [1], [0, 0, 1, 1], [], []>} : vector<8x128xf32>, vector<128x128xf32>, vector<8x128xf32> -> vector<8x128xf32>
    %c15 = arith.constant 15 : index
    %c0_55 = arith.constant 0 : index
    %97 = vector.load %arg6[%c15, %c0_55] : memref<16x128xf32, #tpu.memory_space<vmem>>, vector<1x128xf32>
    %98 = vector.broadcast %97 : vector<1x128xf32> to vector<8x128xf32>
    %99 = arith.addf %96, %98 : vector<8x128xf32>
    %c0_56 = arith.constant 0 : index
    %c0_57 = arith.constant 0 : index
    %100 = vector.load %arg7[%c0_56, %c0_57] : memref<8x128xf32, #tpu.memory_space<vmem>>, vector<8x128xf32>
    tpu.vector_store %arg7[%c0_56, %c0_57], %99 {strides = array<i32>} : memref<8x128xf32, #tpu.memory_space<vmem>>, vector<8x128xf32>,
    return
  }
}

</mosaic_0001>

<llo_original>
// kernel: tpu_custom_call.1
$region0: #{tpu_custom_call.1}
  #allocation0 [shape = 'u32[]', space=smem, size = 0x4, offset = 0x4, fixed_abs, tag = 'smem constant byte address 0x4 - core index']
  #allocation1 [shape = 'u32[144,128]{1,0:T(1,128)}', space=vmem, size = 0x12000, scoped, tag = 'internal scratch']
  %s0 = inlined_call_operand.hbm [shape: f32[256,128], index: 0, kind: input, shape index: {}]
  %s1 = inlined_call_operand.hbm [shape: f32[512,128], index: 1, kind: input, shape index: {}]
  %s2 = inlined_call_operand.hbm [shape: bf16[512,256], index: 2, kind: input, shape index: {}]
  %s3 = inlined_call_operand.hbm [shape: bf16[256,512], index: 3, kind: input, shape index: {}]
  %s4 = inlined_call_operand.hbm [shape: f32[8,256], index: 4, kind: input, shape index: {}]
  %s5 = inlined_call_operand.hbm [shape: f32[1024,128], index: 5, kind: input, shape index: {}]
  %s6 = inlined_call_operand.vmem [shape: f32[16,128], index: 6, kind: input, shape index: {}]
  %s7 = inlined_call_operand.hbm [shape: f32[8,128], index: 7, kind: output, shape index: {}]
  %s8 = sld [smem:[#allocation0]]
  $region62: #{tpu_custom_call.1} parent=0
    _
  %s10 = ssub.s32 1, %s8
  %s11 = scalar_select 0, %s10, %s8
  $region1: #{tpu_custom_call.1} parent=0
    #allocation2 [shape = 'u8[131072]{0}', space=vmem, size = 0x20000, scoped, tag = 'input window, operand 0, single buffered']
    #allocation3 [shape = 's32[1]{0}', space=sflag, size = 0x4, scoped, tag = 'scoped memory for tpu_custom_call.1']
    #allocation4 [shape = 's32[1]{0}', space=sflag, size = 0x4, scoped, tag = 'scoped memory for tpu_custom_call.1']
    #allocation5 [shape = 'u8[262144]{0}', space=vmem, size = 0x40000, scoped, tag = 'input window, operand 1, single buffered']
    #allocation6 [shape = 's32[1]{0}', space=sflag, size = 0x4, scoped, tag = 'scoped memory for tpu_custom_call.1']
    #allocation7 [shape = 'u8[262144]{0}', space=vmem, size = 0x40000, scoped, tag = 'input window, operand 2, single buffered']
    #allocation8 [shape = 'u8[262144]{0}', space=vmem, size = 0x40000, scoped, tag = 'input window, operand 3, single buffered']
    #allocation9 [shape = 's32[1]{0}', space=sflag, size = 0x4, scoped, tag = 'scoped memory for tpu_custom_call.1']
    #allocation10 [shape = 'u8[8192]{0}', space=vmem, size = 0x2000, scoped, tag = 'input window, operand 4, single buffered']
    #allocation11 [shape = 'u8[524288]{0}', space=vmem, size = 0x80000, scoped, tag = 'input window, operand 5, single buffered']
    #allocation12 [shape = 's32[1]{0}', space=sflag, size = 0x4, scoped, tag = 'scoped memory for tpu_custom_call.1']
    #allocation13 [shape = 'u8[4096]{0}', space=vmem, size = 0x1000, scoped, tag = 'output window, operand 0, single buffered']
    %12 = vsyncpa [#allocation3], 0
    %13 = vsyncpa [#allocation6], 0
    %14 = vsyncpa [#allocation9], 0
    %15 = vsyncpa [#allocation12], 0
    %16 = vsyncpa [#allocation4], 0
    // Predicated region
    $region2: #{tpu_custom_call.1} parent=1 // pred_check
      _
    $region3: #{tpu_custom_call.1} parent=1 // pred_check_branch
      %18 = sbr.rel (0) target = $region5
    $region4: #{tpu_custom_call.1} parent=1 // pred_region
      %s20 = ssub.s32 4096, 4096
      %21 = vsyncadd [#allocation3], %s20
      %s22 = sshll.u32 [#allocation2], 4
      %s23 = int_to_ptr.vmem [resolvable:$true] %s22
      %28 = dma.hbm_to_vmem [thread:$0]  %s0, 4096, %s23, [#allocation3], 128, 128, 8
    $region5: #{tpu_custom_call.1} parent=1 // pred_fallthru
      _
    // Predicated region
    $region6: #{tpu_custom_call.1} parent=1 // pred_check
      _
    $region7: #{tpu_custom_call.1} parent=1 // pred_check_branch
      %30 = sbr.rel (0) target = $region9
    $region8: #{tpu_custom_call.1} parent=1 // pred_region
      %s32 = ssub.s32 8192, 8192
      %33 = vsyncadd [#allocation6], %s32
      %s34 = sshll.u32 [#allocation5], 4
      %s35 = int_to_ptr.vmem [resolvable:$true] %s34
      %40 = dma.hbm_to_vmem [thread:$0]  %s1, 8192, %s35, [#allocation6], 128, 128, 8
    $region9: #{tpu_custom_call.1} parent=1 // pred_fallthru
      _
    // Predicated region
    $region10: #{tpu_custom_call.1} parent=1 // pred_check
      _
    $region11: #{tpu_custom_call.1} parent=1 // pred_check_branch
      %42 = sbr.rel (0) target = $region13
    $region12: #{tpu_custom_call.1} parent=1 // pred_region
      %s44 = ssub.s32 8192, 8192
      %45 = vsyncadd [#allocation6], %s44
      %s46 = sshll.u32 [#allocation7], 4
      %s47 = int_to_ptr.vmem [resolvable:$true] %s46
      %52 = dma.hbm_to_vmem [thread:$0]  %s2, 8192, %s47, [#allocation6], 128, 128, 8
    $region13: #{tpu_custom_call.1} parent=1 // pred_fallthru
      _
    // Predicated region
    $region14: #{tpu_custom_call.1} parent=1 // pred_check
      _
    $region15: #{tpu_custom_call.1} parent=1 // pred_check_branch
      %54 = sbr.rel (0) target = $region17
    $region16: #{tpu_custom_call.1} parent=1 // pred_region
      %s56 = ssub.s32 8192, 8192
      %57 = vsyncadd [#allocation9], %s56
      %s58 = sshll.u32 [#allocation8], 4
      %s59 = int_to_ptr.vmem [resolvable:$true] %s58
      %64 = dma.hbm_to_vmem [thread:$0]  %s3, 8192, %s59, [#allocation9], 256, 256, 16
    $region17: #{tpu_custom_call.1} parent=1 // pred_fallthru
      _
    // Predicated region
    $region18: #{tpu_custom_call.1} parent=1 // pred_check
      _
    $region19: #{tpu_custom_call.1} parent=1 // pred_check_branch
      %66 = sbr.rel (0) target = $region21
    $region20: #{tpu_custom_call.1} parent=1 // pred_region
      %s68 = ssub.s32 256, 256
      %69 = vsyncadd [#allocation9], %s68
      %s71 = sshll.u32 [#allocation10], 4
      %s72 = int_to_ptr.vmem [resolvable:$true] %s71
      %74 = dma.hbm_to_vmem [thread:$0]  %s4, 256, %s72, [#allocation9]
    $region21: #{tpu_custom_call.1} parent=1 // pred_fallthru
      _
    // Predicated region
    $region22: #{tpu_custom_call.1} parent=1 // pred_check
      _
    $region23: #{tpu_custom_call.1} parent=1 // pred_check_branch
      %76 = sbr.rel (0) target = $region25
    $region24: #{tpu_custom_call.1} parent=1 // pred_region
      %s78 = ssub.s32 16384, 16384
      %79 = vsyncadd [#allocation12], %s78
      %s80 = sshll.u32 [#allocation11], 4
      %s81 = int_to_ptr.vmem [resolvable:$true] %s80
      %86 = dma.hbm_to_vmem [thread:$0]  %s5, 16384, %s81, [#allocation12], 128, 128, 8
    $region25: #{tpu_custom_call.1} parent=1 // pred_fallthru
      _
    // Predicated region
    $region26: #{tpu_custom_call.1} parent=1 // pred_check
      _
    $region27: #{tpu_custom_call.1} parent=1 // pred_check_branch
      %88 = sbr.rel (0) target = $region29
    $region28: #{tpu_custom_call.1} parent=1 // pred_region
      _
    $region29: #{tpu_custom_call.1} parent=1 // pred_fallthru
      _
    // Predicated region
    $region30: #{tpu_custom_call.1} parent=1 // pred_check
      _
    $region31: #{tpu_custom_call.1} parent=1 // pred_check_branch
      %90 = sbr.rel (0) target = $region33
    $region32: #{tpu_custom_call.1} parent=1 // pred_region
      %91 = dma.done [#allocation3], 4096
    $region33: #{tpu_custom_call.1} parent=1 // pred_fallthru
      _
    // Predicated region
    $region34: #{tpu_custom_call.1} parent=1 // pred_check
      _
    $region35: #{tpu_custom_call.1} parent=1 // pred_check_branch
      %93 = sbr.rel (0) target = $region37
    $region36: #{tpu_custom_call.1} parent=1 // pred_region
      %94 = dma.done [#allocation6], 8192
    $region37: #{tpu_custom_call.1} parent=1 // pred_fallthru
      _
    // Predicated region
    $region38: #{tpu_custom_call.1} parent=1 // pred_check
      _
    $region39: #{tpu_custom_call.1} parent=1 // pred_check_branch
      %96 = sbr.rel (0) target = $region41
    $region40: #{tpu_custom_call.1} parent=1 // pred_region
      %97 = dma.done [#allocation6], 8192
    $region41: #{tpu_custom_call.1} parent=1 // pred_fallthru
      _
    // Predicated region
    $region42: #{tpu_custom_call.1} parent=1 // pred_check
      _
    $region43: #{tpu_custom_call.1} parent=1 // pred_check_branch
      %99 = sbr.rel (0) target = $region45
    $region44: #{tpu_custom_call.1} parent=1 // pred_region
      %100 = dma.done [#allocation9], 8192
    $region45: #{tpu_custom_call.1} parent=1 // pred_fallthru
      _
    // Predicated region
    $region46: #{tpu_custom_call.1} parent=1 // pred_check
      _
    $region47: #{tpu_custom_call.1} parent=1 // pred_check_branch
      %102 = sbr.rel (0) target = $region49
    $region48: #{tpu_custom_call.1} parent=1 // pred_region
      %103 = dma.done [#allocation9], 256
    $region49: #{tpu_custom_call.1} parent=1 // pred_fallthru
      _
    // Predicated region
    $region50: #{tpu_custom_call.1} parent=1 // pred_check
      _
    $region51: #{tpu_custom_call.1} parent=1 // pred_check_branch
      %105 = sbr.rel (0) target = $region53
    $region52: #{tpu_custom_call.1} parent=1 // pred_region
      %106 = dma.done [#allocation12], 16384
    $region53: #{tpu_custom_call.1} parent=1 // pred_fallthru
      _
    %v107 = vld [vmem:[#allocation7] sm:$0xff]
    %v108 = vld [vmem:[#allocation7 + $0x8] sm:$0xff]
    %v109 = vld [vmem:[#allocation7 + $0x10] sm:$0xff]
    %v110 = vld [vmem:[#allocation7 + $0x18] sm:$0xff]
    %v111 = vld [vmem:[#allocation7 + $0x20] sm:$0xff]
    %v112 = vld [vmem:[#allocation7 + $0x28] sm:$0xff]
    %v113 = vld [vmem:[#allocation7 + $0x30] sm:$0xff]
    %v114 = vld [vmem:[#allocation7 + $0x38] sm:$0xff]
    %v115 = vld [vmem:[#allocation7 + $0x40] sm:$0xff]
    %v116 = vld [vmem:[#allocation7 + $0x48] sm:$0xff]
    %v117 = vld [vmem:[#allocation7 + $0x50] sm:$0xff]
    %v118 = vld [vmem:[#allocation7 + $0x58] sm:$0xff]
    %v119 = vld [vmem:[#allocation7 + $0x60] sm:$0xff]
    %v120 = vld [vmem:[#allocation7 + $0x68] sm:$0xff]
    %v121 = vld [vmem:[#allocation7 + $0x70] sm:$0xff]
    %v122 = vld [vmem:[#allocation7 + $0x78] sm:$0xff]
    %v123 = vld [vmem:[#allocation7 + $0x80] sm:$0xff]
    %v124 = vld [vmem:[#allocation7 + $0x88] sm:$0xff]
    %v125 = vld [vmem:[#allocation7 + $0x90] sm:$0xff]
    %v126 = vld [vmem:[#allocation7 + $0x98] sm:$0xff]
    %v127 = vld [vmem:[#allocation7 + $0xa0] sm:$0xff]
    %v128 = vld [vmem:[#allocation7 + $0xa8] sm:$0xff]
    %v129 = vld [vmem:[#allocation7 + $0xb0] sm:$0xff]
    %v130 = vld [vmem:[#allocation7 + $0xb8] sm:$0xff]
    %v131 = vld [vmem:[#allocation7 + $0xc0] sm:$0xff]
    %v132 = vld [vmem:[#allocation7 + $0xc8] sm:$0xff]
    %v133 = vld [vmem:[#allocation7 + $0xd0] sm:$0xff]
    %v134 = vld [vmem:[#allocation7 + $0xd8] sm:$0xff]
    %v135 = vld [vmem:[#allocation7 + $0xe0] sm:$0xff]
    %v136 = vld [vmem:[#allocation7 + $0xe8] sm:$0xff]
    %v137 = vld [vmem:[#allocation7 + $0xf0] sm:$0xff]
    %v138 = vld [vmem:[#allocation7 + $0xf8] sm:$0xff]
    %v139 = vld [vmem:[#allocation7 + $0x100] sm:$0xff]
    %v140 = vld [vmem:[#allocation7 + $0x108] sm:$0xff]
    %v141 = vld [vmem:[#allocation7 + $0x110] sm:$0xff]
    %v142 = vld [vmem:[#allocation7 + $0x118] sm:$0xff]
    %v143 = vld [vmem:[#allocation7 + $0x120] sm:$0xff]
    %v144 = vld [vmem:[#allocation7 + $0x128] sm:$0xff]
    %v145 = vld [vmem:[#allocation7 + $0x130] sm:$0xff]
    %v146 = vld [vmem:[#allocation7 + $0x138] sm:$0xff]
    %v147 = vld [vmem:[#allocation7 + $0x140] sm:$0xff]
    %v148 = vld [vmem:[#allocation7 + $0x148] sm:$0xff]
    %v149 = vld [vmem:[#allocation7 + $0x150] sm:$0xff]
    %v150 = vld [vmem:[#allocation7 + $0x158] sm:$0xff]
    %v151 = vld [vmem:[#allocation7 + $0x160] sm:$0xff]
    %v152 = vld [vmem:[#allocation7 + $0x168] sm:$0xff]
    %v153 = vld [vmem:[#allocation7 + $0x170] sm:$0xff]
    %v154 = vld [vmem:[#allocation7 + $0x178] sm:$0xff]
    %v155 = vld [vmem:[#allocation7 + $0x180] sm:$0xff]
    %v156 = vld [vmem:[#allocation7 + $0x188] sm:$0xff]
    %v157 = vld [vmem:[#allocation7 + $0x190] sm:$0xff]
    %v158 = vld [vmem:[#allocation7 + $0x198] sm:$0xff]
    %v159 = vld [vmem:[#allocation7 + $0x1a0] sm:$0xff]
    %v160 = vld [vmem:[#allocation7 + $0x1a8] sm:$0xff]
    %v161 = vld [vmem:[#allocation7 + $0x1b0] sm:$0xff]
    %v162 = vld [vmem:[#allocation7 + $0x1b8] sm:$0xff]
    %v163 = vld [vmem:[#allocation7 + $0x1c0] sm:$0xff]
    %v164 = vld [vmem:[#allocation7 + $0x1c8] sm:$0xff]
    %v165 = vld [vmem:[#allocation7 + $0x1d0] sm:$0xff]
    %v166 = vld [vmem:[#allocation7 + $0x1d8] sm:$0xff]
    %v167 = vld [vmem:[#allocation7 + $0x1e0] sm:$0xff]
    %v168 = vld [vmem:[#allocation7 + $0x1e8] sm:$0xff]
    %v169 = vld [vmem:[#allocation7 + $0x1f0] sm:$0xff]
    %v170 = vld [vmem:[#allocation7 + $0x1f8] sm:$0xff]
    %v171 = vunpack.c.l.bf16 %v107
    %v172 = vunpack.c.h.bf16 %v107
    %v173 = vunpack.c.l.bf16 %v108
    %v174 = vunpack.c.h.bf16 %v108
    %v175 = vunpack.c.l.bf16 %v109
    %v176 = vunpack.c.h.bf16 %v109
    %v177 = vunpack.c.l.bf16 %v110
    %v178 = vunpack.c.h.bf16 %v110
    %v179 = vunpack.c.l.bf16 %v111
    %v180 = vunpack.c.h.bf16 %v111
    %v181 = vunpack.c.l.bf16 %v112
    %v182 = vunpack.c.h.bf16 %v112
    %v183 = vunpack.c.l.bf16 %v113
    %v184 = vunpack.c.h.bf16 %v113
    %v185 = vunpack.c.l.bf16 %v114
    %v186 = vunpack.c.h.bf16 %v114
    %v187 = vunpack.c.l.bf16 %v115
    %v188 = vunpack.c.h.bf16 %v115
    %v189 = vunpack.c.l.bf16 %v116
    %v190 = vunpack.c.h.bf16 %v116
    %v191 = vunpack.c.l.bf16 %v117
    %v192 = vunpack.c.h.bf16 %v117
    %v193 = vunpack.c.l.bf16 %v118
    %v194 = vunpack.c.h.bf16 %v118
    %v195 = vunpack.c.l.bf16 %v119
    %v196 = vunpack.c.h.bf16 %v119
    %v197 = vunpack.c.l.bf16 %v120
    %v198 = vunpack.c.h.bf16 %v120
    %v199 = vunpack.c.l.bf16 %v121
    %v200 = vunpack.c.h.bf16 %v121
    %v201 = vunpack.c.l.bf16 %v122
    %v202 = vunpack.c.h.bf16 %v122
    %v203 = vunpack.c.l.bf16 %v123
    %v204 = vunpack.c.h.bf16 %v123
    %v205 = vunpack.c.l.bf16 %v124
    %v206 = vunpack.c.h.bf16 %v124
    %v207 = vunpack.c.l.bf16 %v125
    %v208 = vunpack.c.h.bf16 %v125
    %v209 = vunpack.c.l.bf16 %v126
    %v210 = vunpack.c.h.bf16 %v126
    %v211 = vunpack.c.l.bf16 %v127
    %v212 = vunpack.c.h.bf16 %v127
    %v213 = vunpack.c.l.bf16 %v128
    %v214 = vunpack.c.h.bf16 %v128
    %v215 = vunpack.c.l.bf16 %v129
    %v216 = vunpack.c.h.bf16 %v129
    %v217 = vunpack.c.l.bf16 %v130
    %v218 = vunpack.c.h.bf16 %v130
    %v219 = vunpack.c.l.bf16 %v131
    %v220 = vunpack.c.h.bf16 %v131
    %v221 = vunpack.c.l.bf16 %v132
    %v222 = vunpack.c.h.bf16 %v132
    %v223 = vunpack.c.l.bf16 %v133
    %v224 = vunpack.c.h.bf16 %v133
    %v225 = vunpack.c.l.bf16 %v134
    %v226 = vunpack.c.h.bf16 %v134
    %v227 = vunpack.c.l.bf16 %v135
    %v228 = vunpack.c.h.bf16 %v135
    %v229 = vunpack.c.l.bf16 %v136
    %v230 = vunpack.c.h.bf16 %v136
    %v231 = vunpack.c.l.bf16 %v137
    %v232 = vunpack.c.h.bf16 %v137
    %v233 = vunpack.c.l.bf16 %v138
    %v234 = vunpack.c.h.bf16 %v138
    %v235 = vunpack.c.l.bf16 %v139
    %v236 = vunpack.c.h.bf16 %v139
    %v237 = vunpack.c.l.bf16 %v140
    %v238 = vunpack.c.h.bf16 %v140
    %v239 = vunpack.c.l.bf16 %v141
    %v240 = vunpack.c.h.bf16 %v141
    %v241 = vunpack.c.l.bf16 %v142
    %v242 = vunpack.c.h.bf16 %v142
    %v243 = vunpack.c.l.bf16 %v143
    %v244 = vunpack.c.h.bf16 %v143
    %v245 = vunpack.c.l.bf16 %v144
    %v246 = vunpack.c.h.bf16 %v144
    %v247 = vunpack.c.l.bf16 %v145
    %v248 = vunpack.c.h.bf16 %v145
    %v249 = vunpack.c.l.bf16 %v146
    %v250 = vunpack.c.h.bf16 %v146
    %v251 = vunpack.c.l.bf16 %v147
    %v252 = vunpack.c.h.bf16 %v147
    %v253 = vunpack.c.l.bf16 %v148
    %v254 = vunpack.c.h.bf16 %v148
    %v255 = vunpack.c.l.bf16 %v149
    %v256 = vunpack.c.h.bf16 %v149
    %v257 = vunpack.c.l.bf16 %v150
    %v258 = vunpack.c.h.bf16 %v150
    %v259 = vunpack.c.l.bf16 %v151
    %v260 = vunpack.c.h.bf16 %v151
    %v261 = vunpack.c.l.bf16 %v152
    %v262 = vunpack.c.h.bf16 %v152
    %v263 = vunpack.c.l.bf16 %v153
    %v264 = vunpack.c.h.bf16 %v153
    %v265 = vunpack.c.l.bf16 %v154
    %v266 = vunpack.c.h.bf16 %v154
    %v267 = vunpack.c.l.bf16 %v155
    %v268 = vunpack.c.h.bf16 %v155
    %v269 = vunpack.c.l.bf16 %v156
    %v270 = vunpack.c.h.bf16 %v156
    %v271 = vunpack.c.l.bf16 %v157
    %v272 = vunpack.c.h.bf16 %v157
    %v273 = vunpack.c.l.bf16 %v158
    %v274 = vunpack.c.h.bf16 %v158
    %v275 = vunpack.c.l.bf16 %v159
    %v276 = vunpack.c.h.bf16 %v159
    %v277 = vunpack.c.l.bf16 %v160
    %v278 = vunpack.c.h.bf16 %v160
    %v279 = vunpack.c.l.bf16 %v161
    %v280 = vunpack.c.h.bf16 %v161
    %v281 = vunpack.c.l.bf16 %v162
    %v282 = vunpack.c.h.bf16 %v162
    %v283 = vunpack.c.l.bf16 %v163
    %v284 = vunpack.c.h.bf16 %v163
    %v285 = vunpack.c.l.bf16 %v164
    %v286 = vunpack.c.h.bf16 %v164
    %v287 = vunpack.c.l.bf16 %v165
    %v288 = vunpack.c.h.bf16 %v165
    %v289 = vunpack.c.l.bf16 %v166
    %v290 = vunpack.c.h.bf16 %v166
    %v291 = vunpack.c.l.bf16 %v167
    %v292 = vunpack.c.h.bf16 %v167
    %v293 = vunpack.c.l.bf16 %v168
    %v294 = vunpack.c.h.bf16 %v168
    %v295 = vunpack.c.l.bf16 %v169
    %v296 = vunpack.c.h.bf16 %v169
    %v297 = vunpack.c.l.bf16 %v170
    %v298 = vunpack.c.h.bf16 %v170
    %v299 = vld [vmem:[#allocation8] sm:$0xff]
    %v300 = vld [vmem:[#allocation8 + $0x8] sm:$0xff]
    %v301 = vld [vmem:[#allocation8 + $0x10] sm:$0xff]
    %v302 = vld [vmem:[#allocation8 + $0x18] sm:$0xff]
    %v303 = vld [vmem:[#allocation8 + $0x20] sm:$0xff]
    %v304 = vld [vmem:[#allocation8 + $0x28] sm:$0xff]
    %v305 = vld [vmem:[#allocation8 + $0x30] sm:$0xff]
    %v306 = vld [vmem:[#allocation8 + $0x38] sm:$0xff]
    %v307 = vld [vmem:[#allocation8 + $0x40] sm:$0xff]
    %v308 = vld [vmem:[#allocation8 + $0x48] sm:$0xff]
    %v309 = vld [vmem:[#allocation8 + $0x50] sm:$0xff]
    %v310 = vld [vmem:[#allocation8 + $0x58] sm:$0xff]
    %v311 = vld [vmem:[#allocation8 + $0x60] sm:$0xff]
    %v312 = vld [vmem:[#allocation8 + $0x68] sm:$0xff]
    %v313 = vld [vmem:[#allocation8 + $0x70] sm:$0xff]
    %v314 = vld [vmem:[#allocation8 + $0x78] sm:$0xff]
    %v315 = vld [vmem:[#allocation8 + $0x80] sm:$0xff]
    %v316 = vld [vmem:[#allocation8 + $0x88] sm:$0xff]
    %v317 = vld [vmem:[#allocation8 + $0x90] sm:$0xff]
    %v318 = vld [vmem:[#allocation8 + $0x98] sm:$0xff]
    %v319 = vld [vmem:[#allocation8 + $0xa0] sm:$0xff]
    %v320 = vld [vmem:[#allocation8 + $0xa8] sm:$0xff]
    %v321 = vld [vmem:[#allocation8 + $0xb0] sm:$0xff]
    %v322 = vld [vmem:[#allocation8 + $0xb8] sm:$0xff]
    %v323 = vld [vmem:[#allocation8 + $0xc0] sm:$0xff]
    %v324 = vld [vmem:[#allocation8 + $0xc8] sm:$0xff]
    %v325 = vld [vmem:[#allocation8 + $0xd0] sm:$0xff]
    %v326 = vld [vmem:[#allocation8 + $0xd8] sm:$0xff]
    %v327 = vld [vmem:[#allocation8 + $0xe0] sm:$0xff]
    %v328 = vld [vmem:[#allocation8 + $0xe8] sm:$0xff]
    %v329 = vld [vmem:[#allocation8 + $0xf0] sm:$0xff]
    %v330 = vld [vmem:[#allocation8 + $0xf8] sm:$0xff]
    %v331 = vld [vmem:[#allocation8 + $0x100] sm:$0xff]
    %v332 = vld [vmem:[#allocation8 + $0x108] sm:$0xff]
    %v333 = vld [vmem:[#allocation8 + $0x110] sm:$0xff]
    %v334 = vld [vmem:[#allocation8 + $0x118] sm:$0xff]
    %v335 = vld [vmem:[#allocation8 + $0x120] sm:$0xff]
    %v336 = vld [vmem:[#allocation8 + $0x128] sm:$0xff]
    %v337 = vld [vmem:[#allocation8 + $0x130] sm:$0xff]
    %v338 = vld [vmem:[#allocation8 + $0x138] sm:$0xff]
    %v339 = vld [vmem:[#allocation8 + $0x140] sm:$0xff]
    %v340 = vld [vmem:[#allocation8 + $0x148] sm:$0xff]
    %v341 = vld [vmem:[#allocation8 + $0x150] sm:$0xff]
    %v342 = vld [vmem:[#allocation8 + $0x158] sm:$0xff]
    %v343 = vld [vmem:[#allocation8 + $0x160] sm:$0xff]
    %v344 = vld [vmem:[#allocation8 + $0x168] sm:$0xff]
    %v345 = vld [vmem:[#allocation8 + $0x170] sm:$0xff]
    %v346 = vld [vmem:[#allocation8 + $0x178] sm:$0xff]
    %v347 = vld [vmem:[#allocation8 + $0x180] sm:$0xff]
    %v348 = vld [vmem:[#allocation8 + $0x188] sm:$0xff]
    %v349 = vld [vmem:[#allocation8 + $0x190] sm:$0xff]
    %v350 = vld [vmem:[#allocation8 + $0x198] sm:$0xff]
    %v351 = vld [vmem:[#allocation8 + $0x1a0] sm:$0xff]
    %v352 = vld [vmem:[#allocation8 + $0x1a8] sm:$0xff]
    %v353 = vld [vmem:[#allocation8 + $0x1b0] sm:$0xff]
    %v354 = vld [vmem:[#allocation8 + $0x1b8] sm:$0xff]
    %v355 = vld [vmem:[#allocation8 + $0x1c0] sm:$0xff]
    %v356 = vld [vmem:[#allocation8 + $0x1c8] sm:$0xff]
    %v357 = vld [vmem:[#allocation8 + $0x1d0] sm:$0xff]
    %v358 = vld [vmem:[#allocation8 + $0x1d8] sm:$0xff]
    %v359 = vld [vmem:[#allocation8 + $0x1e0] sm:$0xff]
    %v360 = vld [vmem:[#allocation8 + $0x1e8] sm:$0xff]
    %v361 = vld [vmem:[#allocation8 + $0x1f0] sm:$0xff]
    %v362 = vld [vmem:[#allocation8 + $0x1f8] sm:$0xff]
    %v363 = vunpack.c.l.bf16 %v299
    %v364 = vunpack.c.h.bf16 %v299
    %v365 = vunpack.c.l.bf16 %v300
    %v366 = vunpack.c.h.bf16 %v300
    %v367 = vunpack.c.l.bf16 %v301
    %v368 = vunpack.c.h.bf16 %v301
    %v369 = vunpack.c.l.bf16 %v302
    %v370 = vunpack.c.h.bf16 %v302
    %v371 = vunpack.c.l.bf16 %v303
    %v372 = vunpack.c.h.bf16 %v303
    %v373 = vunpack.c.l.bf16 %v304
    %v374 = vunpack.c.h.bf16 %v304
    %v375 = vunpack.c.l.bf16 %v305
    %v376 = vunpack.c.h.bf16 %v305
    %v377 = vunpack.c.l.bf16 %v306
    %v378 = vunpack.c.h.bf16 %v306
    %v379 = vunpack.c.l.bf16 %v307
    %v380 = vunpack.c.h.bf16 %v307
    %v381 = vunpack.c.l.bf16 %v308
    %v382 = vunpack.c.h.bf16 %v308
    %v383 = vunpack.c.l.bf16 %v309
    %v384 = vunpack.c.h.bf16 %v309
    %v385 = vunpack.c.l.bf16 %v310
    %v386 = vunpack.c.h.bf16 %v310
    %v387 = vunpack.c.l.bf16 %v311
    %v388 = vunpack.c.h.bf16 %v311
    %v389 = vunpack.c.l.bf16 %v312
    %v390 = vunpack.c.h.bf16 %v312
    %v391 = vunpack.c.l.bf16 %v313
    %v392 = vunpack.c.h.bf16 %v313
    %v393 = vunpack.c.l.bf16 %v314
    %v394 = vunpack.c.h.bf16 %v314
    %v395 = vunpack.c.l.bf16 %v315
    %v396 = vunpack.c.h.bf16 %v315
    %v397 = vunpack.c.l.bf16 %v316
    %v398 = vunpack.c.h.bf16 %v316
    %v399 = vunpack.c.l.bf16 %v317
    %v400 = vunpack.c.h.bf16 %v317
    %v401 = vunpack.c.l.bf16 %v318
    %v402 = vunpack.c.h.bf16 %v318
    %v403 = vunpack.c.l.bf16 %v319
    %v404 = vunpack.c.h.bf16 %v319
    %v405 = vunpack.c.l.bf16 %v320
    %v406 = vunpack.c.h.bf16 %v320
    %v407 = vunpack.c.l.bf16 %v321
    %v408 = vunpack.c.h.bf16 %v321
    %v409 = vunpack.c.l.bf16 %v322
    %v410 = vunpack.c.h.bf16 %v322
    %v411 = vunpack.c.l.bf16 %v323
    %v412 = vunpack.c.h.bf16 %v323
    %v413 = vunpack.c.l.bf16 %v324
    %v414 = vunpack.c.h.bf16 %v324
    %v415 = vunpack.c.l.bf16 %v325
    %v416 = vunpack.c.h.bf16 %v325
    %v417 = vunpack.c.l.bf16 %v326
    %v418 = vunpack.c.h.bf16 %v326
    %v419 = vunpack.c.l.bf16 %v327
    %v420 = vunpack.c.h.bf16 %v327
    %v421 = vunpack.c.l.bf16 %v328
    %v422 = vunpack.c.h.bf16 %v328
    %v423 = vunpack.c.l.bf16 %v329
    %v424 = vunpack.c.h.bf16 %v329
    %v425 = vunpack.c.l.bf16 %v330
    %v426 = vunpack.c.h.bf16 %v330
    %v427 = vunpack.c.l.bf16 %v331
    %v428 = vunpack.c.h.bf16 %v331
    %v429 = vunpack.c.l.bf16 %v332
    %v430 = vunpack.c.h.bf16 %v332
    %v431 = vunpack.c.l.bf16 %v333
    %v432 = vunpack.c.h.bf16 %v333
    %v433 = vunpack.c.l.bf16 %v334
    %v434 = vunpack.c.h.bf16 %v334
    %v435 = vunpack.c.l.bf16 %v335
    %v436 = vunpack.c.h.bf16 %v335
    %v437 = vunpack.c.l.bf16 %v336
    %v438 = vunpack.c.h.bf16 %v336
    %v439 = vunpack.c.l.bf16 %v337
    %v440 = vunpack.c.h.bf16 %v337
    %v441 = vunpack.c.l.bf16 %v338
    %v442 = vunpack.c.h.bf16 %v338
    %v443 = vunpack.c.l.bf16 %v339
    %v444 = vunpack.c.h.bf16 %v339
    %v445 = vunpack.c.l.bf16 %v340
    %v446 = vunpack.c.h.bf16 %v340
    %v447 = vunpack.c.l.bf16 %v341
    %v448 = vunpack.c.h.bf16 %v341
    %v449 = vunpack.c.l.bf16 %v342
    %v450 = vunpack.c.h.bf16 %v342
    %v451 = vunpack.c.l.bf16 %v343
    %v452 = vunpack.c.h.bf16 %v343
    %v453 = vunpack.c.l.bf16 %v344
    %v454 = vunpack.c.h.bf16 %v344
    %v455 = vunpack.c.l.bf16 %v345
    %v456 = vunpack.c.h.bf16 %v345
    %v457 = vunpack.c.l.bf16 %v346
    %v458 = vunpack.c.h.bf16 %v346
    %v459 = vunpack.c.l.bf16 %v347
    %v460 = vunpack.c.h.bf16 %v347
    %v461 = vunpack.c.l.bf16 %v348
    %v462 = vunpack.c.h.bf16 %v348
    %v463 = vunpack.c.l.bf16 %v349
    %v464 = vunpack.c.h.bf16 %v349
    %v465 = vunpack.c.l.bf16 %v350
    %v466 = vunpack.c.h.bf16 %v350
    %v467 = vunpack.c.l.bf16 %v351
    %v468 = vunpack.c.h.bf16 %v351
    %v469 = vunpack.c.l.bf16 %v352
    %v470 = vunpack.c.h.bf16 %v352
    %v471 = vunpack.c.l.bf16 %v353
    %v472 = vunpack.c.h.bf16 %v353
    %v473 = vunpack.c.l.bf16 %v354
    %v474 = vunpack.c.h.bf16 %v354
    %v475 = vunpack.c.l.bf16 %v355
    %v476 = vunpack.c.h.bf16 %v355
    %v477 = vunpack.c.l.bf16 %v356
    %v478 = vunpack.c.h.bf16 %v356
    %v479 = vunpack.c.l.bf16 %v357
    %v480 = vunpack.c.h.bf16 %v357
    %v481 = vunpack.c.l.bf16 %v358
    %v482 = vunpack.c.h.bf16 %v358
    %v483 = vunpack.c.l.bf16 %v359
    %v484 = vunpack.c.h.bf16 %v359
    %v485 = vunpack.c.l.bf16 %v360
    %v486 = vunpack.c.h.bf16 %v360
    %v487 = vunpack.c.l.bf16 %v361
    %v488 = vunpack.c.h.bf16 %v361
    %v489 = vunpack.c.l.bf16 %v362
    %v490 = vunpack.c.h.bf16 %v362
    %v491 = vld [vmem:[#allocation2] sm:$0xff]
    %v492 = vld [vmem:[#allocation2 + $0x8] sm:$0xff]
    %v493 = vld [vmem:[#allocation2 + $0x10] sm:$0xff]
    %v494 = vld [vmem:[#allocation2 + $0x18] sm:$0xff]
    %v495 = vld [vmem:[#allocation2 + $0x20] sm:$0xff]
    %v496 = vld [vmem:[#allocation2 + $0x28] sm:$0xff]
    %v497 = vld [vmem:[#allocation2 + $0x30] sm:$0xff]
    %v498 = vld [vmem:[#allocation2 + $0x38] sm:$0xff]
    %v499 = vld [vmem:[#allocation2 + $0x40] sm:$0xff]
    %v500 = vld [vmem:[#allocation2 + $0x48] sm:$0xff]
    %v501 = vld [vmem:[#allocation2 + $0x50] sm:$0xff]
    %v502 = vld [vmem:[#allocation2 + $0x58] sm:$0xff]
    %v503 = vld [vmem:[#allocation2 + $0x60] sm:$0xff]
    %v504 = vld [vmem:[#allocation2 + $0x68] sm:$0xff]
    %v505 = vld [vmem:[#allocation2 + $0x70] sm:$0xff]
    %v506 = vld [vmem:[#allocation2 + $0x78] sm:$0xff]
    %v507 = vld [vmem:[#allocation2 + $0x80] sm:$0xff]
    %v508 = vld [vmem:[#allocation2 + $0x88] sm:$0xff]
    %v509 = vld [vmem:[#allocation2 + $0x90] sm:$0xff]
    %v510 = vld [vmem:[#allocation2 + $0x98] sm:$0xff]
    %v511 = vld [vmem:[#allocation2 + $0xa0] sm:$0xff]
    %v512 = vld [vmem:[#allocation2 + $0xa8] sm:$0xff]
    %v513 = vld [vmem:[#allocation2 + $0xb0] sm:$0xff]
    %v514 = vld [vmem:[#allocation2 + $0xb8] sm:$0xff]
    %v515 = vld [vmem:[#allocation2 + $0xc0] sm:$0xff]
    %v516 = vld [vmem:[#allocation2 + $0xc8] sm:$0xff]
    %v517 = vld [vmem:[#allocation2 + $0xd0] sm:$0xff]
    %v518 = vld [vmem:[#allocation2 + $0xd8] sm:$0xff]
    %v519 = vld [vmem:[#allocation2 + $0xe0] sm:$0xff]
    %v520 = vld [vmem:[#allocation2 + $0xe8] sm:$0xff]
    %v521 = vld [vmem:[#allocation2 + $0xf0] sm:$0xff]
    %v522 = vld [vmem:[#allocation2 + $0xf8] sm:$0xff]
    %v523 = vld [vmem:[#allocation11] sm:$0xff]
    %v524 = vld [vmem:[#allocation11 + $0x8] sm:$0xff]
    %v525 = vld [vmem:[#allocation11 + $0x10] sm:$0xff]
    %v526 = vld [vmem:[#allocation11 + $0x18] sm:$0xff]
    %v527 = vld [vmem:[#allocation11 + $0x20] sm:$0xff]
    %v528 = vld [vmem:[#allocation11 + $0x28] sm:$0xff]
    %v529 = vld [vmem:[#allocation11 + $0x30] sm:$0xff]
    %v530 = vld [vmem:[#allocation11 + $0x38] sm:$0xff]
    %v531 = vld [vmem:[#allocation11 + $0x40] sm:$0xff]
    %v532 = vld [vmem:[#allocation11 + $0x48] sm:$0xff]
    %v533 = vld [vmem:[#allocation11 + $0x50] sm:$0xff]
    %v534 = vld [vmem:[#allocation11 + $0x58] sm:$0xff]
    %v535 = vld [vmem:[#allocation11 + $0x60] sm:$0xff]
    %v536 = vld [vmem:[#allocation11 + $0x68] sm:$0xff]
    %v537 = vld [vmem:[#allocation11 + $0x70] sm:$0xff]
    %v538 = vld [vmem:[#allocation11 + $0x78] sm:$0xff]
    %v539 = vld [vmem:[%s6] sm:$0x1]
    %v540 = vlaneseq
    %v541 = vshrl.u32 %v540, 7
    %v542 = vsub.s32 0, %v541
    %v543 = vrot.slane %v539, %v542
    %544 = vmatprep.subr.mxu0 0.0
    %545 = vmatpush1.msra.mxu0 %v523
    %546 = vmatprep.subr.mxu0 0.0
    %547 = vmatpush1.msra.mxu0 %v524
    %548 = vmatprep.subr.mxu0 0.0
    %549 = vmatpush1.msra.mxu0 %v525
    %550 = vmatprep.subr.mxu0 0.0
    %551 = vmatpush1.msra.mxu0 %v526
    %552 = vmatprep.subr.mxu0 0.0
    %553 = vmatpush1.msra.mxu0 %v527
    %554 = vmatprep.subr.mxu0 0.0
    %555 = vmatpush1.msra.mxu0 %v528
    %556 = vmatprep.subr.mxu0 0.0
    %557 = vmatpush1.msra.mxu0 %v529
    %558 = vmatprep.subr.mxu0 0.0
    %559 = vmatpush1.msra.mxu0 %v530
    %560 = vmatprep.subr.mxu0 0.0
    %561 = vmatpush1.msra.mxu0 %v531
    %562 = vmatprep.subr.mxu0 0.0
    %563 = vmatpush1.msra.mxu0 %v532
    %564 = vmatprep.subr.mxu0 0.0
    %565 = vmatpush1.msra.mxu0 %v533
    %566 = vmatprep.subr.mxu0 0.0
    %567 = vmatpush1.msra.mxu0 %v534
    %568 = vmatprep.subr.mxu0 0.0
    %569 = vmatpush1.msra.mxu0 %v535
    %570 = vmatprep.subr.mxu0 0.0
    %571 = vmatpush1.msra.mxu0 %v536
    %572 = vmatprep.subr.mxu0 0.0
    %573 = vmatpush1.msra.mxu0 %v537
    %574 = vmatprep.subr.mxu0 0.0
    %575 = vmatpush1.msra.mxu0 %v538
    %576 = vmatprep.subr.mxu0 0.0
    %577 = vmatpush1.msra.mxu0 0.0
    %578 = vmatprep.subr.mxu0 0.0
    %579 = vmatpush1.msra.mxu0 0.0
    %580 = vmatprep.subr.mxu0 0.0
    %581 = vmatpush1.msra.mxu0 0.0
    %582 = vmatprep.subr.mxu0 0.0
    %583 = vmatpush1.msra.mxu0 0.0
    %584 = vmatprep.subr.mxu0 0.0
    %585 = vmatpush1.msra.mxu0 0.0
    %586 = vmatprep.subr.mxu0 0.0
    %587 = vmatpush1.msra.mxu0 0.0
    %588 = vmatprep.subr.mxu0 0.0
    %589 = vmatpush1.msra.mxu0 0.0
    %590 = vmatprep.subr.mxu0 0.0
    %591 = vmatpush1.msra.mxu0 0.0
    %592 = vmatprep.subr.mxu0 0.0
    %593 = vmatpush1.msra.mxu0 0.0
    %594 = vmatprep.subr.mxu0 0.0
    %595 = vmatpush1.msra.mxu0 0.0
    %596 = vmatprep.subr.mxu0 0.0
    %597 = vmatpush1.msra.mxu0 0.0
    %598 = vmatprep.subr.mxu0 0.0
    %599 = vmatpush1.msra.mxu0 0.0
    %600 = vmatprep.subr.mxu0 0.0
    %601 = vmatpush1.msra.mxu0 0.0
    %602 = vmatprep.subr.mxu0 0.0
    %603 = vmatpush1.msra.mxu0 0.0
    %604 = vmatprep.subr.mxu0 0.0
    %605 = vmatpush1.msra.mxu0 0.0
    %606 = vmatprep.subr.mxu0 0.0
    %607 = vmatpush1.msra.mxu0 0.0
    %608 = vmatprep.mubr.f32.mxu0 0.0
    %609 = vmatmul.mubr.f32.gmra.mrb[0].mxu0 %v491
    %v610 = vpop.f32.mrb[0].mxu0
    %v611 = vadd.f32 %v543, %v610
    %v612 = vpop.f32.mrb[0].mxu0
    %613 = vmatprep.mubr.f32.mxu0 0.0
    %614 = vmatmul.mubr.f32.gmra.mrb[0].mxu0 %v492
    %v615 = vpop.f32.mrb[0].mxu0
    %v616 = vadd.f32 %v543, %v615
    %v617 = vpop.f32.mrb[0].mxu0
    %618 = vmatprep.mubr.f32.mxu0 0.0
    %619 = vmatmul.mubr.f32.gmra.mrb[0].mxu0 %v493
    %v620 = vpop.f32.mrb[0].mxu0
    %v621 = vadd.f32 %v543, %v620
    %v622 = vpop.f32.mrb[0].mxu0
    %623 = vmatprep.mubr.f32.mxu0 0.0
    %624 = vmatmul.mubr.f32.gmra.mrb[0].mxu0 %v494
    %v625 = vpop.f32.mrb[0].mxu0
    %v626 = vadd.f32 %v543, %v625
    %v627 = vpop.f32.mrb[0].mxu0
    %628 = vmatprep.mubr.f32.mxu0 0.0
    %629 = vmatmul.mubr.f32.gmra.mrb[0].mxu0 %v495
    %v630 = vpop.f32.mrb[0].mxu0
    %v631 = vadd.f32 %v543, %v630
    %v632 = vpop.f32.mrb[0].mxu0
    %633 = vmatprep.mubr.f32.mxu0 0.0
    %634 = vmatmul.mubr.f32.gmra.mrb[0].mxu0 %v496
    %v635 = vpop.f32.mrb[0].mxu0
    %v636 = vadd.f32 %v543, %v635
    %v637 = vpop.f32.mrb[0].mxu0
    %638 = vmatprep.mubr.f32.mxu0 0.0
    %639 = vmatmul.mubr.f32.gmra.mrb[0].mxu0 %v497
    %v640 = vpop.f32.mrb[0].mxu0
    %v641 = vadd.f32 %v543, %v640
    %v642 = vpop.f32.mrb[0].mxu0
    %643 = vmatprep.mubr.f32.mxu0 0.0
    %644 = vmatmul.mubr.f32.gmra.mrb[0].mxu0 %v498
    %v645 = vpop.f32.mrb[0].mxu0
    %v646 = vadd.f32 %v543, %v645
    %v647 = vpop.f32.mrb[0].mxu0
    %648 = vmatprep.mubr.f32.mxu0 0.0
    %649 = vmatmul.mubr.f32.gmra.mrb[0].mxu0 %v499
    %v650 = vpop.f32.mrb[0].mxu0
    %v651 = vadd.f32 %v543, %v650
    %v652 = vpop.f32.mrb[0].mxu0
    %653 = vmatprep.mubr.f32.mxu0 0.0
    %654 = vmatmul.mubr.f32.gmra.mrb[0].mxu0 %v500
    %v655 = vpop.f32.mrb[0].mxu0
    %v656 = vadd.f32 %v543, %v655
    %v657 = vpop.f32.mrb[0].mxu0
    %658 = vmatprep.mubr.f32.mxu0 0.0
    %659 = vmatmul.mubr.f32.gmra.mrb[0].mxu0 %v501
    %v660 = vpop.f32.mrb[0].mxu0
    %v661 = vadd.f32 %v543, %v660
    %v662 = vpop.f32.mrb[0].mxu0
    %663 = vmatprep.mubr.f32.mxu0 0.0
    %664 = vmatmul.mubr.f32.gmra.mrb[0].mxu0 %v502
    %v665 = vpop.f32.mrb[0].mxu0
    %v666 = vadd.f32 %v543, %v665
    %v667 = vpop.f32.mrb[0].mxu0
    %668 = vmatprep.mubr.f32.mxu0 0.0
    %669 = vmatmul.mubr.f32.gmra.mrb[0].mxu0 %v503
    %v670 = vpop.f32.mrb[0].mxu0
    %v671 = vadd.f32 %v543, %v670
    %v672 = vpop.f32.mrb[0].mxu0
    %673 = vmatprep.mubr.f32.mxu0 0.0
    %674 = vmatmul.mubr.f32.gmra.mrb[0].mxu0 %v504
    %v675 = vpop.f32.mrb[0].mxu0
    %v676 = vadd.f32 %v543, %v675
    %v677 = vpop.f32.mrb[0].mxu0
    %678 = vmatprep.mubr.f32.mxu0 0.0
    %679 = vmatmul.mubr.f32.gmra.mrb[0].mxu0 %v505
    %v680 = vpop.f32.mrb[0].mxu0
    %v681 = vadd.f32 %v543, %v680
    %v682 = vpop.f32.mrb[0].mxu0
    %683 = vmatprep.mubr.f32.mxu0 0.0
    %684 = vmatmul.mubr.f32.gmra.mrb[0].mxu0 %v506
    %v685 = vpop.f32.mrb[0].mxu0
    %v686 = vadd.f32 %v543, %v685
    %v687 = vpop.f32.mrb[0].mxu0
    %688 = vmatprep.mubr.f32.mxu0 0.0
    %689 = vmatmul.mubr.f32.gmra.mrb[0].mxu0 %v507
    %v690 = vpop.f32.mrb[0].mxu0
    %v691 = vadd.f32 %v543, %v690
    %v692 = vpop.f32.mrb[0].mxu0
    %693 = vmatprep.mubr.f32.mxu0 0.0
    %694 = vmatmul.mubr.f32.gmra.mrb[0].mxu0 %v508
    %v695 = vpop.f32.mrb[0].mxu0
    %v696 = vadd.f32 %v543, %v695
    %v697 = vpop.f32.mrb[0].mxu0
    %698 = vmatprep.mubr.f32.mxu0 0.0
    %699 = vmatmul.mubr.f32.gmra.mrb[0].mxu0 %v509
    %v700 = vpop.f32.mrb[0].mxu0
    %v701 = vadd.f32 %v543, %v700
    %v702 = vpop.f32.mrb[0].mxu0
    %703 = vmatprep.mubr.f32.mxu0 0.0
    %704 = vmatmul.mubr.f32.gmra.mrb[0].mxu0 %v510
    %v705 = vpop.f32.mrb[0].mxu0
    %v706 = vadd.f32 %v543, %v705
    %v707 = vpop.f32.mrb[0].mxu0
    %708 = vmatprep.mubr.f32.mxu0 0.0
    %709 = vmatmul.mubr.f32.gmra.mrb[0].mxu0 %v511
    %v710 = vpop.f32.mrb[0].mxu0
    %v711 = vadd.f32 %v543, %v710
    %v712 = vpop.f32.mrb[0].mxu0
    %713 = vmatprep.mubr.f32.mxu0 0.0
    %714 = vmatmul.mubr.f32.gmra.mrb[0].mxu0 %v512
    %v715 = vpop.f32.mrb[0].mxu0
    %v716 = vadd.f32 %v543, %v715
    %v717 = vpop.f32.mrb[0].mxu0
    %718 = vmatprep.mubr.f32.mxu0 0.0
    %719 = vmatmul.mubr.f32.gmra.mrb[0].mxu0 %v513
    %v720 = vpop.f32.mrb[0].mxu0
    %v721 = vadd.f32 %v543, %v720
    %v722 = vpop.f32.mrb[0].mxu0
    %723 = vmatprep.mubr.f32.mxu0 0.0
    %724 = vmatmul.mubr.f32.gmra.mrb[0].mxu0 %v514
    %v725 = vpop.f32.mrb[0].mxu0
    %v726 = vadd.f32 %v543, %v725
    %v727 = vpop.f32.mrb[0].mxu0
    %728 = vmatprep.mubr.f32.mxu0 0.0
    %729 = vmatmul.mubr.f32.gmra.mrb[0].mxu0 %v515
    %v730 = vpop.f32.mrb[0].mxu0
    %v731 = vadd.f32 %v543, %v730
    %v732 = vpop.f32.mrb[0].mxu0
    %733 = vmatprep.mubr.f32.mxu0 0.0
    %734 = vmatmul.mubr.f32.gmra.mrb[0].mxu0 %v516
    %v735 = vpop.f32.mrb[0].mxu0
    %v736 = vadd.f32 %v543, %v735
    %v737 = vpop.f32.mrb[0].mxu0
    %738 = vmatprep.mubr.f32.mxu0 0.0
    %739 = vmatmul.mubr.f32.gmra.mrb[0].mxu0 %v517
    %v740 = vpop.f32.mrb[0].mxu0
    %v741 = vadd.f32 %v543, %v740
    %v742 = vpop.f32.mrb[0].mxu0
    %743 = vmatprep.mubr.f32.mxu0 0.0
    %744 = vmatmul.mubr.f32.gmra.mrb[0].mxu0 %v518
    %v745 = vpop.f32.mrb[0].mxu0
    %v746 = vadd.f32 %v543, %v745
    %v747 = vpop.f32.mrb[0].mxu0
    %748 = vmatprep.mubr.f32.mxu0 0.0
    %749 = vmatmul.mubr.f32.gmra.mrb[0].mxu0 %v519
    %v750 = vpop.f32.mrb[0].mxu0
    %v751 = vadd.f32 %v543, %v750
    %v752 = vpop.f32.mrb[0].mxu0
    %753 = vmatprep.mubr.f32.mxu0 0.0
    %754 = vmatmul.mubr.f32.gmra.mrb[0].mxu0 %v520
    %v755 = vpop.f32.mrb[0].mxu0
    %v756 = vadd.f32 %v543, %v755
    %v757 = vpop.f32.mrb[0].mxu0
    %758 = vmatprep.mubr.f32.mxu0 0.0
    %759 = vmatmul.mubr.f32.gmra.mrb[0].mxu0 %v521
    %v760 = vpop.f32.mrb[0].mxu0
    %v761 = vadd.f32 %v543, %v760
    %v762 = vpop.f32.mrb[0].mxu0
    %763 = vmatprep.mubr.f32.mxu0 0.0
    %764 = vmatmul.mubr.f32.gmra.mrb[0].mxu0 %v522
    %v765 = vpop.f32.mrb[0].mxu0
    %v766 = vadd.f32 %v543, %v765
    %v767 = vpop.f32.mrb[0].mxu0
    %768 = vdwg.mxu0
    %v769 = vld [vmem:[#allocation5] sm:$0xff]
    %v770 = vld [vmem:[#allocation5 + $0x8] sm:$0xff]
    %v771 = vld [vmem:[#allocation5 + $0x10] sm:$0xff]
    %v772 = vld [vmem:[#allocation5 + $0x18] sm:$0xff]
    %v773 = vld [vmem:[#allocation5 + $0x20] sm:$0xff]
    %v774 = vld [vmem:[#allocation5 + $0x28] sm:$0xff]
    %v775 = vld [vmem:[#allocation5 + $0x30] sm:$0xff]
    %v776 = vld [vmem:[#allocation5 + $0x38] sm:$0xff]
    %v777 = vld [vmem:[#allocation5 + $0x40] sm:$0xff]
    %v778 = vld [vmem:[#allocation5 + $0x48] sm:$0xff]
    %v779 = vld [vmem:[#allocation5 + $0x50] sm:$0xff]
    %v780 = vld [vmem:[#allocation5 + $0x58] sm:$0xff]
    %v781 = vld [vmem:[#allocation5 + $0x60] sm:$0xff]
    %v782 = vld [vmem:[#allocation5 + $0x68] sm:$0xff]
    %v783 = vld [vmem:[#allocation5 + $0x70] sm:$0xff]
    %v784 = vld [vmem:[#allocation5 + $0x78] sm:$0xff]
    %v785 = vld [vmem:[#allocation5 + $0x80] sm:$0xff]
    %v786 = vld [vmem:[#allocation5 + $0x88] sm:$0xff]
    %v787 = vld [vmem:[#allocation5 + $0x90] sm:$0xff]
    %v788 = vld [vmem:[#allocation5 + $0x98] sm:$0xff]
    %v789 = vld [vmem:[#allocation5 + $0xa0] sm:$0xff]
    %v790 = vld [vmem:[#allocation5 + $0xa8] sm:$0xff]
    %v791 = vld [vmem:[#allocation5 + $0xb0] sm:$0xff]
    %v792 = vld [vmem:[#allocation5 + $0xb8] sm:$0xff]
    %v793 = vld [vmem:[#allocation5 + $0xc0] sm:$0xff]
    %v794 = vld [vmem:[#allocation5 + $0xc8] sm:$0xff]
    %v795 = vld [vmem:[#allocation5 + $0xd0] sm:$0xff]
    %v796 = vld [vmem:[#allocation5 + $0xd8] sm:$0xff]
    %v797 = vld [vmem:[#allocation5 + $0xe0] sm:$0xff]
    %v798 = vld [vmem:[#allocation5 + $0xe8] sm:$0xff]
    %v799 = vld [vmem:[#allocation5 + $0xf0] sm:$0xff]
    %v800 = vld [vmem:[#allocation5 + $0xf8] sm:$0xff]
    %v801 = vld [vmem:[#allocation5 + $0x100] sm:$0xff]
    %v802 = vld [vmem:[#allocation5 + $0x108] sm:$0xff]
    %v803 = vld [vmem:[#allocation5 + $0x110] sm:$0xff]
    %v804 = vld [vmem:[#allocation5 + $0x118] sm:$0xff]
    %v805 = vld [vmem:[#allocation5 + $0x120] sm:$0xff]
    %v806 = vld [vmem:[#allocation5 + $0x128] sm:$0xff]
    %v807 = vld [vmem:[#allocation5 + $0x130] sm:$0xff]
    %v808 = vld [vmem:[#allocation5 + $0x138] sm:$0xff]
    %v809 = vld [vmem:[#allocation5 + $0x140] sm:$0xff]
    %v810 = vld [vmem:[#allocation5 + $0x148] sm:$0xff]
    %v811 = vld [vmem:[#allocation5 + $0x150] sm:$0xff]
    %v812 = vld [vmem:[#allocation5 + $0x158] sm:$0xff]
    %v813 = vld [vmem:[#allocation5 + $0x160] sm:$0xff]
    %v814 = vld [vmem:[#allocation5 + $0x168] sm:$0xff]
    %v815 = vld [vmem:[#allocation5 + $0x170] sm:$0xff]
    %v816 = vld [vmem:[#allocation5 + $0x178] sm:$0xff]
    %v817 = vld [vmem:[#allocation5 + $0x180] sm:$0xff]
    %v818 = vld [vmem:[#allocation5 + $0x188] sm:$0xff]
    %v819 = vld [vmem:[#allocation5 + $0x190] sm:$0xff]
    %v820 = vld [vmem:[#allocation5 + $0x198] sm:$0xff]
    %v821 = vld [vmem:[#allocation5 + $0x1a0] sm:$0xff]
    %v822 = vld [vmem:[#allocation5 + $0x1a8] sm:$0xff]
    %v823 = vld [vmem:[#allocation5 + $0x1b0] sm:$0xff]
    %v824 = vld [vmem:[#allocation5 + $0x1b8] sm:$0xff]
    %v825 = vld [vmem:[#allocation5 + $0x1c0] sm:$0xff]
    %v826 = vld [vmem:[#allocation5 + $0x1c8] sm:$0xff]
    %v827 = vld [vmem:[#allocation5 + $0x1d0] sm:$0xff]
    %v828 = vld [vmem:[#allocation5 + $0x1d8] sm:$0xff]
    %v829 = vld [vmem:[#allocation5 + $0x1e0] sm:$0xff]
    %v830 = vld [vmem:[#allocation5 + $0x1e8] sm:$0xff]
    %v831 = vld [vmem:[#allocation5 + $0x1f0] sm:$0xff]
    %v832 = vld [vmem:[#allocation5 + $0x1f8] sm:$0xff]
    %v833 = vld [vmem:[#allocation11 + $0x80] sm:$0xff]
    %v834 = vld [vmem:[#allocation11 + $0x88] sm:$0xff]
    %v835 = vld [vmem:[#allocation11 + $0x90] sm:$0xff]
    %v836 = vld [vmem:[#allocation11 + $0x98] sm:$0xff]
    %v837 = vld [vmem:[#allocation11 + $0xa0] sm:$0xff]
    %v838 = vld [vmem:[#allocation11 + $0xa8] sm:$0xff]
    %v839 = vld [vmem:[#allocation11 + $0xb0] sm:$0xff]
    %v840 = vld [vmem:[#allocation11 + $0xb8] sm:$0xff]
    %v841 = vld [vmem:[#allocation11 + $0xc0] sm:$0xff]
    %v842 = vld [vmem:[#allocation11 + $0xc8] sm:$0xff]
    %v843 = vld [vmem:[#allocation11 + $0xd0] sm:$0xff]
    %v844 = vld [vmem:[#allocation11 + $0xd8] sm:$0xff]
    %v845 = vld [vmem:[#allocation11 + $0xe0] sm:$0xff]
    %v846 = vld [vmem:[#allocation11 + $0xe8] sm:$0xff]
    %v847 = vld [vmem:[#allocation11 + $0xf0] sm:$0xff]
    %v848 = vld [vmem:[#allocation11 + $0xf8] sm:$0xff]
    %v849 = vld [vmem:[%s6 + $0x1] sm:$0x1]
    %v850 = vlaneseq
    %v851 = vshrl.u32 %v850, 7
    %v852 = vsub.s32 0, %v851
    %v853 = vrot.slane %v849, %v852
    %854 = vmatprep.subr.mxu0 0.0
    %855 = vmatpush1.msra.mxu0 %v833
    %856 = vmatprep.subr.mxu0 0.0
    %857 = vmatpush1.msra.mxu0 %v834
    %858 = vmatprep.subr.mxu0 0.0
    %859 = vmatpush1.msra.mxu0 %v835
    %860 = vmatprep.subr.mxu0 0.0
    %861 = vmatpush1.msra.mxu0 %v836
    %862 = vmatprep.subr.mxu0 0.0
    %863 = vmatpush1.msra.mxu0 %v837
    %864 = vmatprep.subr.mxu0 0.0
    %865 = vmatpush1.msra.mxu0 %v838
    %866 = vmatprep.subr.mxu0 0.0
    %867 = vmatpush1.msra.mxu0 %v839
    %868 = vmatprep.subr.mxu0 0.0
    %869 = vmatpush1.msra.mxu0 %v840
    %870 = vmatprep.subr.mxu0 0.0
    %871 = vmatpush1.msra.mxu0 %v841
    %872 = vmatprep.subr.mxu0 0.0
    %873 = vmatpush1.msra.mxu0 %v842
    %874 = vmatprep.subr.mxu0 0.0
    %875 = vmatpush1.msra.mxu0 %v843
    %876 = vmatprep.subr.mxu0 0.0
    %877 = vmatpush1.msra.mxu0 %v844
    %878 = vmatprep.subr.mxu0 0.0
    %879 = vmatpush1.msra.mxu0 %v845
    %880 = vmatprep.subr.mxu0 0.0
    %881 = vmatpush1.msra.mxu0 %v846
    %882 = vmatprep.subr.mxu0 0.0
    %883 = vmatpush1.msra.mxu0 %v847
    %884 = vmatprep.subr.mxu0 0.0
    %885 = vmatpush1.msra.mxu0 %v848
    %886 = vmatprep.subr.mxu0 0.0
    %887 = vmatpush1.msra.mxu0 0.0
    %888 = vmatprep.subr.mxu0 0.0
    %889 = vmatpush1.msra.mxu0 0.0
    %890 = vmatprep.subr.mxu0 0.0
    %891 = vmatpush1.msra.mxu0 0.0
    %892 = vmatprep.subr.mxu0 0.0
    %893 = vmatpush1.msra.mxu0 0.0
    %894 = vmatprep.subr.mxu0 0.0
    %895 = vmatpush1.msra.mxu0 0.0
    %896 = vmatprep.subr.mxu0 0.0
    %897 = vmatpush1.msra.mxu0 0.0
    %898 = vmatprep.subr.mxu0 0.0
    %899 = vmatpush1.msra.mxu0 0.0
    %900 = vmatprep.subr.mxu0 0.0
    %901 = vmatpush1.msra.mxu0 0.0
    %902 = vmatprep.subr.mxu0 0.0
    %903 = vmatpush1.msra.mxu0 0.0
    %904 = vmatprep.subr.mxu0 0.0
    %905 = vmatpush1.msra.mxu0 0.0
    %906 = vmatprep.subr.mxu0 0.0
    %907 = vmatpush1.msra.mxu0 0.0
    %908 = vmatprep.subr.mxu0 0.0
    %909 = vmatpush1.msra.mxu0 0.0
    %910 = vmatprep.subr.mxu0 0.0
    %911 = vmatpush1.msra.mxu0 0.0
    %912 = vmatprep.subr.mxu0 0.0
    %913 = vmatpush1.msra.mxu0 0.0
    %914 = vmatprep.subr.mxu0 0.0
    %915 = vmatpush1.msra.mxu0 0.0
    %916 = vmatprep.subr.mxu0 0.0
    %917 = vmatpush1.msra.mxu0 0.0
    %918 = vmatprep.mubr.f32.mxu0 0.0
    %919 = vmatmul.mubr.f32.gmra.mrb[0].mxu0 %v769
    %v920 = vpop.f32.mrb[0].mxu0
    %v921 = vadd.f32 %v853, %v920
    %v922 = vpop.f32.mrb[0].mxu0
    %923 = vmatprep.mubr.f32.mxu0 0.0
    %924 = vmatmul.mubr.f32.gmra.mrb[0].mxu0 %v770
    %v925 = vpop.f32.mrb[0].mxu0
    %v926 = vadd.f32 %v853, %v925
    %v927 = vpop.f32.mrb[0].mxu0
    %928 = vmatprep.mubr.f32.mxu0 0.0
    %929 = vmatmul.mubr.f32.gmra.mrb[0].mxu0 %v771
    %v930 = vpop.f32.mrb[0].mxu0
    %v931 = vadd.f32 %v853, %v930
    %v932 = vpop.f32.mrb[0].mxu0
    %933 = vmatprep.mubr.f32.mxu0 0.0
    %934 = vmatmul.mubr.f32.gmra.mrb[0].mxu0 %v772
    %v935 = vpop.f32.mrb[0].mxu0
    %v936 = vadd.f32 %v853, %v935
    %v937 = vpop.f32.mrb[0].mxu0
    %938 = vmatprep.mubr.f32.mxu0 0.0
    %939 = vmatmul.mubr.f32.gmra.mrb[0].mxu0 %v773
    %v940 = vpop.f32.mrb[0].mxu0
    %v941 = vadd.f32 %v853, %v940
    %v942 = vpop.f32.mrb[0].mxu0
    %943 = vmatprep.mubr.f32.mxu0 0.0
    %944 = vmatmul.mubr.f32.gmra.mrb[0].mxu0 %v774
    %v945 = vpop.f32.mrb[0].mxu0
    %v946 = vadd.f32 %v853, %v945
    %v947 = vpop.f32.mrb[0].mxu0
    %948 = vmatprep.mubr.f32.mxu0 0.0
    %949 = vmatmul.mubr.f32.gmra.mrb[0].mxu0 %v775
    %v950 = vpop.f32.mrb[0].mxu0
    %v951 = vadd.f32 %v853, %v950
    %v952 = vpop.f32.mrb[0].mxu0
    %953 = vmatprep.mubr.f32.mxu0 0.0
    %954 = vmatmul.mubr.f32.gmra.mrb[0].mxu0 %v776
    %v955 = vpop.f32.mrb[0].mxu0
    %v956 = vadd.f32 %v853, %v955
    %v957 = vpop.f32.mrb[0].mxu0
    %958 = vmatprep.mubr.f32.mxu0 0.0
    %959 = vmatmul.mubr.f32.gmra.mrb[0].mxu0 %v777
    %v960 = vpop.f32.mrb[0].mxu0
    %v961 = vadd.f32 %v853, %v960
    %v962 = vpop.f32.mrb[0].mxu0
    %963 = vmatprep.mubr.f32.mxu0 0.0
    %964 = vmatmul.mubr.f32.gmra.mrb[0].mxu0 %v778
    %v965 = vpop.f32.mrb[0].mxu0
    %v966 = vadd.f32 %v853, %v965
    %v967 = vpop.f32.mrb[0].mxu0
    %968 = vmatprep.mubr.f32.mxu0 0.0
    %969 = vmatmul.mubr.f32.gmra.mrb[0].mxu0 %v779
    %v970 = vpop.f32.mrb[0].mxu0
    %v971 = vadd.f32 %v853, %v970
    %v972 = vpop.f32.mrb[0].mxu0
    %973 = vmatprep.mubr.f32.mxu0 0.0
    %974 = vmatmul.mubr.f32.gmra.mrb[0].mxu0 %v780
    %v975 = vpop.f32.mrb[0].mxu0
    %v976 = vadd.f32 %v853, %v975
    %v977 = vpop.f32.mrb[0].mxu0
    %978 = vmatprep.mubr.f32.mxu0 0.0
    %979 = vmatmul.mubr.f32.gmra.mrb[0].mxu0 %v781
    %v980 = vpop.f32.mrb[0].mxu0
    %v981 = vadd.f32 %v853, %v980
    %v982 = vpop.f32.mrb[0].mxu0
    %983 = vmatprep.mubr.f32.mxu0 0.0
    %984 = vmatmul.mubr.f32.gmra.mrb[0].mxu0 %v782
    %v985 = vpop.f32.mrb[0].mxu0
    %v986 = vadd.f32 %v853, %v985
    %v987 = vpop.f32.mrb[0].mxu0
    %988 = vmatprep.mubr.f32.mxu0 0.0
    %989 = vmatmul.mubr.f32.gmra.mrb[0].mxu0 %v783
    %v990 = vpop.f32.mrb[0].mxu0
    %v991 = vadd.f32 %v853, %v990
    %v992 = vpop.f32.mrb[0].mxu0
    %993 = vmatprep.mubr.f32.mxu0 0.0
    %994 = vmatmul.mubr.f32.gmra.mrb[0].mxu0 %v784
    %v995 = vpop.f32.mrb[0].mxu0
    %v996 = vadd.f32 %v853, %v995
    %v997 = vpop.f32.mrb[0].mxu0
    %998 = vmatprep.mubr.f32.mxu0 0.0
    %999 = vmatmul.mubr.f32.gmra.mrb[0].mxu0 %v785
    %v1000 = vpop.f32.mrb[0].mxu0
    %v1001 = vadd.f32 %v853, %v1000
    %v1002 = vpop.f32.mrb[0].mxu0
    %1003 = vmatprep.mubr.f32.mxu0 0.0
    %1004 = vmatmul.mubr.f32.gmra.mrb[0].mxu0 %v786
    %v1005 = vpop.f32.mrb[0].mxu0
    %v1006 = vadd.f32 %v853, %v1005
    %v1007 = vpop.f32.mrb[0].mxu0
    %1008 = vmatprep.mubr.f32.mxu0 0.0
    %1009 = vmatmul.mubr.f32.gmra.mrb[0].mxu0 %v787
    %v1010 = vpop.f32.mrb[0].mxu0
    %v1011 = vadd.f32 %v853, %v1010
    %v1012 = vpop.f32.mrb[0].mxu0
    %1013 = vmatprep.mubr.f32.mxu0 0.0
    %1014 = vmatmul.mubr.f32.gmra.mrb[0].mxu0 %v788
    %v1015 = vpop.f32.mrb[0].mxu0
    %v1016 = vadd.f32 %v853, %v1015
    %v1017 = vpop.f32.mrb[0].mxu0
    %1018 = vmatprep.mubr.f32.mxu0 0.0
    %1019 = vmatmul.mubr.f32.gmra.mrb[0].mxu0 %v789
    %v1020 = vpop.f32.mrb[0].mxu0
    %v1021 = vadd.f32 %v853, %v1020
    %v1022 = vpop.f32.mrb[0].mxu0
    %1023 = vmatprep.mubr.f32.mxu0 0.0
    %1024 = vmatmul.mubr.f32.gmra.mrb[0].mxu0 %v790
    %v1025 = vpop.f32.mrb[0].mxu0
    %v1026 = vadd.f32 %v853, %v1025
    %v1027 = vpop.f32.mrb[0].mxu0
    %1028 = vmatprep.mubr.f32.mxu0 0.0
    %1029 = vmatmul.mubr.f32.gmra.mrb[0].mxu0 %v791
    %v1030 = vpop.f32.mrb[0].mxu0
    %v1031 = vadd.f32 %v853, %v1030
    %v1032 = vpop.f32.mrb[0].mxu0
    %1033 = vmatprep.mubr.f32.mxu0 0.0
    %1034 = vmatmul.mubr.f32.gmra.mrb[0].mxu0 %v792
    %v1035 = vpop.f32.mrb[0].mxu0
    %v1036 = vadd.f32 %v853, %v1035
    %v1037 = vpop.f32.mrb[0].mxu0
    %1038 = vmatprep.mubr.f32.mxu0 0.0
    %1039 = vmatmul.mubr.f32.gmra.mrb[0].mxu0 %v793
    %v1040 = vpop.f32.mrb[0].mxu0
    %v1041 = vadd.f32 %v853, %v1040
    %v1042 = vpop.f32.mrb[0].mxu0
    %1043 = vmatprep.mubr.f32.mxu0 0.0
    %1044 = vmatmul.mubr.f32.gmra.mrb[0].mxu0 %v794
    %v1045 = vpop.f32.mrb[0].mxu0
    %v1046 = vadd.f32 %v853, %v1045
    %v1047 = vpop.f32.mrb[0].mxu0
    %1048 = vmatprep.mubr.f32.mxu0 0.0
    %1049 = vmatmul.mubr.f32.gmra.mrb[0].mxu0 %v795
    %v1050 = vpop.f32.mrb[0].mxu0
    %v1051 = vadd.f32 %v853, %v1050
    %v1052 = vpop.f32.mrb[0].mxu0
    %1053 = vmatprep.mubr.f32.mxu0 0.0
    %1054 = vmatmul.mubr.f32.gmra.mrb[0].mxu0 %v796
    %v1055 = vpop.f32.mrb[0].mxu0
    %v1056 = vadd.f32 %v853, %v1055
    %v1057 = vpop.f32.mrb[0].mxu0
    %1058 = vmatprep.mubr.f32.mxu0 0.0
    %1059 = vmatmul.mubr.f32.gmra.mrb[0].mxu0 %v797
    %v1060 = vpop.f32.mrb[0].mxu0
    %v1061 = vadd.f32 %v853, %v1060
    %v1062 = vpop.f32.mrb[0].mxu0
    %1063 = vmatprep.mubr.f32.mxu0 0.0
    %1064 = vmatmul.mubr.f32.gmra.mrb[0].mxu0 %v798
    %v1065 = vpop.f32.mrb[0].mxu0
    %v1066 = vadd.f32 %v853, %v1065
    %v1067 = vpop.f32.mrb[0].mxu0
    %1068 = vmatprep.mubr.f32.mxu0 0.0
    %1069 = vmatmul.mubr.f32.gmra.mrb[0].mxu0 %v799
    %v1070 = vpop.f32.mrb[0].mxu0
    %v1071 = vadd.f32 %v853, %v1070
    %v1072 = vpop.f32.mrb[0].mxu0
    %1073 = vmatprep.mubr.f32.mxu0 0.0
    %1074 = vmatmul.mubr.f32.gmra.mrb[0].mxu0 %v800
    %v1075 = vpop.f32.mrb[0].mxu0
    %v1076 = vadd.f32 %v853, %v1075
    %v1077 = vpop.f32.mrb[0].mxu0
    %1078 = vmatprep.mubr.f32.mxu0 0.0
    %1079 = vmatmul.mubr.f32.gmra.mrb[0].mxu0 %v801
    %v1080 = vpop.f32.mrb[0].mxu0
    %v1081 = vadd.f32 %v853, %v1080
    %v1082 = vpop.f32.mrb[0].mxu0
    %1083 = vmatprep.mubr.f32.mxu0 0.0
    %1084 = vmatmul.mubr.f32.gmra.mrb[0].mxu0 %v802
    %v1085 = vpop.f32.mrb[0].mxu0
    %v1086 = vadd.f32 %v853, %v1085
    %v1087 = vpop.f32.mrb[0].mxu0
    %1088 = vmatprep.mubr.f32.mxu0 0.0
    %1089 = vmatmul.mubr.f32.gmra.mrb[0].mxu0 %v803
    %v1090 = vpop.f32.mrb[0].mxu0
    %v1091 = vadd.f32 %v853, %v1090
    %v1092 = vpop.f32.mrb[0].mxu0
    %1093 = vmatprep.mubr.f32.mxu0 0.0
    %1094 = vmatmul.mubr.f32.gmra.mrb[0].mxu0 %v804
    %v1095 = vpop.f32.mrb[0].mxu0
    %v1096 = vadd.f32 %v853, %v1095
    %v1097 = vpop.f32.mrb[0].mxu0
    %1098 = vmatprep.mubr.f32.mxu0 0.0
    %1099 = vmatmul.mubr.f32.gmra.mrb[0].mxu0 %v805
    %v1100 = vpop.f32.mrb[0].mxu0
    %v1101 = vadd.f32 %v853, %v1100
    %v1102 = vpop.f32.mrb[0].mxu0
    %1103 = vmatprep.mubr.f32.mxu0 0.0
    %1104 = vmatmul.mubr.f32.gmra.mrb[0].mxu0 %v806
    %v1105 = vpop.f32.mrb[0].mxu0
    %v1106 = vadd.f32 %v853, %v1105
    %v1107 = vpop.f32.mrb[0].mxu0
    %1108 = vmatprep.mubr.f32.mxu0 0.0
    %1109 = vmatmul.mubr.f32.gmra.mrb[0].mxu0 %v807
    %v1110 = vpop.f32.mrb[0].mxu0
    %v1111 = vadd.f32 %v853, %v1110
    %v1112 = vpop.f32.mrb[0].mxu0
    %1113 = vmatprep.mubr.f32.mxu0 0.0
    %1114 = vmatmul.mubr.f32.gmra.mrb[0].mxu0 %v808
    %v1115 = vpop.f32.mrb[0].mxu0
    %v1116 = vadd.f32 %v853, %v1115
    %v1117 = vpop.f32.mrb[0].mxu0
    %1118 = vmatprep.mubr.f32.mxu0 0.0
    %1119 = vmatmul.mubr.f32.gmra.mrb[0].mxu0 %v809
    %v1120 = vpop.f32.mrb[0].mxu0
    %v1121 = vadd.f32 %v853, %v1120
    %v1122 = vpop.f32.mrb[0].mxu0
    %1123 = vmatprep.mubr.f32.mxu0 0.0
    %1124 = vmatmul.mubr.f32.gmra.mrb[0].mxu0 %v810
    %v1125 = vpop.f32.mrb[0].mxu0
    %v1126 = vadd.f32 %v853, %v1125
    %v1127 = vpop.f32.mrb[0].mxu0
    %1128 = vmatprep.mubr.f32.mxu0 0.0
    %1129 = vmatmul.mubr.f32.gmra.mrb[0].mxu0 %v811
    %v1130 = vpop.f32.mrb[0].mxu0
    %v1131 = vadd.f32 %v853, %v1130
    %v1132 = vpop.f32.mrb[0].mxu0
    %1133 = vmatprep.mubr.f32.mxu0 0.0
    %1134 = vmatmul.mubr.f32.gmra.mrb[0].mxu0 %v812
    %v1135 = vpop.f32.mrb[0].mxu0
    %v1136 = vadd.f32 %v853, %v1135
    %v1137 = vpop.f32.mrb[0].mxu0
    %1138 = vmatprep.mubr.f32.mxu0 0.0
    %1139 = vmatmul.mubr.f32.gmra.mrb[0].mxu0 %v813
    %v1140 = vpop.f32.mrb[0].mxu0
    %v1141 = vadd.f32 %v853, %v1140
    %v1142 = vpop.f32.mrb[0].mxu0
    %1143 = vmatprep.mubr.f32.mxu0 0.0
    %1144 = vmatmul.mubr.f32.gmra.mrb[0].mxu0 %v814
    %v1145 = vpop.f32.mrb[0].mxu0
    %v1146 = vadd.f32 %v853, %v1145
    %v1147 = vpop.f32.mrb[0].mxu0
    %1148 = vmatprep.mubr.f32.mxu0 0.0
    %1149 = vmatmul.mubr.f32.gmra.mrb[0].mxu0 %v815
    %v1150 = vpop.f32.mrb[0].mxu0
    %v1151 = vadd.f32 %v853, %v1150
    %v1152 = vpop.f32.mrb[0].mxu0
    %1153 = vmatprep.mubr.f32.mxu0 0.0
    %1154 = vmatmul.mubr.f32.gmra.mrb[0].mxu0 %v816
    %v1155 = vpop.f32.mrb[0].mxu0
    %v1156 = vadd.f32 %v853, %v1155
    %v1157 = vpop.f32.mrb[0].mxu0
    %1158 = vmatprep.mubr.f32.mxu0 0.0
    %1159 = vmatmul.mubr.f32.gmra.mrb[0].mxu0 %v817
    %v1160 = vpop.f32.mrb[0].mxu0
    %v1161 = vadd.f32 %v853, %v1160
    %v1162 = vpop.f32.mrb[0].mxu0
    %1163 = vmatprep.mubr.f32.mxu0 0.0
    %1164 = vmatmul.mubr.f32.gmra.mrb[0].mxu0 %v818
    %v1165 = vpop.f32.mrb[0].mxu0
    %v1166 = vadd.f32 %v853, %v1165
    %v1167 = vpop.f32.mrb[0].mxu0
    %1168 = vmatprep.mubr.f32.mxu0 0.0
    %1169 = vmatmul.mubr.f32.gmra.mrb[0].mxu0 %v819
    %v1170 = vpop.f32.mrb[0].mxu0
    %v1171 = vadd.f32 %v853, %v1170
    %v1172 = vpop.f32.mrb[0].mxu0
    %1173 = vmatprep.mubr.f32.mxu0 0.0
    %1174 = vmatmul.mubr.f32.gmra.mrb[0].mxu0 %v820
    %v1175 = vpop.f32.mrb[0].mxu0
    %v1176 = vadd.f32 %v853, %v1175
    %v1177 = vpop.f32.mrb[0].mxu0
    %1178 = vmatprep.mubr.f32.mxu0 0.0
    %1179 = vmatmul.mubr.f32.gmra.mrb[0].mxu0 %v821
    %v1180 = vpop.f32.mrb[0].mxu0
    %v1181 = vadd.f32 %v853, %v1180
    %v1182 = vpop.f32.mrb[0].mxu0
    %1183 = vmatprep.mubr.f32.mxu0 0.0
    %1184 = vmatmul.mubr.f32.gmra.mrb[0].mxu0 %v822
    %v1185 = vpop.f32.mrb[0].mxu0
    %v1186 = vadd.f32 %v853, %v1185
    %v1187 = vpop.f32.mrb[0].mxu0
    %1188 = vmatprep.mubr.f32.mxu0 0.0
    %1189 = vmatmul.mubr.f32.gmra.mrb[0].mxu0 %v823
    %v1190 = vpop.f32.mrb[0].mxu0
    %v1191 = vadd.f32 %v853, %v1190
    %v1192 = vpop.f32.mrb[0].mxu0
    %1193 = vmatprep.mubr.f32.mxu0 0.0
    %1194 = vmatmul.mubr.f32.gmra.mrb[0].mxu0 %v824
    %v1195 = vpop.f32.mrb[0].mxu0
    %v1196 = vadd.f32 %v853, %v1195
    %v1197 = vpop.f32.mrb[0].mxu0
    %1198 = vmatprep.mubr.f32.mxu0 0.0
    %1199 = vmatmul.mubr.f32.gmra.mrb[0].mxu0 %v825
    %v1200 = vpop.f32.mrb[0].mxu0
    %v1201 = vadd.f32 %v853, %v1200
    %v1202 = vpop.f32.mrb[0].mxu0
    %1203 = vmatprep.mubr.f32.mxu0 0.0
    %1204 = vmatmul.mubr.f32.gmra.mrb[0].mxu0 %v826
    %v1205 = vpop.f32.mrb[0].mxu0
    %v1206 = vadd.f32 %v853, %v1205
    %v1207 = vpop.f32.mrb[0].mxu0
    %1208 = vmatprep.mubr.f32.mxu0 0.0
    %1209 = vmatmul.mubr.f32.gmra.mrb[0].mxu0 %v827
    %v1210 = vpop.f32.mrb[0].mxu0
    %v1211 = vadd.f32 %v853, %v1210
    %v1212 = vpop.f32.mrb[0].mxu0
    %1213 = vmatprep.mubr.f32.mxu0 0.0
    %1214 = vmatmul.mubr.f32.gmra.mrb[0].mxu0 %v828
    %v1215 = vpop.f32.mrb[0].mxu0
    %v1216 = vadd.f32 %v853, %v1215
    %v1217 = vpop.f32.mrb[0].mxu0
    %1218 = vmatprep.mubr.f32.mxu0 0.0
    %1219 = vmatmul.mubr.f32.gmra.mrb[0].mxu0 %v829
    %v1220 = vpop.f32.mrb[0].mxu0
    %v1221 = vadd.f32 %v853, %v1220
    %v1222 = vpop.f32.mrb[0].mxu0
    %1223 = vmatprep.mubr.f32.mxu0 0.0
    %1224 = vmatmul.mubr.f32.gmra.mrb[0].mxu0 %v830
    %v1225 = vpop.f32.mrb[0].mxu0
    %v1226 = vadd.f32 %v853, %v1225
    %v1227 = vpop.f32.mrb[0].mxu0
    %1228 = vmatprep.mubr.f32.mxu0 0.0
    %1229 = vmatmul.mubr.f32.gmra.mrb[0].mxu0 %v831
    %v1230 = vpop.f32.mrb[0].mxu0
    %v1231 = vadd.f32 %v853, %v1230
    %v1232 = vpop.f32.mrb[0].mxu0
    %1233 = vmatprep.mubr.f32.mxu0 0.0
    %1234 = vmatmul.mubr.f32.gmra.mrb[0].mxu0 %v832
    %v1235 = vpop.f32.mrb[0].mxu0
    %v1236 = vadd.f32 %v853, %v1235
    %v1237 = vpop.f32.mrb[0].mxu0
    %1238 = vdwg.mxu0
    %1239 = vmatprep.subr.mxu0 0.0
    %1240 = vmatpush1.msra.mxu0 %v611
    %1241 = vmatprep.subr.mxu0 0.0
    %1242 = vmatpush1.msra.mxu0 %v616
    %1243 = vmatprep.subr.mxu0 0.0
    %1244 = vmatpush1.msra.mxu0 %v621
    %1245 = vmatprep.subr.mxu0 0.0
    %1246 = vmatpush1.msra.mxu0 %v626
    %1247 = vmatprep.subr.mxu0 0.0
    %1248 = vmatpush1.msra.mxu0 %v631
    %1249 = vmatprep.subr.mxu0 0.0
    %1250 = vmatpush1.msra.mxu0 %v636
    %1251 = vmatprep.subr.mxu0 0.0
    %1252 = vmatpush1.msra.mxu0 %v641
    %1253 = vmatprep.subr.mxu0 0.0
    %1254 = vmatpush1.msra.mxu0 %v646
    %1255 = vmatprep.subr.mxu0 0.0
    %1256 = vmatpush1.msra.mxu0 %v651
    %1257 = vmatprep.subr.mxu0 0.0
    %1258 = vmatpush1.msra.mxu0 %v656
    %1259 = vmatprep.subr.mxu0 0.0
    %1260 = vmatpush1.msra.mxu0 %v661
    %1261 = vmatprep.subr.mxu0 0.0
    %1262 = vmatpush1.msra.mxu0 %v666
    %1263 = vmatprep.subr.mxu0 0.0
    %1264 = vmatpush1.msra.mxu0 %v671
    %1265 = vmatprep.subr.mxu0 0.0
    %1266 = vmatpush1.msra.mxu0 %v676
    %1267 = vmatprep.subr.mxu0 0.0
    %1268 = vmatpush1.msra.mxu0 %v681
    %1269 = vmatprep.subr.mxu0 0.0
    %1270 = vmatpush1.msra.mxu0 %v686
    %1271 = vmatprep.subr.mxu0 0.0
    %1272 = vmatpush1.msra.mxu0 %v691
    %1273 = vmatprep.subr.mxu0 0.0
    %1274 = vmatpush1.msra.mxu0 %v696
    %1275 = vmatprep.subr.mxu0 0.0
    %1276 = vmatpush1.msra.mxu0 %v701
    %1277 = vmatprep.subr.mxu0 0.0
    %1278 = vmatpush1.msra.mxu0 %v706
    %1279 = vmatprep.subr.mxu0 0.0
    %1280 = vmatpush1.msra.mxu0 %v711
    %1281 = vmatprep.subr.mxu0 0.0
    %1282 = vmatpush1.msra.mxu0 %v716
    %1283 = vmatprep.subr.mxu0 0.0
    %1284 = vmatpush1.msra.mxu0 %v721
    %1285 = vmatprep.subr.mxu0 0.0
    %1286 = vmatpush1.msra.mxu0 %v726
    %1287 = vmatprep.subr.mxu0 0.0
    %1288 = vmatpush1.msra.mxu0 %v731
    %1289 = vmatprep.subr.mxu0 0.0
    %1290 = vmatpush1.msra.mxu0 %v736
    %1291 = vmatprep.subr.mxu0 0.0
    %1292 = vmatpush1.msra.mxu0 %v741
    %1293 = vmatprep.subr.mxu0 0.0
    %1294 = vmatpush1.msra.mxu0 %v746
    %1295 = vmatprep.subr.mxu0 0.0
    %1296 = vmatpush1.msra.mxu0 %v751
    %1297 = vmatprep.subr.mxu0 0.0
    %1298 = vmatpush1.msra.mxu0 %v756
    %1299 = vmatprep.subr.mxu0 0.0
    %1300 = vmatpush1.msra.mxu0 %v761
    %1301 = vmatprep.subr.mxu0 0.0
    %1302 = vmatpush1.msra.mxu0 %v766
    %1303 = vmatprep.mubr.f32.mxu0 %v172
    %1304 = vmatmul.mubr.f32.gmra.mrb[0].mxu0 %v171
    %v1305 = vpop.f32.mrb[0].mxu0
    %v1306 = vadd.f32 %v921, %v1305
    %v1307 = vpop.f32.mrb[0].mxu0
    %1308 = vmatprep.mubr.f32.mxu0 %v174
    %1309 = vmatmul.mubr.f32.gmra.mrb[0].mxu0 %v173
    %v1310 = vpop.f32.mrb[0].mxu0
    %v1311 = vadd.f32 %v926, %v1310
    %v1312 = vpop.f32.mrb[0].mxu0
    %1313 = vmatprep.mubr.f32.mxu0 %v176
    %1314 = vmatmul.mubr.f32.gmra.mrb[0].mxu0 %v175
    %v1315 = vpop.f32.mrb[0].mxu0
    %v1316 = vadd.f32 %v931, %v1315
    %v1317 = vpop.f32.mrb[0].mxu0
    %1318 = vmatprep.mubr.f32.mxu0 %v178
    %1319 = vmatmul.mubr.f32.gmra.mrb[0].mxu0 %v177
    %v1320 = vpop.f32.mrb[0].mxu0
    %v1321 = vadd.f32 %v936, %v1320
    %v1322 = vpop.f32.mrb[0].mxu0
    %1323 = vmatprep.mubr.f32.mxu0 %v180
    %1324 = vmatmul.mubr.f32.gmra.mrb[0].mxu0 %v179
    %v1325 = vpop.f32.mrb[0].mxu0
    %v1326 = vadd.f32 %v941, %v1325
    %v1327 = vpop.f32.mrb[0].mxu0
    %1328 = vmatprep.mubr.f32.mxu0 %v182
    %1329 = vmatmul.mubr.f32.gmra.mrb[0].mxu0 %v181
    %v1330 = vpop.f32.mrb[0].mxu0
    %v1331 = vadd.f32 %v946, %v1330
    %v1332 = vpop.f32.mrb[0].mxu0
    %1333 = vmatprep.mubr.f32.mxu0 %v184
    %1334 = vmatmul.mubr.f32.gmra.mrb[0].mxu0 %v183
    %v1335 = vpop.f32.mrb[0].mxu0
    %v1336 = vadd.f32 %v951, %v1335
    %v1337 = vpop.f32.mrb[0].mxu0
    %1338 = vmatprep.mubr.f32.mxu0 %v186
    %1339 = vmatmul.mubr.f32.gmra.mrb[0].mxu0 %v185
    %v1340 = vpop.f32.mrb[0].mxu0
    %v1341 = vadd.f32 %v956, %v1340
    %v1342 = vpop.f32.mrb[0].mxu0
    %1343 = vmatprep.mubr.f32.mxu0 %v188
    %1344 = vmatmul.mubr.f32.gmra.mrb[0].mxu0 %v187
    %v1345 = vpop.f32.mrb[0].mxu0
    %v1346 = vadd.f32 %v961, %v1345
    %v1347 = vpop.f32.mrb[0].mxu0
    %1348 = vmatprep.mubr.f32.mxu0 %v190
    %1349 = vmatmul.mubr.f32.gmra.mrb[0].mxu0 %v189
    %v1350 = vpop.f32.mrb[0].mxu0
    %v1351 = vadd.f32 %v966, %v1350
    %v1352 = vpop.f32.mrb[0].mxu0
    %1353 = vmatprep.mubr.f32.mxu0 %v192
    %1354 = vmatmul.mubr.f32.gmra.mrb[0].mxu0 %v191
    %v1355 = vpop.f32.mrb[0].mxu0
    %v1356 = vadd.f32 %v971, %v1355
    %v1357 = vpop.f32.mrb[0].mxu0
    %1358 = vmatprep.mubr.f32.mxu0 %v194
    %1359 = vmatmul.mubr.f32.gmra.mrb[0].mxu0 %v193
    %v1360 = vpop.f32.mrb[0].mxu0
    %v1361 = vadd.f32 %v976, %v1360
    %v1362 = vpop.f32.mrb[0].mxu0
    %1363 = vmatprep.mubr.f32.mxu0 %v196
    %1364 = vmatmul.mubr.f32.gmra.mrb[0].mxu0 %v195
    %v1365 = vpop.f32.mrb[0].mxu0
    %v1366 = vadd.f32 %v981, %v1365
    %v1367 = vpop.f32.mrb[0].mxu0
    %1368 = vmatprep.mubr.f32.mxu0 %v198
    %1369 = vmatmul.mubr.f32.gmra.mrb[0].mxu0 %v197
    %v1370 = vpop.f32.mrb[0].mxu0
    %v1371 = vadd.f32 %v986, %v1370
    %v1372 = vpop.f32.mrb[0].mxu0
    %1373 = vmatprep.mubr.f32.mxu0 %v200
    %1374 = vmatmul.mubr.f32.gmra.mrb[0].mxu0 %v199
    %v1375 = vpop.f32.mrb[0].mxu0
    %v1376 = vadd.f32 %v991, %v1375
    %v1377 = vpop.f32.mrb[0].mxu0
    %1378 = vmatprep.mubr.f32.mxu0 %v202
    %1379 = vmatmul.mubr.f32.gmra.mrb[0].mxu0 %v201
    %v1380 = vpop.f32.mrb[0].mxu0
    %v1381 = vadd.f32 %v996, %v1380
    %v1382 = vpop.f32.mrb[0].mxu0
    %1383 = vmatprep.mubr.f32.mxu0 %v204
    %1384 = vmatmul.mubr.f32.gmra.mrb[0].mxu0 %v203
    %v1385 = vpop.f32.mrb[0].mxu0
    %v1386 = vadd.f32 %v1001, %v1385
    %v1387 = vpop.f32.mrb[0].mxu0
    %1388 = vmatprep.mubr.f32.mxu0 %v206
    %1389 = vmatmul.mubr.f32.gmra.mrb[0].mxu0 %v205
    %v1390 = vpop.f32.mrb[0].mxu0
    %v1391 = vadd.f32 %v1006, %v1390
    %v1392 = vpop.f32.mrb[0].mxu0
    %1393 = vmatprep.mubr.f32.mxu0 %v208
    %1394 = vmatmul.mubr.f32.gmra.mrb[0].mxu0 %v207
    %v1395 = vpop.f32.mrb[0].mxu0
    %v1396 = vadd.f32 %v1011, %v1395
    %v1397 = vpop.f32.mrb[0].mxu0
    %1398 = vmatprep.mubr.f32.mxu0 %v210
    %1399 = vmatmul.mubr.f32.gmra.mrb[0].mxu0 %v209
    %v1400 = vpop.f32.mrb[0].mxu0
    %v1401 = vadd.f32 %v1016, %v1400
    %v1402 = vpop.f32.mrb[0].mxu0
    %1403 = vmatprep.mubr.f32.mxu0 %v212
    %1404 = vmatmul.mubr.f32.gmra.mrb[0].mxu0 %v211
    %v1405 = vpop.f32.mrb[0].mxu0
    %v1406 = vadd.f32 %v1021, %v1405
    %v1407 = vpop.f32.mrb[0].mxu0
    %1408 = vmatprep.mubr.f32.mxu0 %v214
    %1409 = vmatmul.mubr.f32.gmra.mrb[0].mxu0 %v213
    %v1410 = vpop.f32.mrb[0].mxu0
    %v1411 = vadd.f32 %v1026, %v1410
    %v1412 = vpop.f32.mrb[0].mxu0
    %1413 = vmatprep.mubr.f32.mxu0 %v216
    %1414 = vmatmul.mubr.f32.gmra.mrb[0].mxu0 %v215
    %v1415 = vpop.f32.mrb[0].mxu0
    %v1416 = vadd.f32 %v1031, %v1415
    %v1417 = vpop.f32.mrb[0].mxu0
    %1418 = vmatprep.mubr.f32.mxu0 %v218
    %1419 = vmatmul.mubr.f32.gmra.mrb[0].mxu0 %v217
    %v1420 = vpop.f32.mrb[0].mxu0
    %v1421 = vadd.f32 %v1036, %v1420
    %v1422 = vpop.f32.mrb[0].mxu0
    %1423 = vmatprep.mubr.f32.mxu0 %v220
    %1424 = vmatmul.mubr.f32.gmra.mrb[0].mxu0 %v219
    %v1425 = vpop.f32.mrb[0].mxu0
    %v1426 = vadd.f32 %v1041, %v1425
    %v1427 = vpop.f32.mrb[0].mxu0
    %1428 = vmatprep.mubr.f32.mxu0 %v222
    %1429 = vmatmul.mubr.f32.gmra.mrb[0].mxu0 %v221
    %v1430 = vpop.f32.mrb[0].mxu0
    %v1431 = vadd.f32 %v1046, %v1430
    %v1432 = vpop.f32.mrb[0].mxu0
    %1433 = vmatprep.mubr.f32.mxu0 %v224
    %1434 = vmatmul.mubr.f32.gmra.mrb[0].mxu0 %v223
    %v1435 = vpop.f32.mrb[0].mxu0
    %v1436 = vadd.f32 %v1051, %v1435
    %v1437 = vpop.f32.mrb[0].mxu0
    %1438 = vmatprep.mubr.f32.mxu0 %v226
    %1439 = vmatmul.mubr.f32.gmra.mrb[0].mxu0 %v225
    %v1440 = vpop.f32.mrb[0].mxu0
    %v1441 = vadd.f32 %v1056, %v1440
    %v1442 = vpop.f32.mrb[0].mxu0
    %1443 = vmatprep.mubr.f32.mxu0 %v228
    %1444 = vmatmul.mubr.f32.gmra.mrb[0].mxu0 %v227
    %v1445 = vpop.f32.mrb[0].mxu0
    %v1446 = vadd.f32 %v1061, %v1445
    %v1447 = vpop.f32.mrb[0].mxu0
    %1448 = vmatprep.mubr.f32.mxu0 %v230
    %1449 = vmatmul.mubr.f32.gmra.mrb[0].mxu0 %v229
    %v1450 = vpop.f32.mrb[0].mxu0
    %v1451 = vadd.f32 %v1066, %v1450
    %v1452 = vpop.f32.mrb[0].mxu0
    %1453 = vmatprep.mubr.f32.mxu0 %v232
    %1454 = vmatmul.mubr.f32.gmra.mrb[0].mxu0 %v231
    %v1455 = vpop.f32.mrb[0].mxu0
    %v1456 = vadd.f32 %v1071, %v1455
    %v1457 = vpop.f32.mrb[0].mxu0
    %1458 = vmatprep.mubr.f32.mxu0 %v234
    %1459 = vmatmul.mubr.f32.gmra.mrb[0].mxu0 %v233
    %v1460 = vpop.f32.mrb[0].mxu0
    %v1461 = vadd.f32 %v1076, %v1460
    %v1462 = vpop.f32.mrb[0].mxu0
    %1463 = vmatprep.mubr.f32.mxu0 %v236
    %1464 = vmatmul.mubr.f32.gmra.mrb[0].mxu0 %v235
    %v1465 = vpop.f32.mrb[0].mxu0
    %v1466 = vadd.f32 %v1081, %v1465
    %v1467 = vpop.f32.mrb[0].mxu0
    %1468 = vmatprep.mubr.f32.mxu0 %v238
    %1469 = vmatmul.mubr.f32.gmra.mrb[0].mxu0 %v237
    %v1470 = vpop.f32.mrb[0].mxu0
    %v1471 = vadd.f32 %v1086, %v1470
    %v1472 = vpop.f32.mrb[0].mxu0
    %1473 = vmatprep.mubr.f32.mxu0 %v240
    %1474 = vmatmul.mubr.f32.gmra.mrb[0].mxu0 %v239
    %v1475 = vpop.f32.mrb[0].mxu0
    %v1476 = vadd.f32 %v1091, %v1475
    %v1477 = vpop.f32.mrb[0].mxu0
    %1478 = vmatprep.mubr.f32.mxu0 %v242
    %1479 = vmatmul.mubr.f32.gmra.mrb[0].mxu0 %v241
    %v1480 = vpop.f32.mrb[0].mxu0
    %v1481 = vadd.f32 %v1096, %v1480
    %v1482 = vpop.f32.mrb[0].mxu0
    %1483 = vmatprep.mubr.f32.mxu0 %v244
    %1484 = vmatmul.mubr.f32.gmra.mrb[0].mxu0 %v243
    %v1485 = vpop.f32.mrb[0].mxu0
    %v1486 = vadd.f32 %v1101, %v1485
    %v1487 = vpop.f32.mrb[0].mxu0
    %1488 = vmatprep.mubr.f32.mxu0 %v246
    %1489 = vmatmul.mubr.f32.gmra.mrb[0].mxu0 %v245
    %v1490 = vpop.f32.mrb[0].mxu0
    %v1491 = vadd.f32 %v1106, %v1490
    %v1492 = vpop.f32.mrb[0].mxu0
    %1493 = vmatprep.mubr.f32.mxu0 %v248
    %1494 = vmatmul.mubr.f32.gmra.mrb[0].mxu0 %v247
    %v1495 = vpop.f32.mrb[0].mxu0
    %v1496 = vadd.f32 %v1111, %v1495
    %v1497 = vpop.f32.mrb[0].mxu0
    %1498 = vmatprep.mubr.f32.mxu0 %v250
    %1499 = vmatmul.mubr.f32.gmra.mrb[0].mxu0 %v249
    %v1500 = vpop.f32.mrb[0].mxu0
    %v1501 = vadd.f32 %v1116, %v1500
    %v1502 = vpop.f32.mrb[0].mxu0
    %1503 = vmatprep.mubr.f32.mxu0 %v252
    %1504 = vmatmul.mubr.f32.gmra.mrb[0].mxu0 %v251
    %v1505 = vpop.f32.mrb[0].mxu0
    %v1506 = vadd.f32 %v1121, %v1505
    %v1507 = vpop.f32.mrb[0].mxu0
    %1508 = vmatprep.mubr.f32.mxu0 %v254
    %1509 = vmatmul.mubr.f32.gmra.mrb[0].mxu0 %v253
    %v1510 = vpop.f32.mrb[0].mxu0
    %v1511 = vadd.f32 %v1126, %v1510
    %v1512 = vpop.f32.mrb[0].mxu0
    %1513 = vmatprep.mubr.f32.mxu0 %v256
    %1514 = vmatmul.mubr.f32.gmra.mrb[0].mxu0 %v255
    %v1515 = vpop.f32.mrb[0].mxu0
    %v1516 = vadd.f32 %v1131, %v1515
    %v1517 = vpop.f32.mrb[0].mxu0
    %1518 = vmatprep.mubr.f32.mxu0 %v258
    %1519 = vmatmul.mubr.f32.gmra.mrb[0].mxu0 %v257
    %v1520 = vpop.f32.mrb[0].mxu0
    %v1521 = vadd.f32 %v1136, %v1520
    %v1522 = vpop.f32.mrb[0].mxu0
    %1523 = vmatprep.mubr.f32.mxu0 %v260
    %1524 = vmatmul.mubr.f32.gmra.mrb[0].mxu0 %v259
    %v1525 = vpop.f32.mrb[0].mxu0
    %v1526 = vadd.f32 %v1141, %v1525
    %v1527 = vpop.f32.mrb[0].mxu0
    %1528 = vmatprep.mubr.f32.mxu0 %v262
    %1529 = vmatmul.mubr.f32.gmra.mrb[0].mxu0 %v261
    %v1530 = vpop.f32.mrb[0].mxu0
    %v1531 = vadd.f32 %v1146, %v1530
    %v1532 = vpop.f32.mrb[0].mxu0
    %1533 = vmatprep.mubr.f32.mxu0 %v264
    %1534 = vmatmul.mubr.f32.gmra.mrb[0].mxu0 %v263
    %v1535 = vpop.f32.mrb[0].mxu0
    %v1536 = vadd.f32 %v1151, %v1535
    %v1537 = vpop.f32.mrb[0].mxu0
    %1538 = vmatprep.mubr.f32.mxu0 %v266
    %1539 = vmatmul.mubr.f32.gmra.mrb[0].mxu0 %v265
    %v1540 = vpop.f32.mrb[0].mxu0
    %v1541 = vadd.f32 %v1156, %v1540
    %v1542 = vpop.f32.mrb[0].mxu0
    %1543 = vmatprep.mubr.f32.mxu0 %v268
    %1544 = vmatmul.mubr.f32.gmra.mrb[0].mxu0 %v267
    %v1545 = vpop.f32.mrb[0].mxu0
    %v1546 = vadd.f32 %v1161, %v1545
    %v1547 = vpop.f32.mrb[0].mxu0
    %1548 = vmatprep.mubr.f32.mxu0 %v270
    %1549 = vmatmul.mubr.f32.gmra.mrb[0].mxu0 %v269
    %v1550 = vpop.f32.mrb[0].mxu0
    %v1551 = vadd.f32 %v1166, %v1550
    %v1552 = vpop.f32.mrb[0].mxu0
    %1553 = vmatprep.mubr.f32.mxu0 %v272
    %1554 = vmatmul.mubr.f32.gmra.mrb[0].mxu0 %v271
    %v1555 = vpop.f32.mrb[0].mxu0
    %v1556 = vadd.f32 %v1171, %v1555
    %v1557 = vpop.f32.mrb[0].mxu0
    %1558 = vmatprep.mubr.f32.mxu0 %v274
    %1559 = vmatmul.mubr.f32.gmra.mrb[0].mxu0 %v273
    %v1560 = vpop.f32.mrb[0].mxu0
    %v1561 = vadd.f32 %v1176, %v1560
    %v1562 = vpop.f32.mrb[0].mxu0
    %1563 = vmatprep.mubr.f32.mxu0 %v276
    %1564 = vmatmul.mubr.f32.gmra.mrb[0].mxu0 %v275
    %v1565 = vpop.f32.mrb[0].mxu0
    %v1566 = vadd.f32 %v1181, %v1565
    %v1567 = vpop.f32.mrb[0].mxu0
    %1568 = vmatprep.mubr.f32.mxu0 %v278
    %1569 = vmatmul.mubr.f32.gmra.mrb[0].mxu0 %v277
    %v1570 = vpop.f32.mrb[0].mxu0
    %v1571 = vadd.f32 %v1186, %v1570
    %v1572 = vpop.f32.mrb[0].mxu0
    %1573 = vmatprep.mubr.f32.mxu0 %v280
    %1574 = vmatmul.mubr.f32.gmra.mrb[0].mxu0 %v279
    %v1575 = vpop.f32.mrb[0].mxu0
    %v1576 = vadd.f32 %v1191, %v1575
    %v1577 = vpop.f32.mrb[0].mxu0
    %1578 = vmatprep.mubr.f32.mxu0 %v282
    %1579 = vmatmul.mubr.f32.gmra.mrb[0].mxu0 %v281
    %v1580 = vpop.f32.mrb[0].mxu0
    %v1581 = vadd.f32 %v1196, %v1580
    %v1582 = vpop.f32.mrb[0].mxu0
    %1583 = vmatprep.mubr.f32.mxu0 %v284
    %1584 = vmatmul.mubr.f32.gmra.mrb[0].mxu0 %v283
    %v1585 = vpop.f32.mrb[0].mxu0
    %v1586 = vadd.f32 %v1201, %v1585
    %v1587 = vpop.f32.mrb[0].mxu0
    %1588 = vmatprep.mubr.f32.mxu0 %v286
    %1589 = vmatmul.mubr.f32.gmra.mrb[0].mxu0 %v285
    %v1590 = vpop.f32.mrb[0].mxu0
    %v1591 = vadd.f32 %v1206, %v1590
    %v1592 = vpop.f32.mrb[0].mxu0
    %1593 = vmatprep.mubr.f32.mxu0 %v288
    %1594 = vmatmul.mubr.f32.gmra.mrb[0].mxu0 %v287
    %v1595 = vpop.f32.mrb[0].mxu0
    %v1596 = vadd.f32 %v1211, %v1595
    %v1597 = vpop.f32.mrb[0].mxu0
    %1598 = vmatprep.mubr.f32.mxu0 %v290
    %1599 = vmatmul.mubr.f32.gmra.mrb[0].mxu0 %v289
    %v1600 = vpop.f32.mrb[0].mxu0
    %v1601 = vadd.f32 %v1216, %v1600
    %v1602 = vpop.f32.mrb[0].mxu0
    %1603 = vmatprep.mubr.f32.mxu0 %v292
    %1604 = vmatmul.mubr.f32.gmra.mrb[0].mxu0 %v291
    %v1605 = vpop.f32.mrb[0].mxu0
    %v1606 = vadd.f32 %v1221, %v1605
    %v1607 = vpop.f32.mrb[0].mxu0
    %1608 = vmatprep.mubr.f32.mxu0 %v294
    %1609 = vmatmul.mubr.f32.gmra.mrb[0].mxu0 %v293
    %v1610 = vpop.f32.mrb[0].mxu0
    %v1611 = vadd.f32 %v1226, %v1610
    %v1612 = vpop.f32.mrb[0].mxu0
    %1613 = vmatprep.mubr.f32.mxu0 %v296
    %1614 = vmatmul.mubr.f32.gmra.mrb[0].mxu0 %v295
    %v1615 = vpop.f32.mrb[0].mxu0
    %v1616 = vadd.f32 %v1231, %v1615
    %v1617 = vpop.f32.mrb[0].mxu0
    %1618 = vmatprep.mubr.f32.mxu0 %v298
    %1619 = vmatmul.mubr.f32.gmra.mrb[0].mxu0 %v297
    %v1620 = vpop.f32.mrb[0].mxu0
    %v1621 = vadd.f32 %v1236, %v1620
    %v1622 = vpop.f32.mrb[0].mxu0
    %1623 = vdwg.mxu0
    %v1624 = vmax.f32 %v1306, 0.0
    %v1625 = vmax.f32 %v1311, 0.0
    %v1626 = vmax.f32 %v1316, 0.0
    %v1627 = vmax.f32 %v1321, 0.0
    %v1628 = vmax.f32 %v1326, 0.0
    %v1629 = vmax.f32 %v1331, 0.0
    %v1630 = vmax.f32 %v1336, 0.0
    %v1631 = vmax.f32 %v1341, 0.0
    %v1632 = vmax.f32 %v1346, 0.0
    %v1633 = vmax.f32 %v1351, 0.0
    %v1634 = vmax.f32 %v1356, 0.0
    %v1635 = vmax.f32 %v1361, 0.0
    %v1636 = vmax.f32 %v1366, 0.0
    %v1637 = vmax.f32 %v1371, 0.0
    %v1638 = vmax.f32 %v1376, 0.0
    %v1639 = vmax.f32 %v1381, 0.0
    %v1640 = vmax.f32 %v1386, 0.0
    %v1641 = vmax.f32 %v1391, 0.0
    %v1642 = vmax.f32 %v1396, 0.0
    %v1643 = vmax.f32 %v1401, 0.0
    %v1644 = vmax.f32 %v1406, 0.0
    %v1645 = vmax.f32 %v1411, 0.0
    %v1646 = vmax.f32 %v1416, 0.0
    %v1647 = vmax.f32 %v1421, 0.0
    %v1648 = vmax.f32 %v1426, 0.0
    %v1649 = vmax.f32 %v1431, 0.0
    %v1650 = vmax.f32 %v1436, 0.0
    %v1651 = vmax.f32 %v1441, 0.0
    %v1652 = vmax.f32 %v1446, 0.0
    %v1653 = vmax.f32 %v1451, 0.0
    %v1654 = vmax.f32 %v1456, 0.0
    %v1655 = vmax.f32 %v1461, 0.0
    %v1656 = vmax.f32 %v1466, 0.0
    %v1657 = vmax.f32 %v1471, 0.0
    %v1658 = vmax.f32 %v1476, 0.0
    %v1659 = vmax.f32 %v1481, 0.0
    %v1660 = vmax.f32 %v1486, 0.0
    %v1661 = vmax.f32 %v1491, 0.0
    %v1662 = vmax.f32 %v1496, 0.0
    %v1663 = vmax.f32 %v1501, 0.0
    %v1664 = vmax.f32 %v1506, 0.0
    %v1665 = vmax.f32 %v1511, 0.0
    %v1666 = vmax.f32 %v1516, 0.0
    %v1667 = vmax.f32 %v1521, 0.0
    %v1668 = vmax.f32 %v1526, 0.0
    %v1669 = vmax.f32 %v1531, 0.0
    %v1670 = vmax.f32 %v1536, 0.0
    %v1671 = vmax.f32 %v1541, 0.0
    %v1672 = vmax.f32 %v1546, 0.0
    %v1673 = vmax.f32 %v1551, 0.0
    %v1674 = vmax.f32 %v1556, 0.0
    %v1675 = vmax.f32 %v1561, 0.0
    %v1676 = vmax.f32 %v1566, 0.0
    %v1677 = vmax.f32 %v1571, 0.0
    %v1678 = vmax.f32 %v1576, 0.0
    %v1679 = vmax.f32 %v1581, 0.0
    %v1680 = vmax.f32 %v1586, 0.0
    %v1681 = vmax.f32 %v1591, 0.0
    %v1682 = vmax.f32 %v1596, 0.0
    %v1683 = vmax.f32 %v1601, 0.0
    %v1684 = vmax.f32 %v1606, 0.0
    %v1685 = vmax.f32 %v1611, 0.0
    %v1686 = vmax.f32 %v1616, 0.0
    %v1687 = vmax.f32 %v1621, 0.0
    %1688 = vmatprep.subr.mxu0 0.0
    %1689 = vmatpush1.msra.mxu0 %v1624
    %1690 = vmatprep.subr.mxu0 0.0
    %1691 = vmatpush1.msra.mxu0 %v1625
    %1692 = vmatprep.subr.mxu0 0.0
    %1693 = vmatpush1.msra.mxu0 %v1626
    %1694 = vmatprep.subr.mxu0 0.0
    %1695 = vmatpush1.msra.mxu0 %v1627
    %1696 = vmatprep.subr.mxu0 0.0
    %1697 = vmatpush1.msra.mxu0 %v1628
    %1698 = vmatprep.subr.mxu0 0.0
    %1699 = vmatpush1.msra.mxu0 %v1629
    %1700 = vmatprep.subr.mxu0 0.0
    %1701 = vmatpush1.msra.mxu0 %v1630
    %1702 = vmatprep.subr.mxu0 0.0
    %1703 = vmatpush1.msra.mxu0 %v1631
    %1704 = vmatprep.subr.mxu0 0.0
    %1705 = vmatpush1.msra.mxu0 %v1632
    %1706 = vmatprep.subr.mxu0 0.0
    %1707 = vmatpush1.msra.mxu0 %v1633
    %1708 = vmatprep.subr.mxu0 0.0
    %1709 = vmatpush1.msra.mxu0 %v1634
    %1710 = vmatprep.subr.mxu0 0.0
    %1711 = vmatpush1.msra.mxu0 %v1635
    %1712 = vmatprep.subr.mxu0 0.0
    %1713 = vmatpush1.msra.mxu0 %v1636
    %1714 = vmatprep.subr.mxu0 0.0
    %1715 = vmatpush1.msra.mxu0 %v1637
    %1716 = vmatprep.subr.mxu0 0.0
    %1717 = vmatpush1.msra.mxu0 %v1638
    %1718 = vmatprep.subr.mxu0 0.0
    %1719 = vmatpush1.msra.mxu0 %v1639
    %1720 = vmatprep.subr.mxu0 0.0
    %1721 = vmatpush1.msra.mxu0 %v1640
    %1722 = vmatprep.subr.mxu0 0.0
    %1723 = vmatpush1.msra.mxu0 %v1641
    %1724 = vmatprep.subr.mxu0 0.0
    %1725 = vmatpush1.msra.mxu0 %v1642
    %1726 = vmatprep.subr.mxu0 0.0
    %1727 = vmatpush1.msra.mxu0 %v1643
    %1728 = vmatprep.subr.mxu0 0.0
    %1729 = vmatpush1.msra.mxu0 %v1644
    %1730 = vmatprep.subr.mxu0 0.0
    %1731 = vmatpush1.msra.mxu0 %v1645
    %1732 = vmatprep.subr.mxu0 0.0
    %1733 = vmatpush1.msra.mxu0 %v1646
    %1734 = vmatprep.subr.mxu0 0.0
    %1735 = vmatpush1.msra.mxu0 %v1647
    %1736 = vmatprep.subr.mxu0 0.0
    %1737 = vmatpush1.msra.mxu0 %v1648
    %1738 = vmatprep.subr.mxu0 0.0
    %1739 = vmatpush1.msra.mxu0 %v1649
    %1740 = vmatprep.subr.mxu0 0.0
    %1741 = vmatpush1.msra.mxu0 %v1650
    %1742 = vmatprep.subr.mxu0 0.0
    %1743 = vmatpush1.msra.mxu0 %v1651
    %1744 = vmatprep.subr.mxu0 0.0
    %1745 = vmatpush1.msra.mxu0 %v1652
    %1746 = vmatprep.subr.mxu0 0.0
    %1747 = vmatpush1.msra.mxu0 %v1653
    %1748 = vmatprep.subr.mxu0 0.0
    %1749 = vmatpush1.msra.mxu0 %v1654
    %1750 = vmatprep.subr.mxu0 0.0
    %1751 = vmatpush1.msra.mxu0 %v1655
    %1752 = vmatprep.mubr.f32.mxu0 %v364
    %1753 = vmatmul.mubr.f32.gmra.mrb[0].mxu0 %v363
    %v1754 = vpop.f32.mrb[0].mxu0
    %v1755 = vadd.f32 %v611, %v1754
    %v1756 = vpop.f32.mrb[0].mxu0
    %1757 = vmatprep.mubr.f32.mxu0 %v368
    %1758 = vmatmul.mubr.f32.gmra.mrb[0].mxu0 %v367
    %v1759 = vpop.f32.mrb[0].mxu0
    %v1760 = vadd.f32 %v616, %v1759
    %v1761 = vpop.f32.mrb[0].mxu0
    %1762 = vmatprep.mubr.f32.mxu0 %v372
    %1763 = vmatmul.mubr.f32.gmra.mrb[0].mxu0 %v371
    %v1764 = vpop.f32.mrb[0].mxu0
    %v1765 = vadd.f32 %v621, %v1764
    %v1766 = vpop.f32.mrb[0].mxu0
    %1767 = vmatprep.mubr.f32.mxu0 %v376
    %1768 = vmatmul.mubr.f32.gmra.mrb[0].mxu0 %v375
    %v1769 = vpop.f32.mrb[0].mxu0
    %v1770 = vadd.f32 %v626, %v1769
    %v1771 = vpop.f32.mrb[0].mxu0
    %1772 = vmatprep.mubr.f32.mxu0 %v380
    %1773 = vmatmul.mubr.f32.gmra.mrb[0].mxu0 %v379
    %v1774 = vpop.f32.mrb[0].mxu0
    %v1775 = vadd.f32 %v631, %v1774
    %v1776 = vpop.f32.mrb[0].mxu0
    %1777 = vmatprep.mubr.f32.mxu0 %v384
    %1778 = vmatmul.mubr.f32.gmra.mrb[0].mxu0 %v383
    %v1779 = vpop.f32.mrb[0].mxu0
    %v1780 = vadd.f32 %v636, %v1779
    %v1781 = vpop.f32.mrb[0].mxu0
    %1782 = vmatprep.mubr.f32.mxu0 %v388
    %1783 = vmatmul.mubr.f32.gmra.mrb[0].mxu0 %v387
    %v1784 = vpop.f32.mrb[0].mxu0
    %v1785 = vadd.f32 %v641, %v1784
    %v1786 = vpop.f32.mrb[0].mxu0
    %1787 = vmatprep.mubr.f32.mxu0 %v392
    %1788 = vmatmul.mubr.f32.gmra.mrb[0].mxu0 %v391
    %v1789 = vpop.f32.mrb[0].mxu0
    %v1790 = vadd.f32 %v646, %v1789
    %v1791 = vpop.f32.mrb[0].mxu0
    %1792 = vmatprep.mubr.f32.mxu0 %v396
    %1793 = vmatmul.mubr.f32.gmra.mrb[0].mxu0 %v395
    %v1794 = vpop.f32.mrb[0].mxu0
    %v1795 = vadd.f32 %v651, %v1794
    %v1796 = vpop.f32.mrb[0].mxu0
    %1797 = vmatprep.mubr.f32.mxu0 %v400
    %1798 = vmatmul.mubr.f32.gmra.mrb[0].mxu0 %v399
    %v1799 = vpop.f32.mrb[0].mxu0
    %v1800 = vadd.f32 %v656, %v1799
    %v1801 = vpop.f32.mrb[0].mxu0
    %1802 = vmatprep.mubr.f32.mxu0 %v404
    %1803 = vmatmul.mubr.f32.gmra.mrb[0].mxu0 %v403
    %v1804 = vpop.f32.mrb[0].mxu0
    %v1805 = vadd.f32 %v661, %v1804
    %v1806 = vpop.f32.mrb[0].mxu0
    %1807 = vmatprep.mubr.f32.mxu0 %v408
    %1808 = vmatmul.mubr.f32.gmra.mrb[0].mxu0 %v407
    %v1809 = vpop.f32.mrb[0].mxu0
    %v1810 = vadd.f32 %v666, %v1809
    %v1811 = vpop.f32.mrb[0].mxu0
    %1812 = vmatprep.mubr.f32.mxu0 %v412
    %1813 = vmatmul.mubr.f32.gmra.mrb[0].mxu0 %v411
    %v1814 = vpop.f32.mrb[0].mxu0
    %v1815 = vadd.f32 %v671, %v1814
    %v1816 = vpop.f32.mrb[0].mxu0
    %1817 = vmatprep.mubr.f32.mxu0 %v416
    %1818 = vmatmul.mubr.f32.gmra.mrb[0].mxu0 %v415
    %v1819 = vpop.f32.mrb[0].mxu0
    %v1820 = vadd.f32 %v676, %v1819
    %v1821 = vpop.f32.mrb[0].mxu0
    %1822 = vmatprep.mubr.f32.mxu0 %v420
    %1823 = vmatmul.mubr.f32.gmra.mrb[0].mxu0 %v419
    %v1824 = vpop.f32.mrb[0].mxu0
    %v1825 = vadd.f32 %v681, %v1824
    %v1826 = vpop.f32.mrb[0].mxu0
    %1827 = vmatprep.mubr.f32.mxu0 %v424
    %1828 = vmatmul.mubr.f32.gmra.mrb[0].mxu0 %v423
    %v1829 = vpop.f32.mrb[0].mxu0
    %v1830 = vadd.f32 %v686, %v1829
    %v1831 = vpop.f32.mrb[0].mxu0
    %1832 = vmatprep.mubr.f32.mxu0 %v428
    %1833 = vmatmul.mubr.f32.gmra.mrb[0].mxu0 %v427
    %v1834 = vpop.f32.mrb[0].mxu0
    %v1835 = vadd.f32 %v691, %v1834
    %v1836 = vpop.f32.mrb[0].mxu0
    %1837 = vmatprep.mubr.f32.mxu0 %v432
    %1838 = vmatmul.mubr.f32.gmra.mrb[0].mxu0 %v431
    %v1839 = vpop.f32.mrb[0].mxu0
    %v1840 = vadd.f32 %v696, %v1839
    %v1841 = vpop.f32.mrb[0].mxu0
    %1842 = vmatprep.mubr.f32.mxu0 %v436
    %1843 = vmatmul.mubr.f32.gmra.mrb[0].mxu0 %v435
    %v1844 = vpop.f32.mrb[0].mxu0
    %v1845 = vadd.f32 %v701, %v1844
    %v1846 = vpop.f32.mrb[0].mxu0
    %1847 = vmatprep.mubr.f32.mxu0 %v440
    %1848 = vmatmul.mubr.f32.gmra.mrb[0].mxu0 %v439
    %v1849 = vpop.f32.mrb[0].mxu0
    %v1850 = vadd.f32 %v706, %v1849
    %v1851 = vpop.f32.mrb[0].mxu0
    %1852 = vmatprep.mubr.f32.mxu0 %v444
    %1853 = vmatmul.mubr.f32.gmra.mrb[0].mxu0 %v443
    %v1854 = vpop.f32.mrb[0].mxu0
    %v1855 = vadd.f32 %v711, %v1854
    %v1856 = vpop.f32.mrb[0].mxu0
    %1857 = vmatprep.mubr.f32.mxu0 %v448
    %1858 = vmatmul.mubr.f32.gmra.mrb[0].mxu0 %v447
    %v1859 = vpop.f32.mrb[0].mxu0
    %v1860 = vadd.f32 %v716, %v1859
    %v1861 = vpop.f32.mrb[0].mxu0
    %1862 = vmatprep.mubr.f32.mxu0 %v452
    %1863 = vmatmul.mubr.f32.gmra.mrb[0].mxu0 %v451
    %v1864 = vpop.f32.mrb[0].mxu0
    %v1865 = vadd.f32 %v721, %v1864
    %v1866 = vpop.f32.mrb[0].mxu0
    %1867 = vmatprep.mubr.f32.mxu0 %v456
    %1868 = vmatmul.mubr.f32.gmra.mrb[0].mxu0 %v455
    %v1869 = vpop.f32.mrb[0].mxu0
    %v1870 = vadd.f32 %v726, %v1869
    %v1871 = vpop.f32.mrb[0].mxu0
    %1872 = vmatprep.mubr.f32.mxu0 %v460
    %1873 = vmatmul.mubr.f32.gmra.mrb[0].mxu0 %v459
    %v1874 = vpop.f32.mrb[0].mxu0
    %v1875 = vadd.f32 %v731, %v1874
    %v1876 = vpop.f32.mrb[0].mxu0
    %1877 = vmatprep.mubr.f32.mxu0 %v464
    %1878 = vmatmul.mubr.f32.gmra.mrb[0].mxu0 %v463
    %v1879 = vpop.f32.mrb[0].mxu0
    %v1880 = vadd.f32 %v736, %v1879
    %v1881 = vpop.f32.mrb[0].mxu0
    %1882 = vmatprep.mubr.f32.mxu0 %v468
    %1883 = vmatmul.mubr.f32.gmra.mrb[0].mxu0 %v467
    %v1884 = vpop.f32.mrb[0].mxu0
    %v1885 = vadd.f32 %v741, %v1884
    %v1886 = vpop.f32.mrb[0].mxu0
    %1887 = vmatprep.mubr.f32.mxu0 %v472
    %1888 = vmatmul.mubr.f32.gmra.mrb[0].mxu0 %v471
    %v1889 = vpop.f32.mrb[0].mxu0
    %v1890 = vadd.f32 %v746, %v1889
    %v1891 = vpop.f32.mrb[0].mxu0
    %1892 = vmatprep.mubr.f32.mxu0 %v476
    %1893 = vmatmul.mubr.f32.gmra.mrb[0].mxu0 %v475
    %v1894 = vpop.f32.mrb[0].mxu0
    %v1895 = vadd.f32 %v751, %v1894
    %v1896 = vpop.f32.mrb[0].mxu0
    %1897 = vmatprep.mubr.f32.mxu0 %v480
    %1898 = vmatmul.mubr.f32.gmra.mrb[0].mxu0 %v479
    %v1899 = vpop.f32.mrb[0].mxu0
    %v1900 = vadd.f32 %v756, %v1899
    %v1901 = vpop.f32.mrb[0].mxu0
    %1902 = vmatprep.mubr.f32.mxu0 %v484
    %1903 = vmatmul.mubr.f32.gmra.mrb[0].mxu0 %v483
    %v1904 = vpop.f32.mrb[0].mxu0
    %v1905 = vadd.f32 %v761, %v1904
    %v1906 = vpop.f32.mrb[0].mxu0
    %1907 = vmatprep.mubr.f32.mxu0 %v488
    %1908 = vmatmul.mubr.f32.gmra.mrb[0].mxu0 %v487
    %v1909 = vpop.f32.mrb[0].mxu0
    %v1910 = vadd.f32 %v766, %v1909
    %v1911 = vpop.f32.mrb[0].mxu0
    %1912 = vdwg.mxu0
    %1913 = vmatprep.subr.mxu0 0.0
    %1914 = vmatpush1.msra.mxu0 %v1656
    %1915 = vmatprep.subr.mxu0 0.0
    %1916 = vmatpush1.msra.mxu0 %v1657
    %1917 = vmatprep.subr.mxu0 0.0
    %1918 = vmatpush1.msra.mxu0 %v1658
    %1919 = vmatprep.subr.mxu0 0.0
    %1920 = vmatpush1.msra.mxu0 %v1659
    %1921 = vmatprep.subr.mxu0 0.0
    %1922 = vmatpush1.msra.mxu0 %v1660
    %1923 = vmatprep.subr.mxu0 0.0
    %1924 = vmatpush1.msra.mxu0 %v1661
    %1925 = vmatprep.subr.mxu0 0.0
    %1926 = vmatpush1.msra.mxu0 %v1662
    %1927 = vmatprep.subr.mxu0 0.0
    %1928 = vmatpush1.msra.mxu0 %v1663
    %1929 = vmatprep.subr.mxu0 0.0
    %1930 = vmatpush1.msra.mxu0 %v1664
    %1931 = vmatprep.subr.mxu0 0.0
    %1932 = vmatpush1.msra.mxu0 %v1665
    %1933 = vmatprep.subr.mxu0 0.0
    %1934 = vmatpush1.msra.mxu0 %v1666
    %1935 = vmatprep.subr.mxu0 0.0
    %1936 = vmatpush1.msra.mxu0 %v1667
    %1937 = vmatprep.subr.mxu0 0.0
    %1938 = vmatpush1.msra.mxu0 %v1668
    %1939 = vmatprep.subr.mxu0 0.0
    %1940 = vmatpush1.msra.mxu0 %v1669
    %1941 = vmatprep.subr.mxu0 0.0
    %1942 = vmatpush1.msra.mxu0 %v1670
    %1943 = vmatprep.subr.mxu0 0.0
    %1944 = vmatpush1.msra.mxu0 %v1671
    %1945 = vmatprep.subr.mxu0 0.0
    %1946 = vmatpush1.msra.mxu0 %v1672
    %1947 = vmatprep.subr.mxu0 0.0
    %1948 = vmatpush1.msra.mxu0 %v1673
    %1949 = vmatprep.subr.mxu0 0.0
    %1950 = vmatpush1.msra.mxu0 %v1674
    %1951 = vmatprep.subr.mxu0 0.0
    %1952 = vmatpush1.msra.mxu0 %v1675
    %1953 = vmatprep.subr.mxu0 0.0
    %1954 = vmatpush1.msra.mxu0 %v1676
    %1955 = vmatprep.subr.mxu0 0.0
    %1956 = vmatpush1.msra.mxu0 %v1677
    %1957 = vmatprep.subr.mxu0 0.0
    %1958 = vmatpush1.msra.mxu0 %v1678
    %1959 = vmatprep.subr.mxu0 0.0
    %1960 = vmatpush1.msra.mxu0 %v1679
    %1961 = vmatprep.subr.mxu0 0.0
    %1962 = vmatpush1.msra.mxu0 %v1680
    %1963 = vmatprep.subr.mxu0 0.0
    %1964 = vmatpush1.msra.mxu0 %v1681
    %1965 = vmatprep.subr.mxu0 0.0
    %1966 = vmatpush1.msra.mxu0 %v1682
    %1967 = vmatprep.subr.mxu0 0.0
    %1968 = vmatpush1.msra.mxu0 %v1683
    %1969 = vmatprep.subr.mxu0 0.0
    %1970 = vmatpush1.msra.mxu0 %v1684
    %1971 = vmatprep.subr.mxu0 0.0
    %1972 = vmatpush1.msra.mxu0 %v1685
    %1973 = vmatprep.subr.mxu0 0.0
    %1974 = vmatpush1.msra.mxu0 %v1686
    %1975 = vmatprep.subr.mxu0 0.0
    %1976 = vmatpush1.msra.mxu0 %v1687
    %1977 = vmatprep.mubr.f32.mxu0 %v366
    %1978 = vmatmul.mubr.f32.gmra.mrb[0].mxu0 %v365
    %v1979 = vpop.f32.mrb[0].mxu0
    %v1980 = vadd.f32 %v1755, %v1979
    %v1981 = vpop.f32.mrb[0].mxu0
    %1982 = vmatprep.mubr.f32.mxu0 %v370
    %1983 = vmatmul.mubr.f32.gmra.mrb[0].mxu0 %v369
    %v1984 = vpop.f32.mrb[0].mxu0
    %v1985 = vadd.f32 %v1760, %v1984
    %v1986 = vpop.f32.mrb[0].mxu0
    %1987 = vmatprep.mubr.f32.mxu0 %v374
    %1988 = vmatmul.mubr.f32.gmra.mrb[0].mxu0 %v373
    %v1989 = vpop.f32.mrb[0].mxu0
    %v1990 = vadd.f32 %v1765, %v1989
    %v1991 = vpop.f32.mrb[0].mxu0
    %1992 = vmatprep.mubr.f32.mxu0 %v378
    %1993 = vmatmul.mubr.f32.gmra.mrb[0].mxu0 %v377
    %v1994 = vpop.f32.mrb[0].mxu0
    %v1995 = vadd.f32 %v1770, %v1994
    %v1996 = vpop.f32.mrb[0].mxu0
    %1997 = vmatprep.mubr.f32.mxu0 %v382
    %1998 = vmatmul.mubr.f32.gmra.mrb[0].mxu0 %v381
    %v1999 = vpop.f32.mrb[0].mxu0
    %v2000 = vadd.f32 %v1775, %v1999
    %v2001 = vpop.f32.mrb[0].mxu0
    %2002 = vmatprep.mubr.f32.mxu0 %v386
    %2003 = vmatmul.mubr.f32.gmra.mrb[0].mxu0 %v385
    %v2004 = vpop.f32.mrb[0].mxu0
    %v2005 = vadd.f32 %v1780, %v2004
    %v2006 = vpop.f32.mrb[0].mxu0
    %2007 = vmatprep.mubr.f32.mxu0 %v390
    %2008 = vmatmul.mubr.f32.gmra.mrb[0].mxu0 %v389
    %v2009 = vpop.f32.mrb[0].mxu0
    %v2010 = vadd.f32 %v1785, %v2009
    %v2011 = vpop.f32.mrb[0].mxu0
    %2012 = vmatprep.mubr.f32.mxu0 %v394
    %2013 = vmatmul.mubr.f32.gmra.mrb[0].mxu0 %v393
    %v2014 = vpop.f32.mrb[0].mxu0
    %v2015 = vadd.f32 %v1790, %v2014
    %v2016 = vpop.f32.mrb[0].mxu0
    %2017 = vmatprep.mubr.f32.mxu0 %v398
    %2018 = vmatmul.mubr.f32.gmra.mrb[0].mxu0 %v397
    %v2019 = vpop.f32.mrb[0].mxu0
    %v2020 = vadd.f32 %v1795, %v2019
    %v2021 = vpop.f32.mrb[0].mxu0
    %2022 = vmatprep.mubr.f32.mxu0 %v402
    %2023 = vmatmul.mubr.f32.gmra.mrb[0].mxu0 %v401
    %v2024 = vpop.f32.mrb[0].mxu0
    %v2025 = vadd.f32 %v1800, %v2024
    %v2026 = vpop.f32.mrb[0].mxu0
    %2027 = vmatprep.mubr.f32.mxu0 %v406
    %2028 = vmatmul.mubr.f32.gmra.mrb[0].mxu0 %v405
    %v2029 = vpop.f32.mrb[0].mxu0
    %v2030 = vadd.f32 %v1805, %v2029
    %v2031 = vpop.f32.mrb[0].mxu0
    %2032 = vmatprep.mubr.f32.mxu0 %v410
    %2033 = vmatmul.mubr.f32.gmra.mrb[0].mxu0 %v409
    %v2034 = vpop.f32.mrb[0].mxu0
    %v2035 = vadd.f32 %v1810, %v2034
    %v2036 = vpop.f32.mrb[0].mxu0
    %2037 = vmatprep.mubr.f32.mxu0 %v414
    %2038 = vmatmul.mubr.f32.gmra.mrb[0].mxu0 %v413
    %v2039 = vpop.f32.mrb[0].mxu0
    %v2040 = vadd.f32 %v1815, %v2039
    %v2041 = vpop.f32.mrb[0].mxu0
    %2042 = vmatprep.mubr.f32.mxu0 %v418
    %2043 = vmatmul.mubr.f32.gmra.mrb[0].mxu0 %v417
    %v2044 = vpop.f32.mrb[0].mxu0
    %v2045 = vadd.f32 %v1820, %v2044
    %v2046 = vpop.f32.mrb[0].mxu0
    %2047 = vmatprep.mubr.f32.mxu0 %v422
    %2048 = vmatmul.mubr.f32.gmra.mrb[0].mxu0 %v421
    %v2049 = vpop.f32.mrb[0].mxu0
    %v2050 = vadd.f32 %v1825, %v2049
    %v2051 = vpop.f32.mrb[0].mxu0
    %2052 = vmatprep.mubr.f32.mxu0 %v426
    %2053 = vmatmul.mubr.f32.gmra.mrb[0].mxu0 %v425
    %v2054 = vpop.f32.mrb[0].mxu0
    %v2055 = vadd.f32 %v1830, %v2054
    %v2056 = vpop.f32.mrb[0].mxu0
    %2057 = vmatprep.mubr.f32.mxu0 %v430
    %2058 = vmatmul.mubr.f32.gmra.mrb[0].mxu0 %v429
    %v2059 = vpop.f32.mrb[0].mxu0
    %v2060 = vadd.f32 %v1835, %v2059
    %v2061 = vpop.f32.mrb[0].mxu0
    %2062 = vmatprep.mubr.f32.mxu0 %v434
    %2063 = vmatmul.mubr.f32.gmra.mrb[0].mxu0 %v433
    %v2064 = vpop.f32.mrb[0].mxu0
    %v2065 = vadd.f32 %v1840, %v2064
    %v2066 = vpop.f32.mrb[0].mxu0
    %2067 = vmatprep.mubr.f32.mxu0 %v438
    %2068 = vmatmul.mubr.f32.gmra.mrb[0].mxu0 %v437
    %v2069 = vpop.f32.mrb[0].mxu0
    %v2070 = vadd.f32 %v1845, %v2069
    %v2071 = vpop.f32.mrb[0].mxu0
    %2072 = vmatprep.mubr.f32.mxu0 %v442
    %2073 = vmatmul.mubr.f32.gmra.mrb[0].mxu0 %v441
    %v2074 = vpop.f32.mrb[0].mxu0
    %v2075 = vadd.f32 %v1850, %v2074
    %v2076 = vpop.f32.mrb[0].mxu0
    %2077 = vmatprep.mubr.f32.mxu0 %v446
    %2078 = vmatmul.mubr.f32.gmra.mrb[0].mxu0 %v445
    %v2079 = vpop.f32.mrb[0].mxu0
    %v2080 = vadd.f32 %v1855, %v2079
    %v2081 = vpop.f32.mrb[0].mxu0
    %2082 = vmatprep.mubr.f32.mxu0 %v450
    %2083 = vmatmul.mubr.f32.gmra.mrb[0].mxu0 %v449
    %v2084 = vpop.f32.mrb[0].mxu0
    %v2085 = vadd.f32 %v1860, %v2084
    %v2086 = vpop.f32.mrb[0].mxu0
    %2087 = vmatprep.mubr.f32.mxu0 %v454
    %2088 = vmatmul.mubr.f32.gmra.mrb[0].mxu0 %v453
    %v2089 = vpop.f32.mrb[0].mxu0
    %v2090 = vadd.f32 %v1865, %v2089
    %v2091 = vpop.f32.mrb[0].mxu0
    %2092 = vmatprep.mubr.f32.mxu0 %v458
    %2093 = vmatmul.mubr.f32.gmra.mrb[0].mxu0 %v457
    %v2094 = vpop.f32.mrb[0].mxu0
    %v2095 = vadd.f32 %v1870, %v2094
    %v2096 = vpop.f32.mrb[0].mxu0
    %2097 = vmatprep.mubr.f32.mxu0 %v462
    %2098 = vmatmul.mubr.f32.gmra.mrb[0].mxu0 %v461
    %v2099 = vpop.f32.mrb[0].mxu0
    %v2100 = vadd.f32 %v1875, %v2099
    %v2101 = vpop.f32.mrb[0].mxu0
    %2102 = vmatprep.mubr.f32.mxu0 %v466
    %2103 = vmatmul.mubr.f32.gmra.mrb[0].mxu0 %v465
    %v2104 = vpop.f32.mrb[0].mxu0
    %v2105 = vadd.f32 %v1880, %v2104
    %v2106 = vpop.f32.mrb[0].mxu0
    %2107 = vmatprep.mubr.f32.mxu0 %v470
    %2108 = vmatmul.mubr.f32.gmra.mrb[0].mxu0 %v469
    %v2109 = vpop.f32.mrb[0].mxu0
    %v2110 = vadd.f32 %v1885, %v2109
    %v2111 = vpop.f32.mrb[0].mxu0
    %2112 = vmatprep.mubr.f32.mxu0 %v474
    %2113 = vmatmul.mubr.f32.gmra.mrb[0].mxu0 %v473
    %v2114 = vpop.f32.mrb[0].mxu0
    %v2115 = vadd.f32 %v1890, %v2114
    %v2116 = vpop.f32.mrb[0].mxu0
    %2117 = vmatprep.mubr.f32.mxu0 %v478
    %2118 = vmatmul.mubr.f32.gmra.mrb[0].mxu0 %v477
    %v2119 = vpop.f32.mrb[0].mxu0
    %v2120 = vadd.f32 %v1895, %v2119
    %v2121 = vpop.f32.mrb[0].mxu0
    %2122 = vmatprep.mubr.f32.mxu0 %v482
    %2123 = vmatmul.mubr.f32.gmra.mrb[0].mxu0 %v481
    %v2124 = vpop.f32.mrb[0].mxu0
    %v2125 = vadd.f32 %v1900, %v2124
    %v2126 = vpop.f32.mrb[0].mxu0
    %2127 = vmatprep.mubr.f32.mxu0 %v486
    %2128 = vmatmul.mubr.f32.gmra.mrb[0].mxu0 %v485
    %v2129 = vpop.f32.mrb[0].mxu0
    %v2130 = vadd.f32 %v1905, %v2129
    %v2131 = vpop.f32.mrb[0].mxu0
    %2132 = vmatprep.mubr.f32.mxu0 %v490
    %2133 = vmatmul.mubr.f32.gmra.mrb[0].mxu0 %v489
    %v2134 = vpop.f32.mrb[0].mxu0
    %v2135 = vadd.f32 %v1910, %v2134
    %v2136 = vpop.f32.mrb[0].mxu0
    %2137 = vdwg.mxu0
    %v2138 = vld [vmem:[#allocation11 + $0x100] sm:$0xff]
    %v2139 = vld [vmem:[#allocation11 + $0x108] sm:$0xff]
    %v2140 = vld [vmem:[#allocation11 + $0x110] sm:$0xff]
    %v2141 = vld [vmem:[#allocation11 + $0x118] sm:$0xff]
    %v2142 = vld [vmem:[#allocation11 + $0x120] sm:$0xff]
    %v2143 = vld [vmem:[#allocation11 + $0x128] sm:$0xff]
    %v2144 = vld [vmem:[#allocation11 + $0x130] sm:$0xff]
    %v2145 = vld [vmem:[#allocation11 + $0x138] sm:$0xff]
    %v2146 = vld [vmem:[#allocation11 + $0x140] sm:$0xff]
    %v2147 = vld [vmem:[#allocation11 + $0x148] sm:$0xff]
    %v2148 = vld [vmem:[#allocation11 + $0x150] sm:$0xff]
    %v2149 = vld [vmem:[#allocation11 + $0x158] sm:$0xff]
    %v2150 = vld [vmem:[#allocation11 + $0x160] sm:$0xff]
    %v2151 = vld [vmem:[#allocation11 + $0x168] sm:$0xff]
    %v2152 = vld [vmem:[#allocation11 + $0x170] sm:$0xff]
    %v2153 = vld [vmem:[#allocation11 + $0x178] sm:$0xff]
    %v2154 = vld [vmem:[%s6 + $0x2] sm:$0x1]
    %v2155 = vlaneseq
    %v2156 = vshrl.u32 %v2155, 7
    %v2157 = vsub.s32 0, %v2156
    %v2158 = vrot.slane %v2154, %v2157
    %2159 = vmatprep.subr.mxu0 0.0
    %2160 = vmatpush1.msra.mxu0 %v2138
    %2161 = vmatprep.subr.mxu0 0.0
    %2162 = vmatpush1.msra.mxu0 %v2139
    %2163 = vmatprep.subr.mxu0 0.0
    %2164 = vmatpush1.msra.mxu0 %v2140
    %2165 = vmatprep.subr.mxu0 0.0
    %2166 = vmatpush1.msra.mxu0 %v2141
    %2167 = vmatprep.subr.mxu0 0.0
    %2168 = vmatpush1.msra.mxu0 %v2142
    %2169 = vmatprep.subr.mxu0 0.0
    %2170 = vmatpush1.msra.mxu0 %v2143
    %2171 = vmatprep.subr.mxu0 0.0
    %2172 = vmatpush1.msra.mxu0 %v2144
    %2173 = vmatprep.subr.mxu0 0.0
    %2174 = vmatpush1.msra.mxu0 %v2145
    %2175 = vmatprep.subr.mxu0 0.0
    %2176 = vmatpush1.msra.mxu0 %v2146
    %2177 = vmatprep.subr.mxu0 0.0
    %2178 = vmatpush1.msra.mxu0 %v2147
    %2179 = vmatprep.subr.mxu0 0.0
    %2180 = vmatpush1.msra.mxu0 %v2148
    %2181 = vmatprep.subr.mxu0 0.0
    %2182 = vmatpush1.msra.mxu0 %v2149
    %2183 = vmatprep.subr.mxu0 0.0
    %2184 = vmatpush1.msra.mxu0 %v2150
    %2185 = vmatprep.subr.mxu0 0.0
    %2186 = vmatpush1.msra.mxu0 %v2151
    %2187 = vmatprep.subr.mxu0 0.0
    %2188 = vmatpush1.msra.mxu0 %v2152
    %2189 = vmatprep.subr.mxu0 0.0
    %2190 = vmatpush1.msra.mxu0 %v2153
    %2191 = vmatprep.subr.mxu0 0.0
    %2192 = vmatpush1.msra.mxu0 0.0
    %2193 = vmatprep.subr.mxu0 0.0
    %2194 = vmatpush1.msra.mxu0 0.0
    %2195 = vmatprep.subr.mxu0 0.0
    %2196 = vmatpush1.msra.mxu0 0.0
    %2197 = vmatprep.subr.mxu0 0.0
    %2198 = vmatpush1.msra.mxu0 0.0
    %2199 = vmatprep.subr.mxu0 0.0
    %2200 = vmatpush1.msra.mxu0 0.0
    %2201 = vmatprep.subr.mxu0 0.0
    %2202 = vmatpush1.msra.mxu0 0.0
    %2203 = vmatprep.subr.mxu0 0.0
    %2204 = vmatpush1.msra.mxu0 0.0
    %2205 = vmatprep.subr.mxu0 0.0
    %2206 = vmatpush1.msra.mxu0 0.0
    %2207 = vmatprep.subr.mxu0 0.0
    %2208 = vmatpush1.msra.mxu0 0.0
    %2209 = vmatprep.subr.mxu0 0.0
    %2210 = vmatpush1.msra.mxu0 0.0
    %2211 = vmatprep.subr.mxu0 0.0
    %2212 = vmatpush1.msra.mxu0 0.0
    %2213 = vmatprep.subr.mxu0 0.0
    %2214 = vmatpush1.msra.mxu0 0.0
    %2215 = vmatprep.subr.mxu0 0.0
    %2216 = vmatpush1.msra.mxu0 0.0
    %2217 = vmatprep.subr.mxu0 0.0
    %2218 = vmatpush1.msra.mxu0 0.0
    %2219 = vmatprep.subr.mxu0 0.0
    %2220 = vmatpush1.msra.mxu0 0.0
    %2221 = vmatprep.subr.mxu0 0.0
    %2222 = vmatpush1.msra.mxu0 0.0
    %2223 = vmatprep.mubr.f32.mxu0 0.0
    %2224 = vmatmul.mubr.f32.gmra.mrb[0].mxu0 %v1980
    %v2225 = vpop.f32.mrb[0].mxu0
    %v2226 = vadd.f32 %v2158, %v2225
    %v2227 = vpop.f32.mrb[0].mxu0
    %2228 = vmatprep.mubr.f32.mxu0 0.0
    %2229 = vmatmul.mubr.f32.gmra.mrb[0].mxu0 %v1985
    %v2230 = vpop.f32.mrb[0].mxu0
    %v2231 = vadd.f32 %v2158, %v2230
    %v2232 = vpop.f32.mrb[0].mxu0
    %2233 = vmatprep.mubr.f32.mxu0 0.0
    %2234 = vmatmul.mubr.f32.gmra.mrb[0].mxu0 %v1990
    %v2235 = vpop.f32.mrb[0].mxu0
    %v2236 = vadd.f32 %v2158, %v2235
    %v2237 = vpop.f32.mrb[0].mxu0
    %2238 = vmatprep.mubr.f32.mxu0 0.0
    %2239 = vmatmul.mubr.f32.gmra.mrb[0].mxu0 %v1995
    %v2240 = vpop.f32.mrb[0].mxu0
    %v2241 = vadd.f32 %v2158, %v2240
    %v2242 = vpop.f32.mrb[0].mxu0
    %2243 = vmatprep.mubr.f32.mxu0 0.0
    %2244 = vmatmul.mubr.f32.gmra.mrb[0].mxu0 %v2000
    %v2245 = vpop.f32.mrb[0].mxu0
    %v2246 = vadd.f32 %v2158, %v2245
    %v2247 = vpop.f32.mrb[0].mxu0
    %2248 = vmatprep.mubr.f32.mxu0 0.0
    %2249 = vmatmul.mubr.f32.gmra.mrb[0].mxu0 %v2005
    %v2250 = vpop.f32.mrb[0].mxu0
    %v2251 = vadd.f32 %v2158, %v2250
    %v2252 = vpop.f32.mrb[0].mxu0
    %2253 = vmatprep.mubr.f32.mxu0 0.0
    %2254 = vmatmul.mubr.f32.gmra.mrb[0].mxu0 %v2010
    %v2255 = vpop.f32.mrb[0].mxu0
    %v2256 = vadd.f32 %v2158, %v2255
    %v2257 = vpop.f32.mrb[0].mxu0
    %2258 = vmatprep.mubr.f32.mxu0 0.0
    %2259 = vmatmul.mubr.f32.gmra.mrb[0].mxu0 %v2015
    %v2260 = vpop.f32.mrb[0].mxu0
    %v2261 = vadd.f32 %v2158, %v2260
    %v2262 = vpop.f32.mrb[0].mxu0
    %2263 = vmatprep.mubr.f32.mxu0 0.0
    %2264 = vmatmul.mubr.f32.gmra.mrb[0].mxu0 %v2020
    %v2265 = vpop.f32.mrb[0].mxu0
    %v2266 = vadd.f32 %v2158, %v2265
    %v2267 = vpop.f32.mrb[0].mxu0
    %2268 = vmatprep.mubr.f32.mxu0 0.0
    %2269 = vmatmul.mubr.f32.gmra.mrb[0].mxu0 %v2025
    %v2270 = vpop.f32.mrb[0].mxu0
    %v2271 = vadd.f32 %v2158, %v2270
    %v2272 = vpop.f32.mrb[0].mxu0
    %2273 = vmatprep.mubr.f32.mxu0 0.0
    %2274 = vmatmul.mubr.f32.gmra.mrb[0].mxu0 %v2030
    %v2275 = vpop.f32.mrb[0].mxu0
    %v2276 = vadd.f32 %v2158, %v2275
    %v2277 = vpop.f32.mrb[0].mxu0
    %2278 = vmatprep.mubr.f32.mxu0 0.0
    %2279 = vmatmul.mubr.f32.gmra.mrb[0].mxu0 %v2035
    %v2280 = vpop.f32.mrb[0].mxu0
    %v2281 = vadd.f32 %v2158, %v2280
    %v2282 = vpop.f32.mrb[0].mxu0
    %2283 = vmatprep.mubr.f32.mxu0 0.0
    %2284 = vmatmul.mubr.f32.gmra.mrb[0].mxu0 %v2040
    %v2285 = vpop.f32.mrb[0].mxu0
    %v2286 = vadd.f32 %v2158, %v2285
    %v2287 = vpop.f32.mrb[0].mxu0
    %2288 = vmatprep.mubr.f32.mxu0 0.0
    %2289 = vmatmul.mubr.f32.gmra.mrb[0].mxu0 %v2045
    %v2290 = vpop.f32.mrb[0].mxu0
    %v2291 = vadd.f32 %v2158, %v2290
    %v2292 = vpop.f32.mrb[0].mxu0
    %2293 = vmatprep.mubr.f32.mxu0 0.0
    %2294 = vmatmul.mubr.f32.gmra.mrb[0].mxu0 %v2050
    %v2295 = vpop.f32.mrb[0].mxu0
    %v2296 = vadd.f32 %v2158, %v2295
    %v2297 = vpop.f32.mrb[0].mxu0
    %2298 = vmatprep.mubr.f32.mxu0 0.0
    %2299 = vmatmul.mubr.f32.gmra.mrb[0].mxu0 %v2055
    %v2300 = vpop.f32.mrb[0].mxu0
    %v2301 = vadd.f32 %v2158, %v2300
    %v2302 = vpop.f32.mrb[0].mxu0
    %2303 = vmatprep.mubr.f32.mxu0 0.0
    %2304 = vmatmul.mubr.f32.gmra.mrb[0].mxu0 %v2060
    %v2305 = vpop.f32.mrb[0].mxu0
    %v2306 = vadd.f32 %v2158, %v2305
    %v2307 = vpop.f32.mrb[0].mxu0
    %2308 = vmatprep.mubr.f32.mxu0 0.0
    %2309 = vmatmul.mubr.f32.gmra.mrb[0].mxu0 %v2065
    %v2310 = vpop.f32.mrb[0].mxu0
    %v2311 = vadd.f32 %v2158, %v2310
    %v2312 = vpop.f32.mrb[0].mxu0
    %2313 = vmatprep.mubr.f32.mxu0 0.0
    %2314 = vmatmul.mubr.f32.gmra.mrb[0].mxu0 %v2070
    %v2315 = vpop.f32.mrb[0].mxu0
    %v2316 = vadd.f32 %v2158, %v2315
    %v2317 = vpop.f32.mrb[0].mxu0
    %2318 = vmatprep.mubr.f32.mxu0 0.0
    %2319 = vmatmul.mubr.f32.gmra.mrb[0].mxu0 %v2075
    %v2320 = vpop.f32.mrb[0].mxu0
    %v2321 = vadd.f32 %v2158, %v2320
    %v2322 = vpop.f32.mrb[0].mxu0
    %2323 = vmatprep.mubr.f32.mxu0 0.0
    %2324 = vmatmul.mubr.f32.gmra.mrb[0].mxu0 %v2080
    %v2325 = vpop.f32.mrb[0].mxu0
    %v2326 = vadd.f32 %v2158, %v2325
    %v2327 = vpop.f32.mrb[0].mxu0
    %2328 = vmatprep.mubr.f32.mxu0 0.0
    %2329 = vmatmul.mubr.f32.gmra.mrb[0].mxu0 %v2085
    %v2330 = vpop.f32.mrb[0].mxu0
    %v2331 = vadd.f32 %v2158, %v2330
    %v2332 = vpop.f32.mrb[0].mxu0
    %2333 = vmatprep.mubr.f32.mxu0 0.0
    %2334 = vmatmul.mubr.f32.gmra.mrb[0].mxu0 %v2090
    %v2335 = vpop.f32.mrb[0].mxu0
    %v2336 = vadd.f32 %v2158, %v2335
    %v2337 = vpop.f32.mrb[0].mxu0
    %2338 = vmatprep.mubr.f32.mxu0 0.0
    %2339 = vmatmul.mubr.f32.gmra.mrb[0].mxu0 %v2095
    %v2340 = vpop.f32.mrb[0].mxu0
    %v2341 = vadd.f32 %v2158, %v2340
    %v2342 = vpop.f32.mrb[0].mxu0
    %2343 = vmatprep.mubr.f32.mxu0 0.0
    %2344 = vmatmul.mubr.f32.gmra.mrb[0].mxu0 %v2100
    %v2345 = vpop.f32.mrb[0].mxu0
    %v2346 = vadd.f32 %v2158, %v2345
    %v2347 = vpop.f32.mrb[0].mxu0
    %2348 = vmatprep.mubr.f32.mxu0 0.0
    %2349 = vmatmul.mubr.f32.gmra.mrb[0].mxu0 %v2105
    %v2350 = vpop.f32.mrb[0].mxu0
    %v2351 = vadd.f32 %v2158, %v2350
    %v2352 = vpop.f32.mrb[0].mxu0
    %2353 = vmatprep.mubr.f32.mxu0 0.0
    %2354 = vmatmul.mubr.f32.gmra.mrb[0].mxu0 %v2110
    %v2355 = vpop.f32.mrb[0].mxu0
    %v2356 = vadd.f32 %v2158, %v2355
    %v2357 = vpop.f32.mrb[0].mxu0
    %2358 = vmatprep.mubr.f32.mxu0 0.0
    %2359 = vmatmul.mubr.f32.gmra.mrb[0].mxu0 %v2115
    %v2360 = vpop.f32.mrb[0].mxu0
    %v2361 = vadd.f32 %v2158, %v2360
    %v2362 = vpop.f32.mrb[0].mxu0
    %2363 = vmatprep.mubr.f32.mxu0 0.0
    %2364 = vmatmul.mubr.f32.gmra.mrb[0].mxu0 %v2120
    %v2365 = vpop.f32.mrb[0].mxu0
    %v2366 = vadd.f32 %v2158, %v2365
    %v2367 = vpop.f32.mrb[0].mxu0
    %2368 = vmatprep.mubr.f32.mxu0 0.0
    %2369 = vmatmul.mubr.f32.gmra.mrb[0].mxu0 %v2125
    %v2370 = vpop.f32.mrb[0].mxu0
    %v2371 = vadd.f32 %v2158, %v2370
    %v2372 = vpop.f32.mrb[0].mxu0
    %2373 = vmatprep.mubr.f32.mxu0 0.0
    %2374 = vmatmul.mubr.f32.gmra.mrb[0].mxu0 %v2130
    %v2375 = vpop.f32.mrb[0].mxu0
    %v2376 = vadd.f32 %v2158, %v2375
    %v2377 = vpop.f32.mrb[0].mxu0
    %2378 = vmatprep.mubr.f32.mxu0 0.0
    %2379 = vmatmul.mubr.f32.gmra.mrb[0].mxu0 %v2135
    %v2380 = vpop.f32.mrb[0].mxu0
    %v2381 = vadd.f32 %v2158, %v2380
    %v2382 = vpop.f32.mrb[0].mxu0
    %2383 = vdwg.mxu0
    %v2384 = vmax.f32 %v2226, 0.0
    %v2385 = vmax.f32 %v2231, 0.0
    %v2386 = vmax.f32 %v2236, 0.0
    %v2387 = vmax.f32 %v2241, 0.0
    %v2388 = vmax.f32 %v2246, 0.0
    %v2389 = vmax.f32 %v2251, 0.0
    %v2390 = vmax.f32 %v2256, 0.0
    %v2391 = vmax.f32 %v2261, 0.0
    %v2392 = vmax.f32 %v2266, 0.0
    %v2393 = vmax.f32 %v2271, 0.0
    %v2394 = vmax.f32 %v2276, 0.0
    %v2395 = vmax.f32 %v2281, 0.0
    %v2396 = vmax.f32 %v2286, 0.0
    %v2397 = vmax.f32 %v2291, 0.0
    %v2398 = vmax.f32 %v2296, 0.0
    %v2399 = vmax.f32 %v2301, 0.0
    %v2400 = vmax.f32 %v2306, 0.0
    %v2401 = vmax.f32 %v2311, 0.0
    %v2402 = vmax.f32 %v2316, 0.0
    %v2403 = vmax.f32 %v2321, 0.0
    %v2404 = vmax.f32 %v2326, 0.0
    %v2405 = vmax.f32 %v2331, 0.0
    %v2406 = vmax.f32 %v2336, 0.0
    %v2407 = vmax.f32 %v2341, 0.0
    %v2408 = vmax.f32 %v2346, 0.0
    %v2409 = vmax.f32 %v2351, 0.0
    %v2410 = vmax.f32 %v2356, 0.0
    %v2411 = vmax.f32 %v2361, 0.0
    %v2412 = vmax.f32 %v2366, 0.0
    %v2413 = vmax.f32 %v2371, 0.0
    %v2414 = vmax.f32 %v2376, 0.0
    %v2415 = vmax.f32 %v2381, 0.0
    %v2416 = vld [vmem:[#allocation11 + $0x180] sm:$0xff]
    %v2417 = vld [vmem:[#allocation11 + $0x188] sm:$0xff]
    %v2418 = vld [vmem:[#allocation11 + $0x190] sm:$0xff]
    %v2419 = vld [vmem:[#allocation11 + $0x198] sm:$0xff]
    %v2420 = vld [vmem:[#allocation11 + $0x1a0] sm:$0xff]
    %v2421 = vld [vmem:[#allocation11 + $0x1a8] sm:$0xff]
    %v2422 = vld [vmem:[#allocation11 + $0x1b0] sm:$0xff]
    %v2423 = vld [vmem:[#allocation11 + $0x1b8] sm:$0xff]
    %v2424 = vld [vmem:[#allocation11 + $0x1c0] sm:$0xff]
    %v2425 = vld [vmem:[#allocation11 + $0x1c8] sm:$0xff]
    %v2426 = vld [vmem:[#allocation11 + $0x1d0] sm:$0xff]
    %v2427 = vld [vmem:[#allocation11 + $0x1d8] sm:$0xff]
    %v2428 = vld [vmem:[#allocation11 + $0x1e0] sm:$0xff]
    %v2429 = vld [vmem:[#allocation11 + $0x1e8] sm:$0xff]
    %v2430 = vld [vmem:[#allocation11 + $0x1f0] sm:$0xff]
    %v2431 = vld [vmem:[#allocation11 + $0x1f8] sm:$0xff]
    %v2432 = vld [vmem:[%s6 + $0x3] sm:$0x1]
    %v2433 = vlaneseq
    %v2434 = vshrl.u32 %v2433, 7
    %v2435 = vsub.s32 0, %v2434
    %v2436 = vrot.slane %v2432, %v2435
    %2437 = vmatprep.subr.mxu0 0.0
    %2438 = vmatpush1.msra.mxu0 %v2416
    %2439 = vmatprep.subr.mxu0 0.0
    %2440 = vmatpush1.msra.mxu0 %v2417
    %2441 = vmatprep.subr.mxu0 0.0
    %2442 = vmatpush1.msra.mxu0 %v2418
    %2443 = vmatprep.subr.mxu0 0.0
    %2444 = vmatpush1.msra.mxu0 %v2419
    %2445 = vmatprep.subr.mxu0 0.0
    %2446 = vmatpush1.msra.mxu0 %v2420
    %2447 = vmatprep.subr.mxu0 0.0
    %2448 = vmatpush1.msra.mxu0 %v2421
    %2449 = vmatprep.subr.mxu0 0.0
    %2450 = vmatpush1.msra.mxu0 %v2422
    %2451 = vmatprep.subr.mxu0 0.0
    %2452 = vmatpush1.msra.mxu0 %v2423
    %2453 = vmatprep.subr.mxu0 0.0
    %2454 = vmatpush1.msra.mxu0 %v2424
    %2455 = vmatprep.subr.mxu0 0.0
    %2456 = vmatpush1.msra.mxu0 %v2425
    %2457 = vmatprep.subr.mxu0 0.0
    %2458 = vmatpush1.msra.mxu0 %v2426
    %2459 = vmatprep.subr.mxu0 0.0
    %2460 = vmatpush1.msra.mxu0 %v2427
    %2461 = vmatprep.subr.mxu0 0.0
    %2462 = vmatpush1.msra.mxu0 %v2428
    %2463 = vmatprep.subr.mxu0 0.0
    %2464 = vmatpush1.msra.mxu0 %v2429
    %2465 = vmatprep.subr.mxu0 0.0
    %2466 = vmatpush1.msra.mxu0 %v2430
    %2467 = vmatprep.subr.mxu0 0.0
    %2468 = vmatpush1.msra.mxu0 %v2431
    %2469 = vmatprep.subr.mxu0 0.0
    %2470 = vmatpush1.msra.mxu0 0.0
    %2471 = vmatprep.subr.mxu0 0.0
    %2472 = vmatpush1.msra.mxu0 0.0
    %2473 = vmatprep.subr.mxu0 0.0
    %2474 = vmatpush1.msra.mxu0 0.0
    %2475 = vmatprep.subr.mxu0 0.0
    %2476 = vmatpush1.msra.mxu0 0.0
    %2477 = vmatprep.subr.mxu0 0.0
    %2478 = vmatpush1.msra.mxu0 0.0
    %2479 = vmatprep.subr.mxu0 0.0
    %2480 = vmatpush1.msra.mxu0 0.0
    %2481 = vmatprep.subr.mxu0 0.0
    %2482 = vmatpush1.msra.mxu0 0.0
    %2483 = vmatprep.subr.mxu0 0.0
    %2484 = vmatpush1.msra.mxu0 0.0
    %2485 = vmatprep.subr.mxu0 0.0
    %2486 = vmatpush1.msra.mxu0 0.0
    %2487 = vmatprep.subr.mxu0 0.0
    %2488 = vmatpush1.msra.mxu0 0.0
    %2489 = vmatprep.subr.mxu0 0.0
    %2490 = vmatpush1.msra.mxu0 0.0
    %2491 = vmatprep.subr.mxu0 0.0
    %2492 = vmatpush1.msra.mxu0 0.0
    %2493 = vmatprep.subr.mxu0 0.0
    %2494 = vmatpush1.msra.mxu0 0.0
    %2495 = vmatprep.subr.mxu0 0.0
    %2496 = vmatpush1.msra.mxu0 0.0
    %2497 = vmatprep.subr.mxu0 0.0
    %2498 = vmatpush1.msra.mxu0 0.0
    %2499 = vmatprep.subr.mxu0 0.0
    %2500 = vmatpush1.msra.mxu0 0.0
    %2501 = vmatprep.mubr.f32.mxu0 0.0
    %2502 = vmatmul.mubr.f32.gmra.mrb[0].mxu0 %v2384
    %v2503 = vpop.f32.mrb[0].mxu0
    %v2504 = vadd.f32 %v2436, %v2503
    %v2505 = vpop.f32.mrb[0].mxu0
    %2506 = vmatprep.mubr.f32.mxu0 0.0
    %2507 = vmatmul.mubr.f32.gmra.mrb[0].mxu0 %v2385
    %v2508 = vpop.f32.mrb[0].mxu0
    %v2509 = vadd.f32 %v2436, %v2508
    %v2510 = vpop.f32.mrb[0].mxu0
    %2511 = vmatprep.mubr.f32.mxu0 0.0
    %2512 = vmatmul.mubr.f32.gmra.mrb[0].mxu0 %v2386
    %v2513 = vpop.f32.mrb[0].mxu0
    %v2514 = vadd.f32 %v2436, %v2513
    %v2515 = vpop.f32.mrb[0].mxu0
    %2516 = vmatprep.mubr.f32.mxu0 0.0
    %2517 = vmatmul.mubr.f32.gmra.mrb[0].mxu0 %v2387
    %v2518 = vpop.f32.mrb[0].mxu0
    %v2519 = vadd.f32 %v2436, %v2518
    %v2520 = vpop.f32.mrb[0].mxu0
    %2521 = vmatprep.mubr.f32.mxu0 0.0
    %2522 = vmatmul.mubr.f32.gmra.mrb[0].mxu0 %v2388
    %v2523 = vpop.f32.mrb[0].mxu0
    %v2524 = vadd.f32 %v2436, %v2523
    %v2525 = vpop.f32.mrb[0].mxu0
    %2526 = vmatprep.mubr.f32.mxu0 0.0
    %2527 = vmatmul.mubr.f32.gmra.mrb[0].mxu0 %v2389
    %v2528 = vpop.f32.mrb[0].mxu0
    %v2529 = vadd.f32 %v2436, %v2528
    %v2530 = vpop.f32.mrb[0].mxu0
    %2531 = vmatprep.mubr.f32.mxu0 0.0
    %2532 = vmatmul.mubr.f32.gmra.mrb[0].mxu0 %v2390
    %v2533 = vpop.f32.mrb[0].mxu0
    %v2534 = vadd.f32 %v2436, %v2533
    %v2535 = vpop.f32.mrb[0].mxu0
    %2536 = vmatprep.mubr.f32.mxu0 0.0
    %2537 = vmatmul.mubr.f32.gmra.mrb[0].mxu0 %v2391
    %v2538 = vpop.f32.mrb[0].mxu0
    %v2539 = vadd.f32 %v2436, %v2538
    %v2540 = vpop.f32.mrb[0].mxu0
    %2541 = vmatprep.mubr.f32.mxu0 0.0
    %2542 = vmatmul.mubr.f32.gmra.mrb[0].mxu0 %v2392
    %v2543 = vpop.f32.mrb[0].mxu0
    %v2544 = vadd.f32 %v2436, %v2543
    %v2545 = vpop.f32.mrb[0].mxu0
    %2546 = vmatprep.mubr.f32.mxu0 0.0
    %2547 = vmatmul.mubr.f32.gmra.mrb[0].mxu0 %v2393
    %v2548 = vpop.f32.mrb[0].mxu0
    %v2549 = vadd.f32 %v2436, %v2548
    %v2550 = vpop.f32.mrb[0].mxu0
    %2551 = vmatprep.mubr.f32.mxu0 0.0
    %2552 = vmatmul.mubr.f32.gmra.mrb[0].mxu0 %v2394
    %v2553 = vpop.f32.mrb[0].mxu0
    %v2554 = vadd.f32 %v2436, %v2553
    %v2555 = vpop.f32.mrb[0].mxu0
    %2556 = vmatprep.mubr.f32.mxu0 0.0
    %2557 = vmatmul.mubr.f32.gmra.mrb[0].mxu0 %v2395
    %v2558 = vpop.f32.mrb[0].mxu0
    %v2559 = vadd.f32 %v2436, %v2558
    %v2560 = vpop.f32.mrb[0].mxu0
    %2561 = vmatprep.mubr.f32.mxu0 0.0
    %2562 = vmatmul.mubr.f32.gmra.mrb[0].mxu0 %v2396
    %v2563 = vpop.f32.mrb[0].mxu0
    %v2564 = vadd.f32 %v2436, %v2563
    %v2565 = vpop.f32.mrb[0].mxu0
    %2566 = vmatprep.mubr.f32.mxu0 0.0
    %2567 = vmatmul.mubr.f32.gmra.mrb[0].mxu0 %v2397
    %v2568 = vpop.f32.mrb[0].mxu0
    %v2569 = vadd.f32 %v2436, %v2568
    %v2570 = vpop.f32.mrb[0].mxu0
    %2571 = vmatprep.mubr.f32.mxu0 0.0
    %2572 = vmatmul.mubr.f32.gmra.mrb[0].mxu0 %v2398
    %v2573 = vpop.f32.mrb[0].mxu0
    %v2574 = vadd.f32 %v2436, %v2573
    %v2575 = vpop.f32.mrb[0].mxu0
    %2576 = vmatprep.mubr.f32.mxu0 0.0
    %2577 = vmatmul.mubr.f32.gmra.mrb[0].mxu0 %v2399
    %v2578 = vpop.f32.mrb[0].mxu0
    %v2579 = vadd.f32 %v2436, %v2578
    %v2580 = vpop.f32.mrb[0].mxu0
    %2581 = vmatprep.mubr.f32.mxu0 0.0
    %2582 = vmatmul.mubr.f32.gmra.mrb[0].mxu0 %v2400
    %v2583 = vpop.f32.mrb[0].mxu0
    %v2584 = vadd.f32 %v2436, %v2583
    %v2585 = vpop.f32.mrb[0].mxu0
    %2586 = vmatprep.mubr.f32.mxu0 0.0
    %2587 = vmatmul.mubr.f32.gmra.mrb[0].mxu0 %v2401
    %v2588 = vpop.f32.mrb[0].mxu0
    %v2589 = vadd.f32 %v2436, %v2588
    %v2590 = vpop.f32.mrb[0].mxu0
    %2591 = vmatprep.mubr.f32.mxu0 0.0
    %2592 = vmatmul.mubr.f32.gmra.mrb[0].mxu0 %v2402
    %v2593 = vpop.f32.mrb[0].mxu0
    %v2594 = vadd.f32 %v2436, %v2593
    %v2595 = vpop.f32.mrb[0].mxu0
    %2596 = vmatprep.mubr.f32.mxu0 0.0
    %2597 = vmatmul.mubr.f32.gmra.mrb[0].mxu0 %v2403
    %v2598 = vpop.f32.mrb[0].mxu0
    %v2599 = vadd.f32 %v2436, %v2598
    %v2600 = vpop.f32.mrb[0].mxu0
    %2601 = vmatprep.mubr.f32.mxu0 0.0
    %2602 = vmatmul.mubr.f32.gmra.mrb[0].mxu0 %v2404
    %v2603 = vpop.f32.mrb[0].mxu0
    %v2604 = vadd.f32 %v2436, %v2603
    %v2605 = vpop.f32.mrb[0].mxu0
    %2606 = vmatprep.mubr.f32.mxu0 0.0
    %2607 = vmatmul.mubr.f32.gmra.mrb[0].mxu0 %v2405
    %v2608 = vpop.f32.mrb[0].mxu0
    %v2609 = vadd.f32 %v2436, %v2608
    %v2610 = vpop.f32.mrb[0].mxu0
    %2611 = vmatprep.mubr.f32.mxu0 0.0
    %2612 = vmatmul.mubr.f32.gmra.mrb[0].mxu0 %v2406
    %v2613 = vpop.f32.mrb[0].mxu0
    %v2614 = vadd.f32 %v2436, %v2613
    %v2615 = vpop.f32.mrb[0].mxu0
    %2616 = vmatprep.mubr.f32.mxu0 0.0
    %2617 = vmatmul.mubr.f32.gmra.mrb[0].mxu0 %v2407
    %v2618 = vpop.f32.mrb[0].mxu0
    %v2619 = vadd.f32 %v2436, %v2618
    %v2620 = vpop.f32.mrb[0].mxu0
    %2621 = vmatprep.mubr.f32.mxu0 0.0
    %2622 = vmatmul.mubr.f32.gmra.mrb[0].mxu0 %v2408
    %v2623 = vpop.f32.mrb[0].mxu0
    %v2624 = vadd.f32 %v2436, %v2623
    %v2625 = vpop.f32.mrb[0].mxu0
    %2626 = vmatprep.mubr.f32.mxu0 0.0
    %2627 = vmatmul.mubr.f32.gmra.mrb[0].mxu0 %v2409
    %v2628 = vpop.f32.mrb[0].mxu0
    %v2629 = vadd.f32 %v2436, %v2628
    %v2630 = vpop.f32.mrb[0].mxu0
    %2631 = vmatprep.mubr.f32.mxu0 0.0
    %2632 = vmatmul.mubr.f32.gmra.mrb[0].mxu0 %v2410
    %v2633 = vpop.f32.mrb[0].mxu0
    %v2634 = vadd.f32 %v2436, %v2633
    %v2635 = vpop.f32.mrb[0].mxu0
    %2636 = vmatprep.mubr.f32.mxu0 0.0
    %2637 = vmatmul.mubr.f32.gmra.mrb[0].mxu0 %v2411
    %v2638 = vpop.f32.mrb[0].mxu0
    %v2639 = vadd.f32 %v2436, %v2638
    %v2640 = vpop.f32.mrb[0].mxu0
    %2641 = vmatprep.mubr.f32.mxu0 0.0
    %2642 = vmatmul.mubr.f32.gmra.mrb[0].mxu0 %v2412
    %v2643 = vpop.f32.mrb[0].mxu0
    %v2644 = vadd.f32 %v2436, %v2643
    %v2645 = vpop.f32.mrb[0].mxu0
    %2646 = vmatprep.mubr.f32.mxu0 0.0
    %2647 = vmatmul.mubr.f32.gmra.mrb[0].mxu0 %v2413
    %v2648 = vpop.f32.mrb[0].mxu0
    %v2649 = vadd.f32 %v2436, %v2648
    %v2650 = vpop.f32.mrb[0].mxu0
    %2651 = vmatprep.mubr.f32.mxu0 0.0
    %2652 = vmatmul.mubr.f32.gmra.mrb[0].mxu0 %v2414
    %v2653 = vpop.f32.mrb[0].mxu0
    %v2654 = vadd.f32 %v2436, %v2653
    %v2655 = vpop.f32.mrb[0].mxu0
    %2656 = vmatprep.mubr.f32.mxu0 0.0
    %2657 = vmatmul.mubr.f32.gmra.mrb[0].mxu0 %v2415
    %v2658 = vpop.f32.mrb[0].mxu0
    %v2659 = vadd.f32 %v2436, %v2658
    %v2660 = vpop.f32.mrb[0].mxu0
    %2661 = vdwg.mxu0
    %v2662 = vld [vmem:[%s6 + $0x4] sm:$0x1]
    %v2663 = vld [vmem:[%s6 + $0x6] sm:$0x1]
    %v2664 = vlaneseq
    %v2665 = vshrl.u32 %v2664, 7
    %v2666 = vsub.s32 0, %v2665
    %v2667 = vrot.slane %v2663, %v2666
    %v2668 = vsub.f32 %v2504, %v2667
    %v2669 = vsub.f32 %v2509, %v2667
    %v2670 = vsub.f32 %v2514, %v2667
    %v2671 = vsub.f32 %v2519, %v2667
    %v2672 = vsub.f32 %v2524, %v2667
    %v2673 = vsub.f32 %v2529, %v2667
    %v2674 = vsub.f32 %v2534, %v2667
    %v2675 = vsub.f32 %v2539, %v2667
    %v2676 = vsub.f32 %v2544, %v2667
    %v2677 = vsub.f32 %v2549, %v2667
    %v2678 = vsub.f32 %v2554, %v2667
    %v2679 = vsub.f32 %v2559, %v2667
    %v2680 = vsub.f32 %v2564, %v2667
    %v2681 = vsub.f32 %v2569, %v2667
    %v2682 = vsub.f32 %v2574, %v2667
    %v2683 = vsub.f32 %v2579, %v2667
    %v2684 = vsub.f32 %v2584, %v2667
    %v2685 = vsub.f32 %v2589, %v2667
    %v2686 = vsub.f32 %v2594, %v2667
    %v2687 = vsub.f32 %v2599, %v2667
    %v2688 = vsub.f32 %v2604, %v2667
    %v2689 = vsub.f32 %v2609, %v2667
    %v2690 = vsub.f32 %v2614, %v2667
    %v2691 = vsub.f32 %v2619, %v2667
    %v2692 = vsub.f32 %v2624, %v2667
    %v2693 = vsub.f32 %v2629, %v2667
    %v2694 = vsub.f32 %v2634, %v2667
    %v2695 = vsub.f32 %v2639, %v2667
    %v2696 = vsub.f32 %v2644, %v2667
    %v2697 = vsub.f32 %v2649, %v2667
    %v2698 = vsub.f32 %v2654, %v2667
    %v2699 = vsub.f32 %v2659, %v2667
    %v2700 = vlaneseq
    %v2701 = vshrl.u32 %v2700, 7
    %v2702 = vsub.s32 0, %v2701
    %v2703 = vrot.slane %v2662, %v2702
    %v2704 = vmul.f32 %v2703, %v2668
    %v2705 = vmul.f32 %v2703, %v2669
    %v2706 = vmul.f32 %v2703, %v2670
    %v2707 = vmul.f32 %v2703, %v2671
    %v2708 = vmul.f32 %v2703, %v2672
    %v2709 = vmul.f32 %v2703, %v2673
    %v2710 = vmul.f32 %v2703, %v2674
    %v2711 = vmul.f32 %v2703, %v2675
    %v2712 = vmul.f32 %v2703, %v2676
    %v2713 = vmul.f32 %v2703, %v2677
    %v2714 = vmul.f32 %v2703, %v2678
    %v2715 = vmul.f32 %v2703, %v2679
    %v2716 = vmul.f32 %v2703, %v2680
    %v2717 = vmul.f32 %v2703, %v2681
    %v2718 = vmul.f32 %v2703, %v2682
    %v2719 = vmul.f32 %v2703, %v2683
    %v2720 = vmul.f32 %v2703, %v2684
    %v2721 = vmul.f32 %v2703, %v2685
    %v2722 = vmul.f32 %v2703, %v2686
    %v2723 = vmul.f32 %v2703, %v2687
    %v2724 = vmul.f32 %v2703, %v2688
    %v2725 = vmul.f32 %v2703, %v2689
    %v2726 = vmul.f32 %v2703, %v2690
    %v2727 = vmul.f32 %v2703, %v2691
    %v2728 = vmul.f32 %v2703, %v2692
    %v2729 = vmul.f32 %v2703, %v2693
    %v2730 = vmul.f32 %v2703, %v2694
    %v2731 = vmul.f32 %v2703, %v2695
    %v2732 = vmul.f32 %v2703, %v2696
    %v2733 = vmul.f32 %v2703, %v2697
    %v2734 = vmul.f32 %v2703, %v2698
    %v2735 = vmul.f32 %v2703, %v2699
    %v2736 = vld [vmem:[%s6 + $0x7] sm:$0x1]
    %v2737 = vadd.f32 %v2736, 1e-05
    %v2738 = vrsqrt.pop %v2737
    %v2739 = vlaneseq
    %v2740 = vshrl.u32 %v2739, 7
    %v2741 = vsub.s32 0, %v2740
    %v2742 = vrot.slane %v2738, %v2741
    %v2743 = vmul.f32 %v2704, %v2742
    %v2744 = vmul.f32 %v2705, %v2742
    %v2745 = vmul.f32 %v2706, %v2742
    %v2746 = vmul.f32 %v2707, %v2742
    %v2747 = vmul.f32 %v2708, %v2742
    %v2748 = vmul.f32 %v2709, %v2742
    %v2749 = vmul.f32 %v2710, %v2742
    %v2750 = vmul.f32 %v2711, %v2742
    %v2751 = vmul.f32 %v2712, %v2742
    %v2752 = vmul.f32 %v2713, %v2742
    %v2753 = vmul.f32 %v2714, %v2742
    %v2754 = vmul.f32 %v2715, %v2742
    %v2755 = vmul.f32 %v2716, %v2742
    %v2756 = vmul.f32 %v2717, %v2742
    %v2757 = vmul.f32 %v2718, %v2742
    %v2758 = vmul.f32 %v2719, %v2742
    %v2759 = vmul.f32 %v2720, %v2742
    %v2760 = vmul.f32 %v2721, %v2742
    %v2761 = vmul.f32 %v2722, %v2742
    %v2762 = vmul.f32 %v2723, %v2742
    %v2763 = vmul.f32 %v2724, %v2742
    %v2764 = vmul.f32 %v2725, %v2742
    %v2765 = vmul.f32 %v2726, %v2742
    %v2766 = vmul.f32 %v2727, %v2742
    %v2767 = vmul.f32 %v2728, %v2742
    %v2768 = vmul.f32 %v2729, %v2742
    %v2769 = vmul.f32 %v2730, %v2742
    %v2770 = vmul.f32 %v2731, %v2742
    %v2771 = vmul.f32 %v2732, %v2742
    %v2772 = vmul.f32 %v2733, %v2742
    %v2773 = vmul.f32 %v2734, %v2742
    %v2774 = vmul.f32 %v2735, %v2742
    %v2775 = vld [vmem:[%s6 + $0x5] sm:$0x1]
    %v2776 = vlaneseq
    %v2777 = vshrl.u32 %v2776, 7
    %v2778 = vsub.s32 0, %v2777
    %v2779 = vrot.slane %v2775, %v2778
    %v2780 = vadd.f32 %v2743, %v2779
    %v2781 = vadd.f32 %v2744, %v2779
    %v2782 = vadd.f32 %v2745, %v2779
    %v2783 = vadd.f32 %v2746, %v2779
    %v2784 = vadd.f32 %v2747, %v2779
    %v2785 = vadd.f32 %v2748, %v2779
    %v2786 = vadd.f32 %v2749, %v2779
    %v2787 = vadd.f32 %v2750, %v2779
    %v2788 = vadd.f32 %v2751, %v2779
    %v2789 = vadd.f32 %v2752, %v2779
    %v2790 = vadd.f32 %v2753, %v2779
    %v2791 = vadd.f32 %v2754, %v2779
    %v2792 = vadd.f32 %v2755, %v2779
    %v2793 = vadd.f32 %v2756, %v2779
    %v2794 = vadd.f32 %v2757, %v2779
    %v2795 = vadd.f32 %v2758, %v2779
    %v2796 = vadd.f32 %v2759, %v2779
    %v2797 = vadd.f32 %v2760, %v2779
    %v2798 = vadd.f32 %v2761, %v2779
    %v2799 = vadd.f32 %v2762, %v2779
    %v2800 = vadd.f32 %v2763, %v2779
    %v2801 = vadd.f32 %v2764, %v2779
    %v2802 = vadd.f32 %v2765, %v2779
    %v2803 = vadd.f32 %v2766, %v2779
    %v2804 = vadd.f32 %v2767, %v2779
    %v2805 = vadd.f32 %v2768, %v2779
    %v2806 = vadd.f32 %v2769, %v2779
    %v2807 = vadd.f32 %v2770, %v2779
    %v2808 = vadd.f32 %v2771, %v2779
    %v2809 = vadd.f32 %v2772, %v2779
    %v2810 = vadd.f32 %v2773, %v2779
    %v2811 = vadd.f32 %v2774, %v2779
    %v2812 = vmax.f32 %v2780, 0.0
    %v2813 = vmax.f32 %v2781, 0.0
    %v2814 = vmax.f32 %v2782, 0.0
    %v2815 = vmax.f32 %v2783, 0.0
    %v2816 = vmax.f32 %v2784, 0.0
    %v2817 = vmax.f32 %v2785, 0.0
    %v2818 = vmax.f32 %v2786, 0.0
    %v2819 = vmax.f32 %v2787, 0.0
    %v2820 = vmax.f32 %v2788, 0.0
    %v2821 = vmax.f32 %v2789, 0.0
    %v2822 = vmax.f32 %v2790, 0.0
    %v2823 = vmax.f32 %v2791, 0.0
    %v2824 = vmax.f32 %v2792, 0.0
    %v2825 = vmax.f32 %v2793, 0.0
    %v2826 = vmax.f32 %v2794, 0.0
    %v2827 = vmax.f32 %v2795, 0.0
    %v2828 = vmax.f32 %v2796, 0.0
    %v2829 = vmax.f32 %v2797, 0.0
    %v2830 = vmax.f32 %v2798, 0.0
    %v2831 = vmax.f32 %v2799, 0.0
    %v2832 = vmax.f32 %v2800, 0.0
    %v2833 = vmax.f32 %v2801, 0.0
    %v2834 = vmax.f32 %v2802, 0.0
    %v2835 = vmax.f32 %v2803, 0.0
    %v2836 = vmax.f32 %v2804, 0.0
    %v2837 = vmax.f32 %v2805, 0.0
    %v2838 = vmax.f32 %v2806, 0.0
    %v2839 = vmax.f32 %v2807, 0.0
    %v2840 = vmax.f32 %v2808, 0.0
    %v2841 = vmax.f32 %v2809, 0.0
    %v2842 = vmax.f32 %v2810, 0.0
    %v2843 = vmax.f32 %v2811, 0.0
    %2844 = vmatprep.subr.mxu0 0.0
    %2845 = vmatpush1.msra.mxu0 %v2812
    %2846 = vmatprep.subr.mxu0 0.0
    %2847 = vmatpush1.msra.mxu0 %v2813
    %2848 = vmatprep.subr.mxu0 0.0
    %2849 = vmatpush1.msra.mxu0 %v2814
    %2850 = vmatprep.subr.mxu0 0.0
    %2851 = vmatpush1.msra.mxu0 %v2815
    %2852 = vmatprep.subr.mxu0 0.0
    %2853 = vmatpush1.msra.mxu0 %v2816
    %2854 = vmatprep.subr.mxu0 0.0
    %2855 = vmatpush1.msra.mxu0 %v2817
    %2856 = vmatprep.subr.mxu0 0.0
    %2857 = vmatpush1.msra.mxu0 %v2818
    %2858 = vmatprep.subr.mxu0 0.0
    %2859 = vmatpush1.msra.mxu0 %v2819
    %2860 = vmatprep.subr.mxu0 0.0
    %2861 = vmatpush1.msra.mxu0 %v2820
    %2862 = vmatprep.subr.mxu0 0.0
    %2863 = vmatpush1.msra.mxu0 %v2821
    %2864 = vmatprep.subr.mxu0 0.0
    %2865 = vmatpush1.msra.mxu0 %v2822
    %2866 = vmatprep.subr.mxu0 0.0
    %2867 = vmatpush1.msra.mxu0 %v2823
    %2868 = vmatprep.subr.mxu0 0.0
    %2869 = vmatpush1.msra.mxu0 %v2824
    %2870 = vmatprep.subr.mxu0 0.0
    %2871 = vmatpush1.msra.mxu0 %v2825
    %2872 = vmatprep.subr.mxu0 0.0
    %2873 = vmatpush1.msra.mxu0 %v2826
    %2874 = vmatprep.subr.mxu0 0.0
    %2875 = vmatpush1.msra.mxu0 %v2827
    %2876 = vmatprep.subr.mxu0 0.0
    %2877 = vmatpush1.msra.mxu0 %v2828
    %2878 = vmatprep.subr.mxu0 0.0
    %2879 = vmatpush1.msra.mxu0 %v2829
    %2880 = vmatprep.subr.mxu0 0.0
    %2881 = vmatpush1.msra.mxu0 %v2830
    %2882 = vmatprep.subr.mxu0 0.0
    %2883 = vmatpush1.msra.mxu0 %v2831
    %2884 = vmatprep.subr.mxu0 0.0
    %2885 = vmatpush1.msra.mxu0 %v2832
    %2886 = vmatprep.subr.mxu0 0.0
    %2887 = vmatpush1.msra.mxu0 %v2833
    %2888 = vmatprep.subr.mxu0 0.0
    %2889 = vmatpush1.msra.mxu0 %v2834
    %2890 = vmatprep.subr.mxu0 0.0
    %2891 = vmatpush1.msra.mxu0 %v2835
    %2892 = vmatprep.subr.mxu0 0.0
    %2893 = vmatpush1.msra.mxu0 %v2836
    %2894 = vmatprep.subr.mxu0 0.0
    %2895 = vmatpush1.msra.mxu0 %v2837
    %2896 = vmatprep.subr.mxu0 0.0
    %2897 = vmatpush1.msra.mxu0 %v2838
    %2898 = vmatprep.subr.mxu0 0.0
    %2899 = vmatpush1.msra.mxu0 %v2839
    %2900 = vmatprep.subr.mxu0 0.0
    %2901 = vmatpush1.msra.mxu0 %v2840
    %2902 = vmatprep.subr.mxu0 0.0
    %2903 = vmatpush1.msra.mxu0 %v2841
    %2904 = vmatprep.subr.mxu0 0.0
    %2905 = vmatpush1.msra.mxu0 %v2842
    %2906 = vmatprep.subr.mxu0 0.0
    %2907 = vmatpush1.msra.mxu0 %v2843
    %2908 = vmatprep.mubr.f32.mxu0 %v172
    %2909 = vmatmul.mubr.f32.gmra.mrb[0].mxu0 %v171
    %v2910 = vpop.f32.mrb[0].mxu0
    %v2911 = vadd.f32 %v921, %v2910
    %v2912 = vpop.f32.mrb[0].mxu0
    %2913 = vmatprep.mubr.f32.mxu0 %v174
    %2914 = vmatmul.mubr.f32.gmra.mrb[0].mxu0 %v173
    %v2915 = vpop.f32.mrb[0].mxu0
    %v2916 = vadd.f32 %v926, %v2915
    %v2917 = vpop.f32.mrb[0].mxu0
    %2918 = vmatprep.mubr.f32.mxu0 %v176
    %2919 = vmatmul.mubr.f32.gmra.mrb[0].mxu0 %v175
    %v2920 = vpop.f32.mrb[0].mxu0
    %v2921 = vadd.f32 %v931, %v2920
    %v2922 = vpop.f32.mrb[0].mxu0
    %2923 = vmatprep.mubr.f32.mxu0 %v178
    %2924 = vmatmul.mubr.f32.gmra.mrb[0].mxu0 %v177
    %v2925 = vpop.f32.mrb[0].mxu0
    %v2926 = vadd.f32 %v936, %v2925
    %v2927 = vpop.f32.mrb[0].mxu0
    %2928 = vmatprep.mubr.f32.mxu0 %v180
    %2929 = vmatmul.mubr.f32.gmra.mrb[0].mxu0 %v179
    %v2930 = vpop.f32.mrb[0].mxu0
    %v2931 = vadd.f32 %v941, %v2930
    %v2932 = vpop.f32.mrb[0].mxu0
    %2933 = vmatprep.mubr.f32.mxu0 %v182
    %2934 = vmatmul.mubr.f32.gmra.mrb[0].mxu0 %v181
    %v2935 = vpop.f32.mrb[0].mxu0
    %v2936 = vadd.f32 %v946, %v2935
    %v2937 = vpop.f32.mrb[0].mxu0
    %2938 = vmatprep.mubr.f32.mxu0 %v184
    %2939 = vmatmul.mubr.f32.gmra.mrb[0].mxu0 %v183
    %v2940 = vpop.f32.mrb[0].mxu0
    %v2941 = vadd.f32 %v951, %v2940
    %v2942 = vpop.f32.mrb[0].mxu0
    %2943 = vmatprep.mubr.f32.mxu0 %v186
    %2944 = vmatmul.mubr.f32.gmra.mrb[0].mxu0 %v185
    %v2945 = vpop.f32.mrb[0].mxu0
    %v2946 = vadd.f32 %v956, %v2945
    %v2947 = vpop.f32.mrb[0].mxu0
    %2948 = vmatprep.mubr.f32.mxu0 %v188
    %2949 = vmatmul.mubr.f32.gmra.mrb[0].mxu0 %v187
    %v2950 = vpop.f32.mrb[0].mxu0
    %v2951 = vadd.f32 %v961, %v2950
    %v2952 = vpop.f32.mrb[0].mxu0
    %2953 = vmatprep.mubr.f32.mxu0 %v190
    %2954 = vmatmul.mubr.f32.gmra.mrb[0].mxu0 %v189
    %v2955 = vpop.f32.mrb[0].mxu0
    %v2956 = vadd.f32 %v966, %v2955
    %v2957 = vpop.f32.mrb[0].mxu0
    %2958 = vmatprep.mubr.f32.mxu0 %v192
    %2959 = vmatmul.mubr.f32.gmra.mrb[0].mxu0 %v191
    %v2960 = vpop.f32.mrb[0].mxu0
    %v2961 = vadd.f32 %v971, %v2960
    %v2962 = vpop.f32.mrb[0].mxu0
    %2963 = vmatprep.mubr.f32.mxu0 %v194
    %2964 = vmatmul.mubr.f32.gmra.mrb[0].mxu0 %v193
    %v2965 = vpop.f32.mrb[0].mxu0
    %v2966 = vadd.f32 %v976, %v2965
    %v2967 = vpop.f32.mrb[0].mxu0
    %2968 = vmatprep.mubr.f32.mxu0 %v196
    %2969 = vmatmul.mubr.f32.gmra.mrb[0].mxu0 %v195
    %v2970 = vpop.f32.mrb[0].mxu0
    %v2971 = vadd.f32 %v981, %v2970
    %v2972 = vpop.f32.mrb[0].mxu0
    %2973 = vmatprep.mubr.f32.mxu0 %v198
    %2974 = vmatmul.mubr.f32.gmra.mrb[0].mxu0 %v197
    %v2975 = vpop.f32.mrb[0].mxu0
    %v2976 = vadd.f32 %v986, %v2975
    %v2977 = vpop.f32.mrb[0].mxu0
    %2978 = vmatprep.mubr.f32.mxu0 %v200
    %2979 = vmatmul.mubr.f32.gmra.mrb[0].mxu0 %v199
    %v2980 = vpop.f32.mrb[0].mxu0
    %v2981 = vadd.f32 %v991, %v2980
    %v2982 = vpop.f32.mrb[0].mxu0
    %2983 = vmatprep.mubr.f32.mxu0 %v202
    %2984 = vmatmul.mubr.f32.gmra.mrb[0].mxu0 %v201
    %v2985 = vpop.f32.mrb[0].mxu0
    %v2986 = vadd.f32 %v996, %v2985
    %v2987 = vpop.f32.mrb[0].mxu0
    %2988 = vmatprep.mubr.f32.mxu0 %v204
    %2989 = vmatmul.mubr.f32.gmra.mrb[0].mxu0 %v203
    %v2990 = vpop.f32.mrb[0].mxu0
    %v2991 = vadd.f32 %v1001, %v2990
    %v2992 = vpop.f32.mrb[0].mxu0
    %2993 = vmatprep.mubr.f32.mxu0 %v206
    %2994 = vmatmul.mubr.f32.gmra.mrb[0].mxu0 %v205
    %v2995 = vpop.f32.mrb[0].mxu0
    %v2996 = vadd.f32 %v1006, %v2995
    %v2997 = vpop.f32.mrb[0].mxu0
    %2998 = vmatprep.mubr.f32.mxu0 %v208
    %2999 = vmatmul.mubr.f32.gmra.mrb[0].mxu0 %v207
    %v3000 = vpop.f32.mrb[0].mxu0
    %v3001 = vadd.f32 %v1011, %v3000
    %v3002 = vpop.f32.mrb[0].mxu0
    %3003 = vmatprep.mubr.f32.mxu0 %v210
    %3004 = vmatmul.mubr.f32.gmra.mrb[0].mxu0 %v209
    %v3005 = vpop.f32.mrb[0].mxu0
    %v3006 = vadd.f32 %v1016, %v3005
    %v3007 = vpop.f32.mrb[0].mxu0
    %3008 = vmatprep.mubr.f32.mxu0 %v212
    %3009 = vmatmul.mubr.f32.gmra.mrb[0].mxu0 %v211
    %v3010 = vpop.f32.mrb[0].mxu0
    %v3011 = vadd.f32 %v1021, %v3010
    %v3012 = vpop.f32.mrb[0].mxu0
    %3013 = vmatprep.mubr.f32.mxu0 %v214
    %3014 = vmatmul.mubr.f32.gmra.mrb[0].mxu0 %v213
    %v3015 = vpop.f32.mrb[0].mxu0
    %v3016 = vadd.f32 %v1026, %v3015
    %v3017 = vpop.f32.mrb[0].mxu0
    %3018 = vmatprep.mubr.f32.mxu0 %v216
    %3019 = vmatmul.mubr.f32.gmra.mrb[0].mxu0 %v215
    %v3020 = vpop.f32.mrb[0].mxu0
    %v3021 = vadd.f32 %v1031, %v3020
    %v3022 = vpop.f32.mrb[0].mxu0
    %3023 = vmatprep.mubr.f32.mxu0 %v218
    %3024 = vmatmul.mubr.f32.gmra.mrb[0].mxu0 %v217
    %v3025 = vpop.f32.mrb[0].mxu0
    %v3026 = vadd.f32 %v1036, %v3025
    %v3027 = vpop.f32.mrb[0].mxu0
    %3028 = vmatprep.mubr.f32.mxu0 %v220
    %3029 = vmatmul.mubr.f32.gmra.mrb[0].mxu0 %v219
    %v3030 = vpop.f32.mrb[0].mxu0
    %v3031 = vadd.f32 %v1041, %v3030
    %v3032 = vpop.f32.mrb[0].mxu0
    %3033 = vmatprep.mubr.f32.mxu0 %v222
    %3034 = vmatmul.mubr.f32.gmra.mrb[0].mxu0 %v221
    %v3035 = vpop.f32.mrb[0].mxu0
    %v3036 = vadd.f32 %v1046, %v3035
    %v3037 = vpop.f32.mrb[0].mxu0
    %3038 = vmatprep.mubr.f32.mxu0 %v224
    %3039 = vmatmul.mubr.f32.gmra.mrb[0].mxu0 %v223
    %v3040 = vpop.f32.mrb[0].mxu0
    %v3041 = vadd.f32 %v1051, %v3040
    %v3042 = vpop.f32.mrb[0].mxu0
    %3043 = vmatprep.mubr.f32.mxu0 %v226
    %3044 = vmatmul.mubr.f32.gmra.mrb[0].mxu0 %v225
    %v3045 = vpop.f32.mrb[0].mxu0
    %v3046 = vadd.f32 %v1056, %v3045
    %v3047 = vpop.f32.mrb[0].mxu0
    %3048 = vmatprep.mubr.f32.mxu0 %v228
    %3049 = vmatmul.mubr.f32.gmra.mrb[0].mxu0 %v227
    %v3050 = vpop.f32.mrb[0].mxu0
    %v3051 = vadd.f32 %v1061, %v3050
    %v3052 = vpop.f32.mrb[0].mxu0
    %3053 = vmatprep.mubr.f32.mxu0 %v230
    %3054 = vmatmul.mubr.f32.gmra.mrb[0].mxu0 %v229
    %v3055 = vpop.f32.mrb[0].mxu0
    %v3056 = vadd.f32 %v1066, %v3055
    %v3057 = vpop.f32.mrb[0].mxu0
    %3058 = vmatprep.mubr.f32.mxu0 %v232
    %3059 = vmatmul.mubr.f32.gmra.mrb[0].mxu0 %v231
    %v3060 = vpop.f32.mrb[0].mxu0
    %v3061 = vadd.f32 %v1071, %v3060
    %v3062 = vpop.f32.mrb[0].mxu0
    %3063 = vmatprep.mubr.f32.mxu0 %v234
    %3064 = vmatmul.mubr.f32.gmra.mrb[0].mxu0 %v233
    %v3065 = vpop.f32.mrb[0].mxu0
    %v3066 = vadd.f32 %v1076, %v3065
    %v3067 = vpop.f32.mrb[0].mxu0
    %3068 = vmatprep.mubr.f32.mxu0 %v236
    %3069 = vmatmul.mubr.f32.gmra.mrb[0].mxu0 %v235
    %v3070 = vpop.f32.mrb[0].mxu0
    %v3071 = vadd.f32 %v1081, %v3070
    %v3072 = vpop.f32.mrb[0].mxu0
    %3073 = vmatprep.mubr.f32.mxu0 %v238
    %3074 = vmatmul.mubr.f32.gmra.mrb[0].mxu0 %v237
    %v3075 = vpop.f32.mrb[0].mxu0
    %v3076 = vadd.f32 %v1086, %v3075
    %v3077 = vpop.f32.mrb[0].mxu0
    %3078 = vmatprep.mubr.f32.mxu0 %v240
    %3079 = vmatmul.mubr.f32.gmra.mrb[0].mxu0 %v239
    %v3080 = vpop.f32.mrb[0].mxu0
    %v3081 = vadd.f32 %v1091, %v3080
    %v3082 = vpop.f32.mrb[0].mxu0
    %3083 = vmatprep.mubr.f32.mxu0 %v242
    %3084 = vmatmul.mubr.f32.gmra.mrb[0].mxu0 %v241
    %v3085 = vpop.f32.mrb[0].mxu0
    %v3086 = vadd.f32 %v1096, %v3085
    %v3087 = vpop.f32.mrb[0].mxu0
    %3088 = vmatprep.mubr.f32.mxu0 %v244
    %3089 = vmatmul.mubr.f32.gmra.mrb[0].mxu0 %v243
    %v3090 = vpop.f32.mrb[0].mxu0
    %v3091 = vadd.f32 %v1101, %v3090
    %v3092 = vpop.f32.mrb[0].mxu0
    %3093 = vmatprep.mubr.f32.mxu0 %v246
    %3094 = vmatmul.mubr.f32.gmra.mrb[0].mxu0 %v245
    %v3095 = vpop.f32.mrb[0].mxu0
    %v3096 = vadd.f32 %v1106, %v3095
    %v3097 = vpop.f32.mrb[0].mxu0
    %3098 = vmatprep.mubr.f32.mxu0 %v248
    %3099 = vmatmul.mubr.f32.gmra.mrb[0].mxu0 %v247
    %v3100 = vpop.f32.mrb[0].mxu0
    %v3101 = vadd.f32 %v1111, %v3100
    %v3102 = vpop.f32.mrb[0].mxu0
    %3103 = vmatprep.mubr.f32.mxu0 %v250
    %3104 = vmatmul.mubr.f32.gmra.mrb[0].mxu0 %v249
    %v3105 = vpop.f32.mrb[0].mxu0
    %v3106 = vadd.f32 %v1116, %v3105
    %v3107 = vpop.f32.mrb[0].mxu0
    %3108 = vmatprep.mubr.f32.mxu0 %v252
    %3109 = vmatmul.mubr.f32.gmra.mrb[0].mxu0 %v251
    %v3110 = vpop.f32.mrb[0].mxu0
    %v3111 = vadd.f32 %v1121, %v3110
    %v3112 = vpop.f32.mrb[0].mxu0
    %3113 = vmatprep.mubr.f32.mxu0 %v254
    %3114 = vmatmul.mubr.f32.gmra.mrb[0].mxu0 %v253
    %v3115 = vpop.f32.mrb[0].mxu0
    %v3116 = vadd.f32 %v1126, %v3115
    %v3117 = vpop.f32.mrb[0].mxu0
    %3118 = vmatprep.mubr.f32.mxu0 %v256
    %3119 = vmatmul.mubr.f32.gmra.mrb[0].mxu0 %v255
    %v3120 = vpop.f32.mrb[0].mxu0
    %v3121 = vadd.f32 %v1131, %v3120
    %v3122 = vpop.f32.mrb[0].mxu0
    %3123 = vmatprep.mubr.f32.mxu0 %v258
    %3124 = vmatmul.mubr.f32.gmra.mrb[0].mxu0 %v257
    %v3125 = vpop.f32.mrb[0].mxu0
    %v3126 = vadd.f32 %v1136, %v3125
    %v3127 = vpop.f32.mrb[0].mxu0
    %3128 = vmatprep.mubr.f32.mxu0 %v260
    %3129 = vmatmul.mubr.f32.gmra.mrb[0].mxu0 %v259
    %v3130 = vpop.f32.mrb[0].mxu0
    %v3131 = vadd.f32 %v1141, %v3130
    %v3132 = vpop.f32.mrb[0].mxu0
    %3133 = vmatprep.mubr.f32.mxu0 %v262
    %3134 = vmatmul.mubr.f32.gmra.mrb[0].mxu0 %v261
    %v3135 = vpop.f32.mrb[0].mxu0
    %v3136 = vadd.f32 %v1146, %v3135
    %v3137 = vpop.f32.mrb[0].mxu0
    %3138 = vmatprep.mubr.f32.mxu0 %v264
    %3139 = vmatmul.mubr.f32.gmra.mrb[0].mxu0 %v263
    %v3140 = vpop.f32.mrb[0].mxu0
    %v3141 = vadd.f32 %v1151, %v3140
    %v3142 = vpop.f32.mrb[0].mxu0
    %3143 = vmatprep.mubr.f32.mxu0 %v266
    %3144 = vmatmul.mubr.f32.gmra.mrb[0].mxu0 %v265
    %v3145 = vpop.f32.mrb[0].mxu0
    %v3146 = vadd.f32 %v1156, %v3145
    %v3147 = vpop.f32.mrb[0].mxu0
    %3148 = vmatprep.mubr.f32.mxu0 %v268
    %3149 = vmatmul.mubr.f32.gmra.mrb[0].mxu0 %v267
    %v3150 = vpop.f32.mrb[0].mxu0
    %v3151 = vadd.f32 %v1161, %v3150
    %v3152 = vpop.f32.mrb[0].mxu0
    %3153 = vmatprep.mubr.f32.mxu0 %v270
    %3154 = vmatmul.mubr.f32.gmra.mrb[0].mxu0 %v269
    %v3155 = vpop.f32.mrb[0].mxu0
    %v3156 = vadd.f32 %v1166, %v3155
    %v3157 = vpop.f32.mrb[0].mxu0
    %3158 = vmatprep.mubr.f32.mxu0 %v272
    %3159 = vmatmul.mubr.f32.gmra.mrb[0].mxu0 %v271
    %v3160 = vpop.f32.mrb[0].mxu0
    %v3161 = vadd.f32 %v1171, %v3160
    %v3162 = vpop.f32.mrb[0].mxu0
    %3163 = vmatprep.mubr.f32.mxu0 %v274
    %3164 = vmatmul.mubr.f32.gmra.mrb[0].mxu0 %v273
    %v3165 = vpop.f32.mrb[0].mxu0
    %v3166 = vadd.f32 %v1176, %v3165
    %v3167 = vpop.f32.mrb[0].mxu0
    %3168 = vmatprep.mubr.f32.mxu0 %v276
    %3169 = vmatmul.mubr.f32.gmra.mrb[0].mxu0 %v275
    %v3170 = vpop.f32.mrb[0].mxu0
    %v3171 = vadd.f32 %v1181, %v3170
    %v3172 = vpop.f32.mrb[0].mxu0
    %3173 = vmatprep.mubr.f32.mxu0 %v278
    %3174 = vmatmul.mubr.f32.gmra.mrb[0].mxu0 %v277
    %v3175 = vpop.f32.mrb[0].mxu0
    %v3176 = vadd.f32 %v1186, %v3175
    %v3177 = vpop.f32.mrb[0].mxu0
    %3178 = vmatprep.mubr.f32.mxu0 %v280
    %3179 = vmatmul.mubr.f32.gmra.mrb[0].mxu0 %v279
    %v3180 = vpop.f32.mrb[0].mxu0
    %v3181 = vadd.f32 %v1191, %v3180
    %v3182 = vpop.f32.mrb[0].mxu0
    %3183 = vmatprep.mubr.f32.mxu0 %v282
    %3184 = vmatmul.mubr.f32.gmra.mrb[0].mxu0 %v281
    %v3185 = vpop.f32.mrb[0].mxu0
    %v3186 = vadd.f32 %v1196, %v3185
    %v3187 = vpop.f32.mrb[0].mxu0
    %3188 = vmatprep.mubr.f32.mxu0 %v284
    %3189 = vmatmul.mubr.f32.gmra.mrb[0].mxu0 %v283
    %v3190 = vpop.f32.mrb[0].mxu0
    %v3191 = vadd.f32 %v1201, %v3190
    %v3192 = vpop.f32.mrb[0].mxu0
    %3193 = vmatprep.mubr.f32.mxu0 %v286
    %3194 = vmatmul.mubr.f32.gmra.mrb[0].mxu0 %v285
    %v3195 = vpop.f32.mrb[0].mxu0
    %v3196 = vadd.f32 %v1206, %v3195
    %v3197 = vpop.f32.mrb[0].mxu0
    %3198 = vmatprep.mubr.f32.mxu0 %v288
    %3199 = vmatmul.mubr.f32.gmra.mrb[0].mxu0 %v287
    %v3200 = vpop.f32.mrb[0].mxu0
    %v3201 = vadd.f32 %v1211, %v3200
    %v3202 = vpop.f32.mrb[0].mxu0
    %3203 = vmatprep.mubr.f32.mxu0 %v290
    %3204 = vmatmul.mubr.f32.gmra.mrb[0].mxu0 %v289
    %v3205 = vpop.f32.mrb[0].mxu0
    %v3206 = vadd.f32 %v1216, %v3205
    %v3207 = vpop.f32.mrb[0].mxu0
    %3208 = vmatprep.mubr.f32.mxu0 %v292
    %3209 = vmatmul.mubr.f32.gmra.mrb[0].mxu0 %v291
    %v3210 = vpop.f32.mrb[0].mxu0
    %v3211 = vadd.f32 %v1221, %v3210
    %v3212 = vpop.f32.mrb[0].mxu0
    %3213 = vmatprep.mubr.f32.mxu0 %v294
    %3214 = vmatmul.mubr.f32.gmra.mrb[0].mxu0 %v293
    %v3215 = vpop.f32.mrb[0].mxu0
    %v3216 = vadd.f32 %v1226, %v3215
    %v3217 = vpop.f32.mrb[0].mxu0
    %3218 = vmatprep.mubr.f32.mxu0 %v296
    %3219 = vmatmul.mubr.f32.gmra.mrb[0].mxu0 %v295
    %v3220 = vpop.f32.mrb[0].mxu0
    %v3221 = vadd.f32 %v1231, %v3220
    %v3222 = vpop.f32.mrb[0].mxu0
    %3223 = vmatprep.mubr.f32.mxu0 %v298
    %3224 = vmatmul.mubr.f32.gmra.mrb[0].mxu0 %v297
    %v3225 = vpop.f32.mrb[0].mxu0
    %v3226 = vadd.f32 %v1236, %v3225
    %v3227 = vpop.f32.mrb[0].mxu0
    %3228 = vdwg.mxu0
    %v3229 = vmax.f32 %v2911, 0.0
    %v3230 = vmax.f32 %v2916, 0.0
    %v3231 = vmax.f32 %v2921, 0.0
    %v3232 = vmax.f32 %v2926, 0.0
    %v3233 = vmax.f32 %v2931, 0.0
    %v3234 = vmax.f32 %v2936, 0.0
    %v3235 = vmax.f32 %v2941, 0.0
    %v3236 = vmax.f32 %v2946, 0.0
    %v3237 = vmax.f32 %v2951, 0.0
    %v3238 = vmax.f32 %v2956, 0.0
    %v3239 = vmax.f32 %v2961, 0.0
    %v3240 = vmax.f32 %v2966, 0.0
    %v3241 = vmax.f32 %v2971, 0.0
    %v3242 = vmax.f32 %v2976, 0.0
    %v3243 = vmax.f32 %v2981, 0.0
    %v3244 = vmax.f32 %v2986, 0.0
    %v3245 = vmax.f32 %v2991, 0.0
    %v3246 = vmax.f32 %v2996, 0.0
    %v3247 = vmax.f32 %v3001, 0.0
    %v3248 = vmax.f32 %v3006, 0.0
    %v3249 = vmax.f32 %v3011, 0.0
    %v3250 = vmax.f32 %v3016, 0.0
    %v3251 = vmax.f32 %v3021, 0.0
    %v3252 = vmax.f32 %v3026, 0.0
    %v3253 = vmax.f32 %v3031, 0.0
    %v3254 = vmax.f32 %v3036, 0.0
    %v3255 = vmax.f32 %v3041, 0.0
    %v3256 = vmax.f32 %v3046, 0.0
    %v3257 = vmax.f32 %v3051, 0.0
    %v3258 = vmax.f32 %v3056, 0.0
    %v3259 = vmax.f32 %v3061, 0.0
    %v3260 = vmax.f32 %v3066, 0.0
    %v3261 = vmax.f32 %v3071, 0.0
    %v3262 = vmax.f32 %v3076, 0.0
    %v3263 = vmax.f32 %v3081, 0.0
    %v3264 = vmax.f32 %v3086, 0.0
    %v3265 = vmax.f32 %v3091, 0.0
    %v3266 = vmax.f32 %v3096, 0.0
    %v3267 = vmax.f32 %v3101, 0.0
    %v3268 = vmax.f32 %v3106, 0.0
    %v3269 = vmax.f32 %v3111, 0.0
    %v3270 = vmax.f32 %v3116, 0.0
    %v3271 = vmax.f32 %v3121, 0.0
    %v3272 = vmax.f32 %v3126, 0.0
    %v3273 = vmax.f32 %v3131, 0.0
    %v3274 = vmax.f32 %v3136, 0.0
    %v3275 = vmax.f32 %v3141, 0.0
    %v3276 = vmax.f32 %v3146, 0.0
    %v3277 = vmax.f32 %v3151, 0.0
    %v3278 = vmax.f32 %v3156, 0.0
    %v3279 = vmax.f32 %v3161, 0.0
    %v3280 = vmax.f32 %v3166, 0.0
    %v3281 = vmax.f32 %v3171, 0.0
    %v3282 = vmax.f32 %v3176, 0.0
    %v3283 = vmax.f32 %v3181, 0.0
    %v3284 = vmax.f32 %v3186, 0.0
    %v3285 = vmax.f32 %v3191, 0.0
    %v3286 = vmax.f32 %v3196, 0.0
    %v3287 = vmax.f32 %v3201, 0.0
    %v3288 = vmax.f32 %v3206, 0.0
    %v3289 = vmax.f32 %v3211, 0.0
    %v3290 = vmax.f32 %v3216, 0.0
    %v3291 = vmax.f32 %v3221, 0.0
    %v3292 = vmax.f32 %v3226, 0.0
    %3293 = vmatprep.subr.mxu0 0.0
    %3294 = vmatpush1.msra.mxu0 %v3229
    %3295 = vmatprep.subr.mxu0 0.0
    %3296 = vmatpush1.msra.mxu0 %v3230
    %3297 = vmatprep.subr.mxu0 0.0
    %3298 = vmatpush1.msra.mxu0 %v3231
    %3299 = vmatprep.subr.mxu0 0.0
    %3300 = vmatpush1.msra.mxu0 %v3232
    %3301 = vmatprep.subr.mxu0 0.0
    %3302 = vmatpush1.msra.mxu0 %v3233
    %3303 = vmatprep.subr.mxu0 0.0
    %3304 = vmatpush1.msra.mxu0 %v3234
    %3305 = vmatprep.subr.mxu0 0.0
    %3306 = vmatpush1.msra.mxu0 %v3235
    %3307 = vmatprep.subr.mxu0 0.0
    %3308 = vmatpush1.msra.mxu0 %v3236
    %3309 = vmatprep.subr.mxu0 0.0
    %3310 = vmatpush1.msra.mxu0 %v3237
    %3311 = vmatprep.subr.mxu0 0.0
    %3312 = vmatpush1.msra.mxu0 %v3238
    %3313 = vmatprep.subr.mxu0 0.0
    %3314 = vmatpush1.msra.mxu0 %v3239
    %3315 = vmatprep.subr.mxu0 0.0
    %3316 = vmatpush1.msra.mxu0 %v3240
    %3317 = vmatprep.subr.mxu0 0.0
    %3318 = vmatpush1.msra.mxu0 %v3241
    %3319 = vmatprep.subr.mxu0 0.0
    %3320 = vmatpush1.msra.mxu0 %v3242
    %3321 = vmatprep.subr.mxu0 0.0
    %3322 = vmatpush1.msra.mxu0 %v3243
    %3323 = vmatprep.subr.mxu0 0.0
    %3324 = vmatpush1.msra.mxu0 %v3244
    %3325 = vmatprep.subr.mxu0 0.0
    %3326 = vmatpush1.msra.mxu0 %v3245
    %3327 = vmatprep.subr.mxu0 0.0
    %3328 = vmatpush1.msra.mxu0 %v3246
    %3329 = vmatprep.subr.mxu0 0.0
    %3330 = vmatpush1.msra.mxu0 %v3247
    %3331 = vmatprep.subr.mxu0 0.0
    %3332 = vmatpush1.msra.mxu0 %v3248
    %3333 = vmatprep.subr.mxu0 0.0
    %3334 = vmatpush1.msra.mxu0 %v3249
    %3335 = vmatprep.subr.mxu0 0.0
    %3336 = vmatpush1.msra.mxu0 %v3250
    %3337 = vmatprep.subr.mxu0 0.0
    %3338 = vmatpush1.msra.mxu0 %v3251
    %3339 = vmatprep.subr.mxu0 0.0
    %3340 = vmatpush1.msra.mxu0 %v3252
    %3341 = vmatprep.subr.mxu0 0.0
    %3342 = vmatpush1.msra.mxu0 %v3253
    %3343 = vmatprep.subr.mxu0 0.0
    %3344 = vmatpush1.msra.mxu0 %v3254
    %3345 = vmatprep.subr.mxu0 0.0
    %3346 = vmatpush1.msra.mxu0 %v3255
    %3347 = vmatprep.subr.mxu0 0.0
    %3348 = vmatpush1.msra.mxu0 %v3256
    %3349 = vmatprep.subr.mxu0 0.0
    %3350 = vmatpush1.msra.mxu0 %v3257
    %3351 = vmatprep.subr.mxu0 0.0
    %3352 = vmatpush1.msra.mxu0 %v3258
    %3353 = vmatprep.subr.mxu0 0.0
    %3354 = vmatpush1.msra.mxu0 %v3259
    %3355 = vmatprep.subr.mxu0 0.0
    %3356 = vmatpush1.msra.mxu0 %v3260
    %3357 = vmatprep.mubr.f32.mxu0 %v364
    %3358 = vmatmul.mubr.f32.gmra.mrb[0].mxu0 %v363
    %v3359 = vpop.f32.mrb[0].mxu0
    %v3360 = vadd.f32 %v2812, %v3359
    %v3361 = vpop.f32.mrb[0].mxu0
    %3362 = vmatprep.mubr.f32.mxu0 %v368
    %3363 = vmatmul.mubr.f32.gmra.mrb[0].mxu0 %v367
    %v3364 = vpop.f32.mrb[0].mxu0
    %v3365 = vadd.f32 %v2813, %v3364
    %v3366 = vpop.f32.mrb[0].mxu0
    %3367 = vmatprep.mubr.f32.mxu0 %v372
    %3368 = vmatmul.mubr.f32.gmra.mrb[0].mxu0 %v371
    %v3369 = vpop.f32.mrb[0].mxu0
    %v3370 = vadd.f32 %v2814, %v3369
    %v3371 = vpop.f32.mrb[0].mxu0
    %3372 = vmatprep.mubr.f32.mxu0 %v376
    %3373 = vmatmul.mubr.f32.gmra.mrb[0].mxu0 %v375
    %v3374 = vpop.f32.mrb[0].mxu0
    %v3375 = vadd.f32 %v2815, %v3374
    %v3376 = vpop.f32.mrb[0].mxu0
    %3377 = vmatprep.mubr.f32.mxu0 %v380
    %3378 = vmatmul.mubr.f32.gmra.mrb[0].mxu0 %v379
    %v3379 = vpop.f32.mrb[0].mxu0
    %v3380 = vadd.f32 %v2816, %v3379
    %v3381 = vpop.f32.mrb[0].mxu0
    %3382 = vmatprep.mubr.f32.mxu0 %v384
    %3383 = vmatmul.mubr.f32.gmra.mrb[0].mxu0 %v383
    %v3384 = vpop.f32.mrb[0].mxu0
    %v3385 = vadd.f32 %v2817, %v3384
    %v3386 = vpop.f32.mrb[0].mxu0
    %3387 = vmatprep.mubr.f32.mxu0 %v388
    %3388 = vmatmul.mubr.f32.gmra.mrb[0].mxu0 %v387
    %v3389 = vpop.f32.mrb[0].mxu0
    %v3390 = vadd.f32 %v2818, %v3389
    %v3391 = vpop.f32.mrb[0].mxu0
    %3392 = vmatprep.mubr.f32.mxu0 %v392
    %3393 = vmatmul.mubr.f32.gmra.mrb[0].mxu0 %v391
    %v3394 = vpop.f32.mrb[0].mxu0
    %v3395 = vadd.f32 %v2819, %v3394
    %v3396 = vpop.f32.mrb[0].mxu0
    %3397 = vmatprep.mubr.f32.mxu0 %v396
    %3398 = vmatmul.mubr.f32.gmra.mrb[0].mxu0 %v395
    %v3399 = vpop.f32.mrb[0].mxu0
    %v3400 = vadd.f32 %v2820, %v3399
    %v3401 = vpop.f32.mrb[0].mxu0
    %3402 = vmatprep.mubr.f32.mxu0 %v400
    %3403 = vmatmul.mubr.f32.gmra.mrb[0].mxu0 %v399
    %v3404 = vpop.f32.mrb[0].mxu0
    %v3405 = vadd.f32 %v2821, %v3404
    %v3406 = vpop.f32.mrb[0].mxu0
    %3407 = vmatprep.mubr.f32.mxu0 %v404
    %3408 = vmatmul.mubr.f32.gmra.mrb[0].mxu0 %v403
    %v3409 = vpop.f32.mrb[0].mxu0
    %v3410 = vadd.f32 %v2822, %v3409
    %v3411 = vpop.f32.mrb[0].mxu0
    %3412 = vmatprep.mubr.f32.mxu0 %v408
    %3413 = vmatmul.mubr.f32.gmra.mrb[0].mxu0 %v407
    %v3414 = vpop.f32.mrb[0].mxu0
    %v3415 = vadd.f32 %v2823, %v3414
    %v3416 = vpop.f32.mrb[0].mxu0
    %3417 = vmatprep.mubr.f32.mxu0 %v412
    %3418 = vmatmul.mubr.f32.gmra.mrb[0].mxu0 %v411
    %v3419 = vpop.f32.mrb[0].mxu0
    %v3420 = vadd.f32 %v2824, %v3419
    %v3421 = vpop.f32.mrb[0].mxu0
    %3422 = vmatprep.mubr.f32.mxu0 %v416
    %3423 = vmatmul.mubr.f32.gmra.mrb[0].mxu0 %v415
    %v3424 = vpop.f32.mrb[0].mxu0
    %v3425 = vadd.f32 %v2825, %v3424
    %v3426 = vpop.f32.mrb[0].mxu0
    %3427 = vmatprep.mubr.f32.mxu0 %v420
    %3428 = vmatmul.mubr.f32.gmra.mrb[0].mxu0 %v419
    %v3429 = vpop.f32.mrb[0].mxu0
    %v3430 = vadd.f32 %v2826, %v3429
    %v3431 = vpop.f32.mrb[0].mxu0
    %3432 = vmatprep.mubr.f32.mxu0 %v424
    %3433 = vmatmul.mubr.f32.gmra.mrb[0].mxu0 %v423
    %v3434 = vpop.f32.mrb[0].mxu0
    %v3435 = vadd.f32 %v2827, %v3434
    %v3436 = vpop.f32.mrb[0].mxu0
    %3437 = vmatprep.mubr.f32.mxu0 %v428
    %3438 = vmatmul.mubr.f32.gmra.mrb[0].mxu0 %v427
    %v3439 = vpop.f32.mrb[0].mxu0
    %v3440 = vadd.f32 %v2828, %v3439
    %v3441 = vpop.f32.mrb[0].mxu0
    %3442 = vmatprep.mubr.f32.mxu0 %v432
    %3443 = vmatmul.mubr.f32.gmra.mrb[0].mxu0 %v431
    %v3444 = vpop.f32.mrb[0].mxu0
    %v3445 = vadd.f32 %v2829, %v3444
    %v3446 = vpop.f32.mrb[0].mxu0
    %3447 = vmatprep.mubr.f32.mxu0 %v436
    %3448 = vmatmul.mubr.f32.gmra.mrb[0].mxu0 %v435
    %v3449 = vpop.f32.mrb[0].mxu0
    %v3450 = vadd.f32 %v2830, %v3449
    %v3451 = vpop.f32.mrb[0].mxu0
    %3452 = vmatprep.mubr.f32.mxu0 %v440
    %3453 = vmatmul.mubr.f32.gmra.mrb[0].mxu0 %v439
    %v3454 = vpop.f32.mrb[0].mxu0
    %v3455 = vadd.f32 %v2831, %v3454
    %v3456 = vpop.f32.mrb[0].mxu0
    %3457 = vmatprep.mubr.f32.mxu0 %v444
    %3458 = vmatmul.mubr.f32.gmra.mrb[0].mxu0 %v443
    %v3459 = vpop.f32.mrb[0].mxu0
    %v3460 = vadd.f32 %v2832, %v3459
    %v3461 = vpop.f32.mrb[0].mxu0
    %3462 = vmatprep.mubr.f32.mxu0 %v448
    %3463 = vmatmul.mubr.f32.gmra.mrb[0].mxu0 %v447
    %v3464 = vpop.f32.mrb[0].mxu0
    %v3465 = vadd.f32 %v2833, %v3464
    %v3466 = vpop.f32.mrb[0].mxu0
    %3467 = vmatprep.mubr.f32.mxu0 %v452
    %3468 = vmatmul.mubr.f32.gmra.mrb[0].mxu0 %v451
    %v3469 = vpop.f32.mrb[0].mxu0
    %v3470 = vadd.f32 %v2834, %v3469
    %v3471 = vpop.f32.mrb[0].mxu0
    %3472 = vmatprep.mubr.f32.mxu0 %v456
    %3473 = vmatmul.mubr.f32.gmra.mrb[0].mxu0 %v455
    %v3474 = vpop.f32.mrb[0].mxu0
    %v3475 = vadd.f32 %v2835, %v3474
    %v3476 = vpop.f32.mrb[0].mxu0
    %3477 = vmatprep.mubr.f32.mxu0 %v460
    %3478 = vmatmul.mubr.f32.gmra.mrb[0].mxu0 %v459
    %v3479 = vpop.f32.mrb[0].mxu0
    %v3480 = vadd.f32 %v2836, %v3479
    %v3481 = vpop.f32.mrb[0].mxu0
    %3482 = vmatprep.mubr.f32.mxu0 %v464
    %3483 = vmatmul.mubr.f32.gmra.mrb[0].mxu0 %v463
    %v3484 = vpop.f32.mrb[0].mxu0
    %v3485 = vadd.f32 %v2837, %v3484
    %v3486 = vpop.f32.mrb[0].mxu0
    %3487 = vmatprep.mubr.f32.mxu0 %v468
    %3488 = vmatmul.mubr.f32.gmra.mrb[0].mxu0 %v467
    %v3489 = vpop.f32.mrb[0].mxu0
    %v3490 = vadd.f32 %v2838, %v3489
    %v3491 = vpop.f32.mrb[0].mxu0
    %3492 = vmatprep.mubr.f32.mxu0 %v472
    %3493 = vmatmul.mubr.f32.gmra.mrb[0].mxu0 %v471
    %v3494 = vpop.f32.mrb[0].mxu0
    %v3495 = vadd.f32 %v2839, %v3494
    %v3496 = vpop.f32.mrb[0].mxu0
    %3497 = vmatprep.mubr.f32.mxu0 %v476
    %3498 = vmatmul.mubr.f32.gmra.mrb[0].mxu0 %v475
    %v3499 = vpop.f32.mrb[0].mxu0
    %v3500 = vadd.f32 %v2840, %v3499
    %v3501 = vpop.f32.mrb[0].mxu0
    %3502 = vmatprep.mubr.f32.mxu0 %v480
    %3503 = vmatmul.mubr.f32.gmra.mrb[0].mxu0 %v479
    %v3504 = vpop.f32.mrb[0].mxu0
    %v3505 = vadd.f32 %v2841, %v3504
    %v3506 = vpop.f32.mrb[0].mxu0
    %3507 = vmatprep.mubr.f32.mxu0 %v484
    %3508 = vmatmul.mubr.f32.gmra.mrb[0].mxu0 %v483
    %v3509 = vpop.f32.mrb[0].mxu0
    %v3510 = vadd.f32 %v2842, %v3509
    %v3511 = vpop.f32.mrb[0].mxu0
    %3512 = vmatprep.mubr.f32.mxu0 %v488
    %3513 = vmatmul.mubr.f32.gmra.mrb[0].mxu0 %v487
    %v3514 = vpop.f32.mrb[0].mxu0
    %v3515 = vadd.f32 %v2843, %v3514
    %v3516 = vpop.f32.mrb[0].mxu0
    %3517 = vdwg.mxu0
    %3518 = vmatprep.subr.mxu0 0.0
    %3519 = vmatpush1.msra.mxu0 %v3261
    %3520 = vmatprep.subr.mxu0 0.0
    %3521 = vmatpush1.msra.mxu0 %v3262
    %3522 = vmatprep.subr.mxu0 0.0
    %3523 = vmatpush1.msra.mxu0 %v3263
    %3524 = vmatprep.subr.mxu0 0.0
    %3525 = vmatpush1.msra.mxu0 %v3264
    %3526 = vmatprep.subr.mxu0 0.0
    %3527 = vmatpush1.msra.mxu0 %v3265
    %3528 = vmatprep.subr.mxu0 0.0
    %3529 = vmatpush1.msra.mxu0 %v3266
    %3530 = vmatprep.subr.mxu0 0.0
    %3531 = vmatpush1.msra.mxu0 %v3267
    %3532 = vmatprep.subr.mxu0 0.0
    %3533 = vmatpush1.msra.mxu0 %v3268
    %3534 = vmatprep.subr.mxu0 0.0
    %3535 = vmatpush1.msra.mxu0 %v3269
    %3536 = vmatprep.subr.mxu0 0.0
    %3537 = vmatpush1.msra.mxu0 %v3270
    %3538 = vmatprep.subr.mxu0 0.0
    %3539 = vmatpush1.msra.mxu0 %v3271
    %3540 = vmatprep.subr.mxu0 0.0
    %3541 = vmatpush1.msra.mxu0 %v3272
    %3542 = vmatprep.subr.mxu0 0.0
    %3543 = vmatpush1.msra.mxu0 %v3273
    %3544 = vmatprep.subr.mxu0 0.0
    %3545 = vmatpush1.msra.mxu0 %v3274
    %3546 = vmatprep.subr.mxu0 0.0
    %3547 = vmatpush1.msra.mxu0 %v3275
    %3548 = vmatprep.subr.mxu0 0.0
    %3549 = vmatpush1.msra.mxu0 %v3276
    %3550 = vmatprep.subr.mxu0 0.0
    %3551 = vmatpush1.msra.mxu0 %v3277
    %3552 = vmatprep.subr.mxu0 0.0
    %3553 = vmatpush1.msra.mxu0 %v3278
    %3554 = vmatprep.subr.mxu0 0.0
    %3555 = vmatpush1.msra.mxu0 %v3279
    %3556 = vmatprep.subr.mxu0 0.0
    %3557 = vmatpush1.msra.mxu0 %v3280
    %3558 = vmatprep.subr.mxu0 0.0
    %3559 = vmatpush1.msra.mxu0 %v3281
    %3560 = vmatprep.subr.mxu0 0.0
    %3561 = vmatpush1.msra.mxu0 %v3282
    %3562 = vmatprep.subr.mxu0 0.0
    %3563 = vmatpush1.msra.mxu0 %v3283
    %3564 = vmatprep.subr.mxu0 0.0
    %3565 = vmatpush1.msra.mxu0 %v3284
    %3566 = vmatprep.subr.mxu0 0.0
    %3567 = vmatpush1.msra.mxu0 %v3285
    %3568 = vmatprep.subr.mxu0 0.0
    %3569 = vmatpush1.msra.mxu0 %v3286
    %3570 = vmatprep.subr.mxu0 0.0
    %3571 = vmatpush1.msra.mxu0 %v3287
    %3572 = vmatprep.subr.mxu0 0.0
    %3573 = vmatpush1.msra.mxu0 %v3288
    %3574 = vmatprep.subr.mxu0 0.0
    %3575 = vmatpush1.msra.mxu0 %v3289
    %3576 = vmatprep.subr.mxu0 0.0
    %3577 = vmatpush1.msra.mxu0 %v3290
    %3578 = vmatprep.subr.mxu0 0.0
    %3579 = vmatpush1.msra.mxu0 %v3291
    %3580 = vmatprep.subr.mxu0 0.0
    %3581 = vmatpush1.msra.mxu0 %v3292
    %3582 = vmatprep.mubr.f32.mxu0 %v366
    %3583 = vmatmul.mubr.f32.gmra.mrb[0].mxu0 %v365
    %v3584 = vpop.f32.mrb[0].mxu0
    %v3585 = vadd.f32 %v3360, %v3584
    %v3586 = vpop.f32.mrb[0].mxu0
    %3587 = vmatprep.mubr.f32.mxu0 %v370
    %3588 = vmatmul.mubr.f32.gmra.mrb[0].mxu0 %v369
    %v3589 = vpop.f32.mrb[0].mxu0
    %v3590 = vadd.f32 %v3365, %v3589
    %v3591 = vpop.f32.mrb[0].mxu0
    %3592 = vmatprep.mubr.f32.mxu0 %v374
    %3593 = vmatmul.mubr.f32.gmra.mrb[0].mxu0 %v373
    %v3594 = vpop.f32.mrb[0].mxu0
    %v3595 = vadd.f32 %v3370, %v3594
    %v3596 = vpop.f32.mrb[0].mxu0
    %3597 = vmatprep.mubr.f32.mxu0 %v378
    %3598 = vmatmul.mubr.f32.gmra.mrb[0].mxu0 %v377
    %v3599 = vpop.f32.mrb[0].mxu0
    %v3600 = vadd.f32 %v3375, %v3599
    %v3601 = vpop.f32.mrb[0].mxu0
    %3602 = vmatprep.mubr.f32.mxu0 %v382
    %3603 = vmatmul.mubr.f32.gmra.mrb[0].mxu0 %v381
    %v3604 = vpop.f32.mrb[0].mxu0
    %v3605 = vadd.f32 %v3380, %v3604
    %v3606 = vpop.f32.mrb[0].mxu0
    %3607 = vmatprep.mubr.f32.mxu0 %v386
    %3608 = vmatmul.mubr.f32.gmra.mrb[0].mxu0 %v385
    %v3609 = vpop.f32.mrb[0].mxu0
    %v3610 = vadd.f32 %v3385, %v3609
    %v3611 = vpop.f32.mrb[0].mxu0
    %3612 = vmatprep.mubr.f32.mxu0 %v390
    %3613 = vmatmul.mubr.f32.gmra.mrb[0].mxu0 %v389
    %v3614 = vpop.f32.mrb[0].mxu0
    %v3615 = vadd.f32 %v3390, %v3614
    %v3616 = vpop.f32.mrb[0].mxu0
    %3617 = vmatprep.mubr.f32.mxu0 %v394
    %3618 = vmatmul.mubr.f32.gmra.mrb[0].mxu0 %v393
    %v3619 = vpop.f32.mrb[0].mxu0
    %v3620 = vadd.f32 %v3395, %v3619
    %v3621 = vpop.f32.mrb[0].mxu0
    %3622 = vmatprep.mubr.f32.mxu0 %v398
    %3623 = vmatmul.mubr.f32.gmra.mrb[0].mxu0 %v397
    %v3624 = vpop.f32.mrb[0].mxu0
    %v3625 = vadd.f32 %v3400, %v3624
    %v3626 = vpop.f32.mrb[0].mxu0
    %3627 = vmatprep.mubr.f32.mxu0 %v402
    %3628 = vmatmul.mubr.f32.gmra.mrb[0].mxu0 %v401
    %v3629 = vpop.f32.mrb[0].mxu0
    %v3630 = vadd.f32 %v3405, %v3629
    %v3631 = vpop.f32.mrb[0].mxu0
    %3632 = vmatprep.mubr.f32.mxu0 %v406
    %3633 = vmatmul.mubr.f32.gmra.mrb[0].mxu0 %v405
    %v3634 = vpop.f32.mrb[0].mxu0
    %v3635 = vadd.f32 %v3410, %v3634
    %v3636 = vpop.f32.mrb[0].mxu0
    %3637 = vmatprep.mubr.f32.mxu0 %v410
    %3638 = vmatmul.mubr.f32.gmra.mrb[0].mxu0 %v409
    %v3639 = vpop.f32.mrb[0].mxu0
    %v3640 = vadd.f32 %v3415, %v3639
    %v3641 = vpop.f32.mrb[0].mxu0
    %3642 = vmatprep.mubr.f32.mxu0 %v414
    %3643 = vmatmul.mubr.f32.gmra.mrb[0].mxu0 %v413
    %v3644 = vpop.f32.mrb[0].mxu0
    %v3645 = vadd.f32 %v3420, %v3644
    %v3646 = vpop.f32.mrb[0].mxu0
    %3647 = vmatprep.mubr.f32.mxu0 %v418
    %3648 = vmatmul.mubr.f32.gmra.mrb[0].mxu0 %v417
    %v3649 = vpop.f32.mrb[0].mxu0
    %v3650 = vadd.f32 %v3425, %v3649
    %v3651 = vpop.f32.mrb[0].mxu0
    %3652 = vmatprep.mubr.f32.mxu0 %v422
    %3653 = vmatmul.mubr.f32.gmra.mrb[0].mxu0 %v421
    %v3654 = vpop.f32.mrb[0].mxu0
    %v3655 = vadd.f32 %v3430, %v3654
    %v3656 = vpop.f32.mrb[0].mxu0
    %3657 = vmatprep.mubr.f32.mxu0 %v426
    %3658 = vmatmul.mubr.f32.gmra.mrb[0].mxu0 %v425
    %v3659 = vpop.f32.mrb[0].mxu0
    %v3660 = vadd.f32 %v3435, %v3659
    %v3661 = vpop.f32.mrb[0].mxu0
    %3662 = vmatprep.mubr.f32.mxu0 %v430
    %3663 = vmatmul.mubr.f32.gmra.mrb[0].mxu0 %v429
    %v3664 = vpop.f32.mrb[0].mxu0
    %v3665 = vadd.f32 %v3440, %v3664
    %v3666 = vpop.f32.mrb[0].mxu0
    %3667 = vmatprep.mubr.f32.mxu0 %v434
    %3668 = vmatmul.mubr.f32.gmra.mrb[0].mxu0 %v433
    %v3669 = vpop.f32.mrb[0].mxu0
    %v3670 = vadd.f32 %v3445, %v3669
    %v3671 = vpop.f32.mrb[0].mxu0
    %3672 = vmatprep.mubr.f32.mxu0 %v438
    %3673 = vmatmul.mubr.f32.gmra.mrb[0].mxu0 %v437
    %v3674 = vpop.f32.mrb[0].mxu0
    %v3675 = vadd.f32 %v3450, %v3674
    %v3676 = vpop.f32.mrb[0].mxu0
    %3677 = vmatprep.mubr.f32.mxu0 %v442
    %3678 = vmatmul.mubr.f32.gmra.mrb[0].mxu0 %v441
    %v3679 = vpop.f32.mrb[0].mxu0
    %v3680 = vadd.f32 %v3455, %v3679
    %v3681 = vpop.f32.mrb[0].mxu0
    %3682 = vmatprep.mubr.f32.mxu0 %v446
    %3683 = vmatmul.mubr.f32.gmra.mrb[0].mxu0 %v445
    %v3684 = vpop.f32.mrb[0].mxu0
    %v3685 = vadd.f32 %v3460, %v3684
    %v3686 = vpop.f32.mrb[0].mxu0
    %3687 = vmatprep.mubr.f32.mxu0 %v450
    %3688 = vmatmul.mubr.f32.gmra.mrb[0].mxu0 %v449
    %v3689 = vpop.f32.mrb[0].mxu0
    %v3690 = vadd.f32 %v3465, %v3689
    %v3691 = vpop.f32.mrb[0].mxu0
    %3692 = vmatprep.mubr.f32.mxu0 %v454
    %3693 = vmatmul.mubr.f32.gmra.mrb[0].mxu0 %v453
    %v3694 = vpop.f32.mrb[0].mxu0
    %v3695 = vadd.f32 %v3470, %v3694
    %v3696 = vpop.f32.mrb[0].mxu0
    %3697 = vmatprep.mubr.f32.mxu0 %v458
    %3698 = vmatmul.mubr.f32.gmra.mrb[0].mxu0 %v457
    %v3699 = vpop.f32.mrb[0].mxu0
    %v3700 = vadd.f32 %v3475, %v3699
    %v3701 = vpop.f32.mrb[0].mxu0
    %3702 = vmatprep.mubr.f32.mxu0 %v462
    %3703 = vmatmul.mubr.f32.gmra.mrb[0].mxu0 %v461
    %v3704 = vpop.f32.mrb[0].mxu0
    %v3705 = vadd.f32 %v3480, %v3704
    %v3706 = vpop.f32.mrb[0].mxu0
    %3707 = vmatprep.mubr.f32.mxu0 %v466
    %3708 = vmatmul.mubr.f32.gmra.mrb[0].mxu0 %v465
    %v3709 = vpop.f32.mrb[0].mxu0
    %v3710 = vadd.f32 %v3485, %v3709
    %v3711 = vpop.f32.mrb[0].mxu0
    %3712 = vmatprep.mubr.f32.mxu0 %v470
    %3713 = vmatmul.mubr.f32.gmra.mrb[0].mxu0 %v469
    %v3714 = vpop.f32.mrb[0].mxu0
    %v3715 = vadd.f32 %v3490, %v3714
    %v3716 = vpop.f32.mrb[0].mxu0
    %3717 = vmatprep.mubr.f32.mxu0 %v474
    %3718 = vmatmul.mubr.f32.gmra.mrb[0].mxu0 %v473
    %v3719 = vpop.f32.mrb[0].mxu0
    %v3720 = vadd.f32 %v3495, %v3719
    %v3721 = vpop.f32.mrb[0].mxu0
    %3722 = vmatprep.mubr.f32.mxu0 %v478
    %3723 = vmatmul.mubr.f32.gmra.mrb[0].mxu0 %v477
    %v3724 = vpop.f32.mrb[0].mxu0
    %v3725 = vadd.f32 %v3500, %v3724
    %v3726 = vpop.f32.mrb[0].mxu0
    %3727 = vmatprep.mubr.f32.mxu0 %v482
    %3728 = vmatmul.mubr.f32.gmra.mrb[0].mxu0 %v481
    %v3729 = vpop.f32.mrb[0].mxu0
    %v3730 = vadd.f32 %v3505, %v3729
    %v3731 = vpop.f32.mrb[0].mxu0
    %3732 = vmatprep.mubr.f32.mxu0 %v486
    %3733 = vmatmul.mubr.f32.gmra.mrb[0].mxu0 %v485
    %v3734 = vpop.f32.mrb[0].mxu0
    %v3735 = vadd.f32 %v3510, %v3734
    %v3736 = vpop.f32.mrb[0].mxu0
    %3737 = vmatprep.mubr.f32.mxu0 %v490
    %3738 = vmatmul.mubr.f32.gmra.mrb[0].mxu0 %v489
    %v3739 = vpop.f32.mrb[0].mxu0
    %v3740 = vadd.f32 %v3515, %v3739
    %v3741 = vpop.f32.mrb[0].mxu0
    %3742 = vdwg.mxu0
    %v3743 = vld [vmem:[#allocation11 + $0x200] sm:$0xff]
    %v3744 = vld [vmem:[#allocation11 + $0x208] sm:$0xff]
    %v3745 = vld [vmem:[#allocation11 + $0x210] sm:$0xff]
    %v3746 = vld [vmem:[#allocation11 + $0x218] sm:$0xff]
    %v3747 = vld [vmem:[#allocation11 + $0x220] sm:$0xff]
    %v3748 = vld [vmem:[#allocation11 + $0x228] sm:$0xff]
    %v3749 = vld [vmem:[#allocation11 + $0x230] sm:$0xff]
    %v3750 = vld [vmem:[#allocation11 + $0x238] sm:$0xff]
    %v3751 = vld [vmem:[#allocation11 + $0x240] sm:$0xff]
    %v3752 = vld [vmem:[#allocation11 + $0x248] sm:$0xff]
    %v3753 = vld [vmem:[#allocation11 + $0x250] sm:$0xff]
    %v3754 = vld [vmem:[#allocation11 + $0x258] sm:$0xff]
    %v3755 = vld [vmem:[#allocation11 + $0x260] sm:$0xff]
    %v3756 = vld [vmem:[#allocation11 + $0x268] sm:$0xff]
    %v3757 = vld [vmem:[#allocation11 + $0x270] sm:$0xff]
    %v3758 = vld [vmem:[#allocation11 + $0x278] sm:$0xff]
    %v3759 = vld [vmem:[%s6 + $0x8] sm:$0x1]
    %v3760 = vlaneseq
    %v3761 = vshrl.u32 %v3760, 7
    %v3762 = vsub.s32 0, %v3761
    %v3763 = vrot.slane %v3759, %v3762
    %3764 = vmatprep.subr.mxu0 0.0
    %3765 = vmatpush1.msra.mxu0 %v3743
    %3766 = vmatprep.subr.mxu0 0.0
    %3767 = vmatpush1.msra.mxu0 %v3744
    %3768 = vmatprep.subr.mxu0 0.0
    %3769 = vmatpush1.msra.mxu0 %v3745
    %3770 = vmatprep.subr.mxu0 0.0
    %3771 = vmatpush1.msra.mxu0 %v3746
    %3772 = vmatprep.subr.mxu0 0.0
    %3773 = vmatpush1.msra.mxu0 %v3747
    %3774 = vmatprep.subr.mxu0 0.0
    %3775 = vmatpush1.msra.mxu0 %v3748
    %3776 = vmatprep.subr.mxu0 0.0
    %3777 = vmatpush1.msra.mxu0 %v3749
    %3778 = vmatprep.subr.mxu0 0.0
    %3779 = vmatpush1.msra.mxu0 %v3750
    %3780 = vmatprep.subr.mxu0 0.0
    %3781 = vmatpush1.msra.mxu0 %v3751
    %3782 = vmatprep.subr.mxu0 0.0
    %3783 = vmatpush1.msra.mxu0 %v3752
    %3784 = vmatprep.subr.mxu0 0.0
    %3785 = vmatpush1.msra.mxu0 %v3753
    %3786 = vmatprep.subr.mxu0 0.0
    %3787 = vmatpush1.msra.mxu0 %v3754
    %3788 = vmatprep.subr.mxu0 0.0
    %3789 = vmatpush1.msra.mxu0 %v3755
    %3790 = vmatprep.subr.mxu0 0.0
    %3791 = vmatpush1.msra.mxu0 %v3756
    %3792 = vmatprep.subr.mxu0 0.0
    %3793 = vmatpush1.msra.mxu0 %v3757
    %3794 = vmatprep.subr.mxu0 0.0
    %3795 = vmatpush1.msra.mxu0 %v3758
    %3796 = vmatprep.subr.mxu0 0.0
    %3797 = vmatpush1.msra.mxu0 0.0
    %3798 = vmatprep.subr.mxu0 0.0
    %3799 = vmatpush1.msra.mxu0 0.0
    %3800 = vmatprep.subr.mxu0 0.0
    %3801 = vmatpush1.msra.mxu0 0.0
    %3802 = vmatprep.subr.mxu0 0.0
    %3803 = vmatpush1.msra.mxu0 0.0
    %3804 = vmatprep.subr.mxu0 0.0
    %3805 = vmatpush1.msra.mxu0 0.0
    %3806 = vmatprep.subr.mxu0 0.0
    %3807 = vmatpush1.msra.mxu0 0.0
    %3808 = vmatprep.subr.mxu0 0.0
    %3809 = vmatpush1.msra.mxu0 0.0
    %3810 = vmatprep.subr.mxu0 0.0
    %3811 = vmatpush1.msra.mxu0 0.0
    %3812 = vmatprep.subr.mxu0 0.0
    %3813 = vmatpush1.msra.mxu0 0.0
    %3814 = vmatprep.subr.mxu0 0.0
    %3815 = vmatpush1.msra.mxu0 0.0
    %3816 = vmatprep.subr.mxu0 0.0
    %3817 = vmatpush1.msra.mxu0 0.0
    %3818 = vmatprep.subr.mxu0 0.0
    %3819 = vmatpush1.msra.mxu0 0.0
    %3820 = vmatprep.subr.mxu0 0.0
    %3821 = vmatpush1.msra.mxu0 0.0
    %3822 = vmatprep.subr.mxu0 0.0
    %3823 = vmatpush1.msra.mxu0 0.0
    %3824 = vmatprep.subr.mxu0 0.0
    %3825 = vmatpush1.msra.mxu0 0.0
    %3826 = vmatprep.subr.mxu0 0.0
    %3827 = vmatpush1.msra.mxu0 0.0
    %3828 = vmatprep.mubr.f32.mxu0 0.0
    %3829 = vmatmul.mubr.f32.gmra.mrb[0].mxu0 %v3585
    %v3830 = vpop.f32.mrb[0].mxu0
    %v3831 = vadd.f32 %v3763, %v3830
    %v3832 = vpop.f32.mrb[0].mxu0
    %3833 = vmatprep.mubr.f32.mxu0 0.0
    %3834 = vmatmul.mubr.f32.gmra.mrb[0].mxu0 %v3590
    %v3835 = vpop.f32.mrb[0].mxu0
    %v3836 = vadd.f32 %v3763, %v3835
    %v3837 = vpop.f32.mrb[0].mxu0
    %3838 = vmatprep.mubr.f32.mxu0 0.0
    %3839 = vmatmul.mubr.f32.gmra.mrb[0].mxu0 %v3595
    %v3840 = vpop.f32.mrb[0].mxu0
    %v3841 = vadd.f32 %v3763, %v3840
    %v3842 = vpop.f32.mrb[0].mxu0
    %3843 = vmatprep.mubr.f32.mxu0 0.0
    %3844 = vmatmul.mubr.f32.gmra.mrb[0].mxu0 %v3600
    %v3845 = vpop.f32.mrb[0].mxu0
    %v3846 = vadd.f32 %v3763, %v3845
    %v3847 = vpop.f32.mrb[0].mxu0
    %3848 = vmatprep.mubr.f32.mxu0 0.0
    %3849 = vmatmul.mubr.f32.gmra.mrb[0].mxu0 %v3605
    %v3850 = vpop.f32.mrb[0].mxu0
    %v3851 = vadd.f32 %v3763, %v3850
    %v3852 = vpop.f32.mrb[0].mxu0
    %3853 = vmatprep.mubr.f32.mxu0 0.0
    %3854 = vmatmul.mubr.f32.gmra.mrb[0].mxu0 %v3610
    %v3855 = vpop.f32.mrb[0].mxu0
    %v3856 = vadd.f32 %v3763, %v3855
    %v3857 = vpop.f32.mrb[0].mxu0
    %3858 = vmatprep.mubr.f32.mxu0 0.0
    %3859 = vmatmul.mubr.f32.gmra.mrb[0].mxu0 %v3615
    %v3860 = vpop.f32.mrb[0].mxu0
    %v3861 = vadd.f32 %v3763, %v3860
    %v3862 = vpop.f32.mrb[0].mxu0
    %3863 = vmatprep.mubr.f32.mxu0 0.0
    %3864 = vmatmul.mubr.f32.gmra.mrb[0].mxu0 %v3620
    %v3865 = vpop.f32.mrb[0].mxu0
    %v3866 = vadd.f32 %v3763, %v3865
    %v3867 = vpop.f32.mrb[0].mxu0
    %3868 = vmatprep.mubr.f32.mxu0 0.0
    %3869 = vmatmul.mubr.f32.gmra.mrb[0].mxu0 %v3625
    %v3870 = vpop.f32.mrb[0].mxu0
    %v3871 = vadd.f32 %v3763, %v3870
    %v3872 = vpop.f32.mrb[0].mxu0
    %3873 = vmatprep.mubr.f32.mxu0 0.0
    %3874 = vmatmul.mubr.f32.gmra.mrb[0].mxu0 %v3630
    %v3875 = vpop.f32.mrb[0].mxu0
    %v3876 = vadd.f32 %v3763, %v3875
    %v3877 = vpop.f32.mrb[0].mxu0
    %3878 = vmatprep.mubr.f32.mxu0 0.0
    %3879 = vmatmul.mubr.f32.gmra.mrb[0].mxu0 %v3635
    %v3880 = vpop.f32.mrb[0].mxu0
    %v3881 = vadd.f32 %v3763, %v3880
    %v3882 = vpop.f32.mrb[0].mxu0
    %3883 = vmatprep.mubr.f32.mxu0 0.0
    %3884 = vmatmul.mubr.f32.gmra.mrb[0].mxu0 %v3640
    %v3885 = vpop.f32.mrb[0].mxu0
    %v3886 = vadd.f32 %v3763, %v3885
    %v3887 = vpop.f32.mrb[0].mxu0
    %3888 = vmatprep.mubr.f32.mxu0 0.0
    %3889 = vmatmul.mubr.f32.gmra.mrb[0].mxu0 %v3645
    %v3890 = vpop.f32.mrb[0].mxu0
    %v3891 = vadd.f32 %v3763, %v3890
    %v3892 = vpop.f32.mrb[0].mxu0
    %3893 = vmatprep.mubr.f32.mxu0 0.0
    %3894 = vmatmul.mubr.f32.gmra.mrb[0].mxu0 %v3650
    %v3895 = vpop.f32.mrb[0].mxu0
    %v3896 = vadd.f32 %v3763, %v3895
    %v3897 = vpop.f32.mrb[0].mxu0
    %3898 = vmatprep.mubr.f32.mxu0 0.0
    %3899 = vmatmul.mubr.f32.gmra.mrb[0].mxu0 %v3655
    %v3900 = vpop.f32.mrb[0].mxu0
    %v3901 = vadd.f32 %v3763, %v3900
    %v3902 = vpop.f32.mrb[0].mxu0
    %3903 = vmatprep.mubr.f32.mxu0 0.0
    %3904 = vmatmul.mubr.f32.gmra.mrb[0].mxu0 %v3660
    %v3905 = vpop.f32.mrb[0].mxu0
    %v3906 = vadd.f32 %v3763, %v3905
    %v3907 = vpop.f32.mrb[0].mxu0
    %3908 = vmatprep.mubr.f32.mxu0 0.0
    %3909 = vmatmul.mubr.f32.gmra.mrb[0].mxu0 %v3665
    %v3910 = vpop.f32.mrb[0].mxu0
    %v3911 = vadd.f32 %v3763, %v3910
    %v3912 = vpop.f32.mrb[0].mxu0
    %3913 = vmatprep.mubr.f32.mxu0 0.0
    %3914 = vmatmul.mubr.f32.gmra.mrb[0].mxu0 %v3670
    %v3915 = vpop.f32.mrb[0].mxu0
    %v3916 = vadd.f32 %v3763, %v3915
    %v3917 = vpop.f32.mrb[0].mxu0
    %3918 = vmatprep.mubr.f32.mxu0 0.0
    %3919 = vmatmul.mubr.f32.gmra.mrb[0].mxu0 %v3675
    %v3920 = vpop.f32.mrb[0].mxu0
    %v3921 = vadd.f32 %v3763, %v3920
    %v3922 = vpop.f32.mrb[0].mxu0
    %3923 = vmatprep.mubr.f32.mxu0 0.0
    %3924 = vmatmul.mubr.f32.gmra.mrb[0].mxu0 %v3680
    %v3925 = vpop.f32.mrb[0].mxu0
    %v3926 = vadd.f32 %v3763, %v3925
    %v3927 = vpop.f32.mrb[0].mxu0
    %3928 = vmatprep.mubr.f32.mxu0 0.0
    %3929 = vmatmul.mubr.f32.gmra.mrb[0].mxu0 %v3685
    %v3930 = vpop.f32.mrb[0].mxu0
    %v3931 = vadd.f32 %v3763, %v3930
    %v3932 = vpop.f32.mrb[0].mxu0
    %3933 = vmatprep.mubr.f32.mxu0 0.0
    %3934 = vmatmul.mubr.f32.gmra.mrb[0].mxu0 %v3690
    %v3935 = vpop.f32.mrb[0].mxu0
    %v3936 = vadd.f32 %v3763, %v3935
    %v3937 = vpop.f32.mrb[0].mxu0
    %3938 = vmatprep.mubr.f32.mxu0 0.0
    %3939 = vmatmul.mubr.f32.gmra.mrb[0].mxu0 %v3695
    %v3940 = vpop.f32.mrb[0].mxu0
    %v3941 = vadd.f32 %v3763, %v3940
    %v3942 = vpop.f32.mrb[0].mxu0
    %3943 = vmatprep.mubr.f32.mxu0 0.0
    %3944 = vmatmul.mubr.f32.gmra.mrb[0].mxu0 %v3700
    %v3945 = vpop.f32.mrb[0].mxu0
    %v3946 = vadd.f32 %v3763, %v3945
    %v3947 = vpop.f32.mrb[0].mxu0
    %3948 = vmatprep.mubr.f32.mxu0 0.0
    %3949 = vmatmul.mubr.f32.gmra.mrb[0].mxu0 %v3705
    %v3950 = vpop.f32.mrb[0].mxu0
    %v3951 = vadd.f32 %v3763, %v3950
    %v3952 = vpop.f32.mrb[0].mxu0
    %3953 = vmatprep.mubr.f32.mxu0 0.0
    %3954 = vmatmul.mubr.f32.gmra.mrb[0].mxu0 %v3710
    %v3955 = vpop.f32.mrb[0].mxu0
    %v3956 = vadd.f32 %v3763, %v3955
    %v3957 = vpop.f32.mrb[0].mxu0
    %3958 = vmatprep.mubr.f32.mxu0 0.0
    %3959 = vmatmul.mubr.f32.gmra.mrb[0].mxu0 %v3715
    %v3960 = vpop.f32.mrb[0].mxu0
    %v3961 = vadd.f32 %v3763, %v3960
    %v3962 = vpop.f32.mrb[0].mxu0
    %3963 = vmatprep.mubr.f32.mxu0 0.0
    %3964 = vmatmul.mubr.f32.gmra.mrb[0].mxu0 %v3720
    %v3965 = vpop.f32.mrb[0].mxu0
    %v3966 = vadd.f32 %v3763, %v3965
    %v3967 = vpop.f32.mrb[0].mxu0
    %3968 = vmatprep.mubr.f32.mxu0 0.0
    %3969 = vmatmul.mubr.f32.gmra.mrb[0].mxu0 %v3725
    %v3970 = vpop.f32.mrb[0].mxu0
    %v3971 = vadd.f32 %v3763, %v3970
    %v3972 = vpop.f32.mrb[0].mxu0
    %3973 = vmatprep.mubr.f32.mxu0 0.0
    %3974 = vmatmul.mubr.f32.gmra.mrb[0].mxu0 %v3730
    %v3975 = vpop.f32.mrb[0].mxu0
    %v3976 = vadd.f32 %v3763, %v3975
    %v3977 = vpop.f32.mrb[0].mxu0
    %3978 = vmatprep.mubr.f32.mxu0 0.0
    %3979 = vmatmul.mubr.f32.gmra.mrb[0].mxu0 %v3735
    %v3980 = vpop.f32.mrb[0].mxu0
    %v3981 = vadd.f32 %v3763, %v3980
    %v3982 = vpop.f32.mrb[0].mxu0
    %3983 = vmatprep.mubr.f32.mxu0 0.0
    %3984 = vmatmul.mubr.f32.gmra.mrb[0].mxu0 %v3740
    %v3985 = vpop.f32.mrb[0].mxu0
    %v3986 = vadd.f32 %v3763, %v3985
    %v3987 = vpop.f32.mrb[0].mxu0
    %3988 = vdwg.mxu0
    %v3989 = vmax.f32 %v3831, 0.0
    %v3990 = vmax.f32 %v3836, 0.0
    %v3991 = vmax.f32 %v3841, 0.0
    %v3992 = vmax.f32 %v3846, 0.0
    %v3993 = vmax.f32 %v3851, 0.0
    %v3994 = vmax.f32 %v3856, 0.0
    %v3995 = vmax.f32 %v3861, 0.0
    %v3996 = vmax.f32 %v3866, 0.0
    %v3997 = vmax.f32 %v3871, 0.0
    %v3998 = vmax.f32 %v3876, 0.0
    %v3999 = vmax.f32 %v3881, 0.0
    %v4000 = vmax.f32 %v3886, 0.0
    %v4001 = vmax.f32 %v3891, 0.0
    %v4002 = vmax.f32 %v3896, 0.0
    %v4003 = vmax.f32 %v3901, 0.0
    %v4004 = vmax.f32 %v3906, 0.0
    %v4005 = vmax.f32 %v3911, 0.0
    %v4006 = vmax.f32 %v3916, 0.0
    %v4007 = vmax.f32 %v3921, 0.0
    %v4008 = vmax.f32 %v3926, 0.0
    %v4009 = vmax.f32 %v3931, 0.0
    %v4010 = vmax.f32 %v3936, 0.0
    %v4011 = vmax.f32 %v3941, 0.0
    %v4012 = vmax.f32 %v3946, 0.0
    %v4013 = vmax.f32 %v3951, 0.0
    %v4014 = vmax.f32 %v3956, 0.0
    %v4015 = vmax.f32 %v3961, 0.0
    %v4016 = vmax.f32 %v3966, 0.0
    %v4017 = vmax.f32 %v3971, 0.0
    %v4018 = vmax.f32 %v3976, 0.0
    %v4019 = vmax.f32 %v3981, 0.0
    %v4020 = vmax.f32 %v3986, 0.0
    %v4021 = vld [vmem:[#allocation11 + $0x280] sm:$0xff]
    %v4022 = vld [vmem:[#allocation11 + $0x288] sm:$0xff]
    %v4023 = vld [vmem:[#allocation11 + $0x290] sm:$0xff]
    %v4024 = vld [vmem:[#allocation11 + $0x298] sm:$0xff]
    %v4025 = vld [vmem:[#allocation11 + $0x2a0] sm:$0xff]
    %v4026 = vld [vmem:[#allocation11 + $0x2a8] sm:$0xff]
    %v4027 = vld [vmem:[#allocation11 + $0x2b0] sm:$0xff]
    %v4028 = vld [vmem:[#allocation11 + $0x2b8] sm:$0xff]
    %v4029 = vld [vmem:[#allocation11 + $0x2c0] sm:$0xff]
    %v4030 = vld [vmem:[#allocation11 + $0x2c8] sm:$0xff]
    %v4031 = vld [vmem:[#allocation11 + $0x2d0] sm:$0xff]
    %v4032 = vld [vmem:[#allocation11 + $0x2d8] sm:$0xff]
    %v4033 = vld [vmem:[#allocation11 + $0x2e0] sm:$0xff]
    %v4034 = vld [vmem:[#allocation11 + $0x2e8] sm:$0xff]
    %v4035 = vld [vmem:[#allocation11 + $0x2f0] sm:$0xff]
    %v4036 = vld [vmem:[#allocation11 + $0x2f8] sm:$0xff]
    %v4037 = vld [vmem:[%s6 + $0x9] sm:$0x1]
    %v4038 = vlaneseq
    %v4039 = vshrl.u32 %v4038, 7
    %v4040 = vsub.s32 0, %v4039
    %v4041 = vrot.slane %v4037, %v4040
    %4042 = vmatprep.subr.mxu0 0.0
    %4043 = vmatpush1.msra.mxu0 %v4021
    %4044 = vmatprep.subr.mxu0 0.0
    %4045 = vmatpush1.msra.mxu0 %v4022
    %4046 = vmatprep.subr.mxu0 0.0
    %4047 = vmatpush1.msra.mxu0 %v4023
    %4048 = vmatprep.subr.mxu0 0.0
    %4049 = vmatpush1.msra.mxu0 %v4024
    %4050 = vmatprep.subr.mxu0 0.0
    %4051 = vmatpush1.msra.mxu0 %v4025
    %4052 = vmatprep.subr.mxu0 0.0
    %4053 = vmatpush1.msra.mxu0 %v4026
    %4054 = vmatprep.subr.mxu0 0.0
    %4055 = vmatpush1.msra.mxu0 %v4027
    %4056 = vmatprep.subr.mxu0 0.0
    %4057 = vmatpush1.msra.mxu0 %v4028
    %4058 = vmatprep.subr.mxu0 0.0
    %4059 = vmatpush1.msra.mxu0 %v4029
    %4060 = vmatprep.subr.mxu0 0.0
    %4061 = vmatpush1.msra.mxu0 %v4030
    %4062 = vmatprep.subr.mxu0 0.0
    %4063 = vmatpush1.msra.mxu0 %v4031
    %4064 = vmatprep.subr.mxu0 0.0
    %4065 = vmatpush1.msra.mxu0 %v4032
    %4066 = vmatprep.subr.mxu0 0.0
    %4067 = vmatpush1.msra.mxu0 %v4033
    %4068 = vmatprep.subr.mxu0 0.0
    %4069 = vmatpush1.msra.mxu0 %v4034
    %4070 = vmatprep.subr.mxu0 0.0
    %4071 = vmatpush1.msra.mxu0 %v4035
    %4072 = vmatprep.subr.mxu0 0.0
    %4073 = vmatpush1.msra.mxu0 %v4036
    %4074 = vmatprep.subr.mxu0 0.0
    %4075 = vmatpush1.msra.mxu0 0.0
    %4076 = vmatprep.subr.mxu0 0.0
    %4077 = vmatpush1.msra.mxu0 0.0
    %4078 = vmatprep.subr.mxu0 0.0
    %4079 = vmatpush1.msra.mxu0 0.0
    %4080 = vmatprep.subr.mxu0 0.0
    %4081 = vmatpush1.msra.mxu0 0.0
    %4082 = vmatprep.subr.mxu0 0.0
    %4083 = vmatpush1.msra.mxu0 0.0
    %4084 = vmatprep.subr.mxu0 0.0
    %4085 = vmatpush1.msra.mxu0 0.0
    %4086 = vmatprep.subr.mxu0 0.0
    %4087 = vmatpush1.msra.mxu0 0.0
    %4088 = vmatprep.subr.mxu0 0.0
    %4089 = vmatpush1.msra.mxu0 0.0
    %4090 = vmatprep.subr.mxu0 0.0
    %4091 = vmatpush1.msra.mxu0 0.0
    %4092 = vmatprep.subr.mxu0 0.0
    %4093 = vmatpush1.msra.mxu0 0.0
    %4094 = vmatprep.subr.mxu0 0.0
    %4095 = vmatpush1.msra.mxu0 0.0
    %4096 = vmatprep.subr.mxu0 0.0
    %4097 = vmatpush1.msra.mxu0 0.0
    %4098 = vmatprep.subr.mxu0 0.0
    %4099 = vmatpush1.msra.mxu0 0.0
    %4100 = vmatprep.subr.mxu0 0.0
    %4101 = vmatpush1.msra.mxu0 0.0
    %4102 = vmatprep.subr.mxu0 0.0
    %4103 = vmatpush1.msra.mxu0 0.0
    %4104 = vmatprep.subr.mxu0 0.0
    %4105 = vmatpush1.msra.mxu0 0.0
    %4106 = vmatprep.mubr.f32.mxu0 0.0
    %4107 = vmatmul.mubr.f32.gmra.mrb[0].mxu0 %v3989
    %v4108 = vpop.f32.mrb[0].mxu0
    %v4109 = vadd.f32 %v4041, %v4108
    %v4110 = vpop.f32.mrb[0].mxu0
    %4111 = vmatprep.mubr.f32.mxu0 0.0
    %4112 = vmatmul.mubr.f32.gmra.mrb[0].mxu0 %v3990
    %v4113 = vpop.f32.mrb[0].mxu0
    %v4114 = vadd.f32 %v4041, %v4113
    %v4115 = vpop.f32.mrb[0].mxu0
    %4116 = vmatprep.mubr.f32.mxu0 0.0
    %4117 = vmatmul.mubr.f32.gmra.mrb[0].mxu0 %v3991
    %v4118 = vpop.f32.mrb[0].mxu0
    %v4119 = vadd.f32 %v4041, %v4118
    %v4120 = vpop.f32.mrb[0].mxu0
    %4121 = vmatprep.mubr.f32.mxu0 0.0
    %4122 = vmatmul.mubr.f32.gmra.mrb[0].mxu0 %v3992
    %v4123 = vpop.f32.mrb[0].mxu0
    %v4124 = vadd.f32 %v4041, %v4123
    %v4125 = vpop.f32.mrb[0].mxu0
    %4126 = vmatprep.mubr.f32.mxu0 0.0
    %4127 = vmatmul.mubr.f32.gmra.mrb[0].mxu0 %v3993
    %v4128 = vpop.f32.mrb[0].mxu0
    %v4129 = vadd.f32 %v4041, %v4128
    %v4130 = vpop.f32.mrb[0].mxu0
    %4131 = vmatprep.mubr.f32.mxu0 0.0
    %4132 = vmatmul.mubr.f32.gmra.mrb[0].mxu0 %v3994
    %v4133 = vpop.f32.mrb[0].mxu0
    %v4134 = vadd.f32 %v4041, %v4133
    %v4135 = vpop.f32.mrb[0].mxu0
    %4136 = vmatprep.mubr.f32.mxu0 0.0
    %4137 = vmatmul.mubr.f32.gmra.mrb[0].mxu0 %v3995
    %v4138 = vpop.f32.mrb[0].mxu0
    %v4139 = vadd.f32 %v4041, %v4138
    %v4140 = vpop.f32.mrb[0].mxu0
    %4141 = vmatprep.mubr.f32.mxu0 0.0
    %4142 = vmatmul.mubr.f32.gmra.mrb[0].mxu0 %v3996
    %v4143 = vpop.f32.mrb[0].mxu0
    %v4144 = vadd.f32 %v4041, %v4143
    %v4145 = vpop.f32.mrb[0].mxu0
    %4146 = vmatprep.mubr.f32.mxu0 0.0
    %4147 = vmatmul.mubr.f32.gmra.mrb[0].mxu0 %v3997
    %v4148 = vpop.f32.mrb[0].mxu0
    %v4149 = vadd.f32 %v4041, %v4148
    %v4150 = vpop.f32.mrb[0].mxu0
    %4151 = vmatprep.mubr.f32.mxu0 0.0
    %4152 = vmatmul.mubr.f32.gmra.mrb[0].mxu0 %v3998
    %v4153 = vpop.f32.mrb[0].mxu0
    %v4154 = vadd.f32 %v4041, %v4153
    %v4155 = vpop.f32.mrb[0].mxu0
    %4156 = vmatprep.mubr.f32.mxu0 0.0
    %4157 = vmatmul.mubr.f32.gmra.mrb[0].mxu0 %v3999
    %v4158 = vpop.f32.mrb[0].mxu0
    %v4159 = vadd.f32 %v4041, %v4158
    %v4160 = vpop.f32.mrb[0].mxu0
    %4161 = vmatprep.mubr.f32.mxu0 0.0
    %4162 = vmatmul.mubr.f32.gmra.mrb[0].mxu0 %v4000
    %v4163 = vpop.f32.mrb[0].mxu0
    %v4164 = vadd.f32 %v4041, %v4163
    %v4165 = vpop.f32.mrb[0].mxu0
    %4166 = vmatprep.mubr.f32.mxu0 0.0
    %4167 = vmatmul.mubr.f32.gmra.mrb[0].mxu0 %v4001
    %v4168 = vpop.f32.mrb[0].mxu0
    %v4169 = vadd.f32 %v4041, %v4168
    %v4170 = vpop.f32.mrb[0].mxu0
    %4171 = vmatprep.mubr.f32.mxu0 0.0
    %4172 = vmatmul.mubr.f32.gmra.mrb[0].mxu0 %v4002
    %v4173 = vpop.f32.mrb[0].mxu0
    %v4174 = vadd.f32 %v4041, %v4173
    %v4175 = vpop.f32.mrb[0].mxu0
    %4176 = vmatprep.mubr.f32.mxu0 0.0
    %4177 = vmatmul.mubr.f32.gmra.mrb[0].mxu0 %v4003
    %v4178 = vpop.f32.mrb[0].mxu0
    %v4179 = vadd.f32 %v4041, %v4178
    %v4180 = vpop.f32.mrb[0].mxu0
    %4181 = vmatprep.mubr.f32.mxu0 0.0
    %4182 = vmatmul.mubr.f32.gmra.mrb[0].mxu0 %v4004
    %v4183 = vpop.f32.mrb[0].mxu0
    %v4184 = vadd.f32 %v4041, %v4183
    %v4185 = vpop.f32.mrb[0].mxu0
    %4186 = vmatprep.mubr.f32.mxu0 0.0
    %4187 = vmatmul.mubr.f32.gmra.mrb[0].mxu0 %v4005
    %v4188 = vpop.f32.mrb[0].mxu0
    %v4189 = vadd.f32 %v4041, %v4188
    %v4190 = vpop.f32.mrb[0].mxu0
    %4191 = vmatprep.mubr.f32.mxu0 0.0
    %4192 = vmatmul.mubr.f32.gmra.mrb[0].mxu0 %v4006
    %v4193 = vpop.f32.mrb[0].mxu0
    %v4194 = vadd.f32 %v4041, %v4193
    %v4195 = vpop.f32.mrb[0].mxu0
    %4196 = vmatprep.mubr.f32.mxu0 0.0
    %4197 = vmatmul.mubr.f32.gmra.mrb[0].mxu0 %v4007
    %v4198 = vpop.f32.mrb[0].mxu0
    %v4199 = vadd.f32 %v4041, %v4198
    %v4200 = vpop.f32.mrb[0].mxu0
    %4201 = vmatprep.mubr.f32.mxu0 0.0
    %4202 = vmatmul.mubr.f32.gmra.mrb[0].mxu0 %v4008
    %v4203 = vpop.f32.mrb[0].mxu0
    %v4204 = vadd.f32 %v4041, %v4203
    %v4205 = vpop.f32.mrb[0].mxu0
    %4206 = vmatprep.mubr.f32.mxu0 0.0
    %4207 = vmatmul.mubr.f32.gmra.mrb[0].mxu0 %v4009
    %v4208 = vpop.f32.mrb[0].mxu0
    %v4209 = vadd.f32 %v4041, %v4208
    %v4210 = vpop.f32.mrb[0].mxu0
    %4211 = vmatprep.mubr.f32.mxu0 0.0
    %4212 = vmatmul.mubr.f32.gmra.mrb[0].mxu0 %v4010
    %v4213 = vpop.f32.mrb[0].mxu0
    %v4214 = vadd.f32 %v4041, %v4213
    %v4215 = vpop.f32.mrb[0].mxu0
    %4216 = vmatprep.mubr.f32.mxu0 0.0
    %4217 = vmatmul.mubr.f32.gmra.mrb[0].mxu0 %v4011
    %v4218 = vpop.f32.mrb[0].mxu0
    %v4219 = vadd.f32 %v4041, %v4218
    %v4220 = vpop.f32.mrb[0].mxu0
    %4221 = vmatprep.mubr.f32.mxu0 0.0
    %4222 = vmatmul.mubr.f32.gmra.mrb[0].mxu0 %v4012
    %v4223 = vpop.f32.mrb[0].mxu0
    %v4224 = vadd.f32 %v4041, %v4223
    %v4225 = vpop.f32.mrb[0].mxu0
    %4226 = vmatprep.mubr.f32.mxu0 0.0
    %4227 = vmatmul.mubr.f32.gmra.mrb[0].mxu0 %v4013
    %v4228 = vpop.f32.mrb[0].mxu0
    %v4229 = vadd.f32 %v4041, %v4228
    %v4230 = vpop.f32.mrb[0].mxu0
    %4231 = vmatprep.mubr.f32.mxu0 0.0
    %4232 = vmatmul.mubr.f32.gmra.mrb[0].mxu0 %v4014
    %v4233 = vpop.f32.mrb[0].mxu0
    %v4234 = vadd.f32 %v4041, %v4233
    %v4235 = vpop.f32.mrb[0].mxu0
    %4236 = vmatprep.mubr.f32.mxu0 0.0
    %4237 = vmatmul.mubr.f32.gmra.mrb[0].mxu0 %v4015
    %v4238 = vpop.f32.mrb[0].mxu0
    %v4239 = vadd.f32 %v4041, %v4238
    %v4240 = vpop.f32.mrb[0].mxu0
    %4241 = vmatprep.mubr.f32.mxu0 0.0
    %4242 = vmatmul.mubr.f32.gmra.mrb[0].mxu0 %v4016
    %v4243 = vpop.f32.mrb[0].mxu0
    %v4244 = vadd.f32 %v4041, %v4243
    %v4245 = vpop.f32.mrb[0].mxu0
    %4246 = vmatprep.mubr.f32.mxu0 0.0
    %4247 = vmatmul.mubr.f32.gmra.mrb[0].mxu0 %v4017
    %v4248 = vpop.f32.mrb[0].mxu0
    %v4249 = vadd.f32 %v4041, %v4248
    %v4250 = vpop.f32.mrb[0].mxu0
    %4251 = vmatprep.mubr.f32.mxu0 0.0
    %4252 = vmatmul.mubr.f32.gmra.mrb[0].mxu0 %v4018
    %v4253 = vpop.f32.mrb[0].mxu0
    %v4254 = vadd.f32 %v4041, %v4253
    %v4255 = vpop.f32.mrb[0].mxu0
    %4256 = vmatprep.mubr.f32.mxu0 0.0
    %4257 = vmatmul.mubr.f32.gmra.mrb[0].mxu0 %v4019
    %v4258 = vpop.f32.mrb[0].mxu0
    %v4259 = vadd.f32 %v4041, %v4258
    %v4260 = vpop.f32.mrb[0].mxu0
    %4261 = vmatprep.mubr.f32.mxu0 0.0
    %4262 = vmatmul.mubr.f32.gmra.mrb[0].mxu0 %v4020
    %v4263 = vpop.f32.mrb[0].mxu0
    %v4264 = vadd.f32 %v4041, %v4263
    %v4265 = vpop.f32.mrb[0].mxu0
    %4266 = vdwg.mxu0
    %v4267 = vld [vmem:[%s6 + $0xa] sm:$0x1]
    %v4268 = vld [vmem:[%s6 + $0xc] sm:$0x1]
    %v4269 = vlaneseq
    %v4270 = vshrl.u32 %v4269, 7
    %v4271 = vsub.s32 0, %v4270
    %v4272 = vrot.slane %v4268, %v4271
    %v4273 = vsub.f32 %v4109, %v4272
    %v4274 = vsub.f32 %v4114, %v4272
    %v4275 = vsub.f32 %v4119, %v4272
    %v4276 = vsub.f32 %v4124, %v4272
    %v4277 = vsub.f32 %v4129, %v4272
    %v4278 = vsub.f32 %v4134, %v4272
    %v4279 = vsub.f32 %v4139, %v4272
    %v4280 = vsub.f32 %v4144, %v4272
    %v4281 = vsub.f32 %v4149, %v4272
    %v4282 = vsub.f32 %v4154, %v4272
    %v4283 = vsub.f32 %v4159, %v4272
    %v4284 = vsub.f32 %v4164, %v4272
    %v4285 = vsub.f32 %v4169, %v4272
    %v4286 = vsub.f32 %v4174, %v4272
    %v4287 = vsub.f32 %v4179, %v4272
    %v4288 = vsub.f32 %v4184, %v4272
    %v4289 = vsub.f32 %v4189, %v4272
    %v4290 = vsub.f32 %v4194, %v4272
    %v4291 = vsub.f32 %v4199, %v4272
    %v4292 = vsub.f32 %v4204, %v4272
    %v4293 = vsub.f32 %v4209, %v4272
    %v4294 = vsub.f32 %v4214, %v4272
    %v4295 = vsub.f32 %v4219, %v4272
    %v4296 = vsub.f32 %v4224, %v4272
    %v4297 = vsub.f32 %v4229, %v4272
    %v4298 = vsub.f32 %v4234, %v4272
    %v4299 = vsub.f32 %v4239, %v4272
    %v4300 = vsub.f32 %v4244, %v4272
    %v4301 = vsub.f32 %v4249, %v4272
    %v4302 = vsub.f32 %v4254, %v4272
    %v4303 = vsub.f32 %v4259, %v4272
    %v4304 = vsub.f32 %v4264, %v4272
    %v4305 = vlaneseq
    %v4306 = vshrl.u32 %v4305, 7
    %v4307 = vsub.s32 0, %v4306
    %v4308 = vrot.slane %v4267, %v4307
    %v4309 = vmul.f32 %v4308, %v4273
    %v4310 = vmul.f32 %v4308, %v4274
    %v4311 = vmul.f32 %v4308, %v4275
    %v4312 = vmul.f32 %v4308, %v4276
    %v4313 = vmul.f32 %v4308, %v4277
    %v4314 = vmul.f32 %v4308, %v4278
    %v4315 = vmul.f32 %v4308, %v4279
    %v4316 = vmul.f32 %v4308, %v4280
    %v4317 = vmul.f32 %v4308, %v4281
    %v4318 = vmul.f32 %v4308, %v4282
    %v4319 = vmul.f32 %v4308, %v4283
    %v4320 = vmul.f32 %v4308, %v4284
    %v4321 = vmul.f32 %v4308, %v4285
    %v4322 = vmul.f32 %v4308, %v4286
    %v4323 = vmul.f32 %v4308, %v4287
    %v4324 = vmul.f32 %v4308, %v4288
    %v4325 = vmul.f32 %v4308, %v4289
    %v4326 = vmul.f32 %v4308, %v4290
    %v4327 = vmul.f32 %v4308, %v4291
    %v4328 = vmul.f32 %v4308, %v4292
    %v4329 = vmul.f32 %v4308, %v4293
    %v4330 = vmul.f32 %v4308, %v4294
    %v4331 = vmul.f32 %v4308, %v4295
    %v4332 = vmul.f32 %v4308, %v4296
    %v4333 = vmul.f32 %v4308, %v4297
    %v4334 = vmul.f32 %v4308, %v4298
    %v4335 = vmul.f32 %v4308, %v4299
    %v4336 = vmul.f32 %v4308, %v4300
    %v4337 = vmul.f32 %v4308, %v4301
    %v4338 = vmul.f32 %v4308, %v4302
    %v4339 = vmul.f32 %v4308, %v4303
    %v4340 = vmul.f32 %v4308, %v4304
    %v4341 = vld [vmem:[%s6 + $0xd] sm:$0x1]
    %v4342 = vadd.f32 %v4341, 1e-05
    %v4343 = vrsqrt.pop %v4342
    %v4344 = vlaneseq
    %v4345 = vshrl.u32 %v4344, 7
    %v4346 = vsub.s32 0, %v4345
    %v4347 = vrot.slane %v4343, %v4346
    %v4348 = vmul.f32 %v4309, %v4347
    %v4349 = vmul.f32 %v4310, %v4347
    %v4350 = vmul.f32 %v4311, %v4347
    %v4351 = vmul.f32 %v4312, %v4347
    %v4352 = vmul.f32 %v4313, %v4347
    %v4353 = vmul.f32 %v4314, %v4347
    %v4354 = vmul.f32 %v4315, %v4347
    %v4355 = vmul.f32 %v4316, %v4347
    %v4356 = vmul.f32 %v4317, %v4347
    %v4357 = vmul.f32 %v4318, %v4347
    %v4358 = vmul.f32 %v4319, %v4347
    %v4359 = vmul.f32 %v4320, %v4347
    %v4360 = vmul.f32 %v4321, %v4347
    %v4361 = vmul.f32 %v4322, %v4347
    %v4362 = vmul.f32 %v4323, %v4347
    %v4363 = vmul.f32 %v4324, %v4347
    %v4364 = vmul.f32 %v4325, %v4347
    %v4365 = vmul.f32 %v4326, %v4347
    %v4366 = vmul.f32 %v4327, %v4347
    %v4367 = vmul.f32 %v4328, %v4347
    %v4368 = vmul.f32 %v4329, %v4347
    %v4369 = vmul.f32 %v4330, %v4347
    %v4370 = vmul.f32 %v4331, %v4347
    %v4371 = vmul.f32 %v4332, %v4347
    %v4372 = vmul.f32 %v4333, %v4347
    %v4373 = vmul.f32 %v4334, %v4347
    %v4374 = vmul.f32 %v4335, %v4347
    %v4375 = vmul.f32 %v4336, %v4347
    %v4376 = vmul.f32 %v4337, %v4347
    %v4377 = vmul.f32 %v4338, %v4347
    %v4378 = vmul.f32 %v4339, %v4347
    %v4379 = vmul.f32 %v4340, %v4347
    %v4380 = vld [vmem:[%s6 + $0xb] sm:$0x1]
    %v4381 = vlaneseq
    %v4382 = vshrl.u32 %v4381, 7
    %v4383 = vsub.s32 0, %v4382
    %v4384 = vrot.slane %v4380, %v4383
    %v4385 = vadd.f32 %v4348, %v4384
    %v4386 = vadd.f32 %v4349, %v4384
    %v4387 = vadd.f32 %v4350, %v4384
    %v4388 = vadd.f32 %v4351, %v4384
    %v4389 = vadd.f32 %v4352, %v4384
    %v4390 = vadd.f32 %v4353, %v4384
    %v4391 = vadd.f32 %v4354, %v4384
    %v4392 = vadd.f32 %v4355, %v4384
    %v4393 = vadd.f32 %v4356, %v4384
    %v4394 = vadd.f32 %v4357, %v4384
    %v4395 = vadd.f32 %v4358, %v4384
    %v4396 = vadd.f32 %v4359, %v4384
    %v4397 = vadd.f32 %v4360, %v4384
    %v4398 = vadd.f32 %v4361, %v4384
    %v4399 = vadd.f32 %v4362, %v4384
    %v4400 = vadd.f32 %v4363, %v4384
    %v4401 = vadd.f32 %v4364, %v4384
    %v4402 = vadd.f32 %v4365, %v4384
    %v4403 = vadd.f32 %v4366, %v4384
    %v4404 = vadd.f32 %v4367, %v4384
    %v4405 = vadd.f32 %v4368, %v4384
    %v4406 = vadd.f32 %v4369, %v4384
    %v4407 = vadd.f32 %v4370, %v4384
    %v4408 = vadd.f32 %v4371, %v4384
    %v4409 = vadd.f32 %v4372, %v4384
    %v4410 = vadd.f32 %v4373, %v4384
    %v4411 = vadd.f32 %v4374, %v4384
    %v4412 = vadd.f32 %v4375, %v4384
    %v4413 = vadd.f32 %v4376, %v4384
    %v4414 = vadd.f32 %v4377, %v4384
    %v4415 = vadd.f32 %v4378, %v4384
    %v4416 = vadd.f32 %v4379, %v4384
    %v4417 = vmax.f32 %v4385, 0.0
    %v4418 = vmax.f32 %v4386, 0.0
    %v4419 = vmax.f32 %v4387, 0.0
    %v4420 = vmax.f32 %v4388, 0.0
    %v4421 = vmax.f32 %v4389, 0.0
    %v4422 = vmax.f32 %v4390, 0.0
    %v4423 = vmax.f32 %v4391, 0.0
    %v4424 = vmax.f32 %v4392, 0.0
    %v4425 = vmax.f32 %v4393, 0.0
    %v4426 = vmax.f32 %v4394, 0.0
    %v4427 = vmax.f32 %v4395, 0.0
    %v4428 = vmax.f32 %v4396, 0.0
    %v4429 = vmax.f32 %v4397, 0.0
    %v4430 = vmax.f32 %v4398, 0.0
    %v4431 = vmax.f32 %v4399, 0.0
    %v4432 = vmax.f32 %v4400, 0.0
    %v4433 = vmax.f32 %v4401, 0.0
    %v4434 = vmax.f32 %v4402, 0.0
    %v4435 = vmax.f32 %v4403, 0.0
    %v4436 = vmax.f32 %v4404, 0.0
    %v4437 = vmax.f32 %v4405, 0.0
    %v4438 = vmax.f32 %v4406, 0.0
    %v4439 = vmax.f32 %v4407, 0.0
    %v4440 = vmax.f32 %v4408, 0.0
    %v4441 = vmax.f32 %v4409, 0.0
    %v4442 = vmax.f32 %v4410, 0.0
    %v4443 = vmax.f32 %v4411, 0.0
    %v4444 = vmax.f32 %v4412, 0.0
    %v4445 = vmax.f32 %v4413, 0.0
    %v4446 = vmax.f32 %v4414, 0.0
    %v4447 = vmax.f32 %v4415, 0.0
    %v4448 = vmax.f32 %v4416, 0.0
    %v4449 = vld [vmem:[#allocation10] sm:$0xff]
    %v4450 = vld [vmem:[#allocation10 + $0x8] sm:$0xff]
    %4451 = vmatprep.subr.mxu0 0.0
    %4452 = vmatpush1.msra.mxu0 %v4417
    %4453 = vmatprep.subr.mxu0 0.0
    %4454 = vmatpush1.msra.mxu0 %v4418
    %4455 = vmatprep.subr.mxu0 0.0
    %4456 = vmatpush1.msra.mxu0 %v4419
    %4457 = vmatprep.subr.mxu0 0.0
    %4458 = vmatpush1.msra.mxu0 %v4420
    %4459 = vmatprep.subr.mxu0 0.0
    %4460 = vmatpush1.msra.mxu0 %v4421
    %4461 = vmatprep.subr.mxu0 0.0
    %4462 = vmatpush1.msra.mxu0 %v4422
    %4463 = vmatprep.subr.mxu0 0.0
    %4464 = vmatpush1.msra.mxu0 %v4423
    %4465 = vmatprep.subr.mxu0 0.0
    %4466 = vmatpush1.msra.mxu0 %v4424
    %4467 = vmatprep.subr.mxu0 0.0
    %4468 = vmatpush1.msra.mxu0 %v4425
    %4469 = vmatprep.subr.mxu0 0.0
    %4470 = vmatpush1.msra.mxu0 %v4426
    %4471 = vmatprep.subr.mxu0 0.0
    %4472 = vmatpush1.msra.mxu0 %v4427
    %4473 = vmatprep.subr.mxu0 0.0
    %4474 = vmatpush1.msra.mxu0 %v4428
    %4475 = vmatprep.subr.mxu0 0.0
    %4476 = vmatpush1.msra.mxu0 %v4429
    %4477 = vmatprep.subr.mxu0 0.0
    %4478 = vmatpush1.msra.mxu0 %v4430
    %4479 = vmatprep.subr.mxu0 0.0
    %4480 = vmatpush1.msra.mxu0 %v4431
    %4481 = vmatprep.subr.mxu0 0.0
    %4482 = vmatpush1.msra.mxu0 %v4432
    %4483 = vmatprep.subr.mxu0 0.0
    %4484 = vmatpush1.msra.mxu0 %v4433
    %4485 = vmatprep.subr.mxu0 0.0
    %4486 = vmatpush1.msra.mxu0 %v4434
    %4487 = vmatprep.subr.mxu0 0.0
    %4488 = vmatpush1.msra.mxu0 %v4435
    %4489 = vmatprep.subr.mxu0 0.0
    %4490 = vmatpush1.msra.mxu0 %v4436
    %4491 = vmatprep.subr.mxu0 0.0
    %4492 = vmatpush1.msra.mxu0 %v4437
    %4493 = vmatprep.subr.mxu0 0.0
    %4494 = vmatpush1.msra.mxu0 %v4438
    %4495 = vmatprep.subr.mxu0 0.0
    %4496 = vmatpush1.msra.mxu0 %v4439
    %4497 = vmatprep.subr.mxu0 0.0
    %4498 = vmatpush1.msra.mxu0 %v4440
    %4499 = vmatprep.subr.mxu0 0.0
    %4500 = vmatpush1.msra.mxu0 %v4441
    %4501 = vmatprep.subr.mxu0 0.0
    %4502 = vmatpush1.msra.mxu0 %v4442
    %4503 = vmatprep.subr.mxu0 0.0
    %4504 = vmatpush1.msra.mxu0 %v4443
    %4505 = vmatprep.subr.mxu0 0.0
    %4506 = vmatpush1.msra.mxu0 %v4444
    %4507 = vmatprep.subr.mxu0 0.0
    %4508 = vmatpush1.msra.mxu0 %v4445
    %4509 = vmatprep.subr.mxu0 0.0
    %4510 = vmatpush1.msra.mxu0 %v4446
    %4511 = vmatprep.subr.mxu0 0.0
    %4512 = vmatpush1.msra.mxu0 %v4447
    %4513 = vmatprep.subr.mxu0 0.0
    %4514 = vmatpush1.msra.mxu0 %v4448
    %4515 = vmatprep.mubr.f32.mxu0 %v4450
    %4516 = vmatmul.mubr.f32.gmra.mrb[0].mxu0 %v4449
    %v4517 = vpop.f32.mrb[0].mxu0
    %v4518 = vadd.f32 0.0, %v4517
    %v4519 = vpop.f32.mrb[0].mxu0
    %4520 = vdwg.mxu0
    %v4521 = vld [vmem:[#allocation11 + $0x300] sm:$0xff]
    %v4522 = vld [vmem:[#allocation11 + $0x308] sm:$0xff]
    %v4523 = vld [vmem:[#allocation11 + $0x310] sm:$0xff]
    %v4524 = vld [vmem:[#allocation11 + $0x318] sm:$0xff]
    %v4525 = vld [vmem:[#allocation11 + $0x320] sm:$0xff]
    %v4526 = vld [vmem:[#allocation11 + $0x328] sm:$0xff]
    %v4527 = vld [vmem:[#allocation11 + $0x330] sm:$0xff]
    %v4528 = vld [vmem:[#allocation11 + $0x338] sm:$0xff]
    %v4529 = vld [vmem:[#allocation11 + $0x340] sm:$0xff]
    %v4530 = vld [vmem:[#allocation11 + $0x348] sm:$0xff]
    %v4531 = vld [vmem:[#allocation11 + $0x350] sm:$0xff]
    %v4532 = vld [vmem:[#allocation11 + $0x358] sm:$0xff]
    %v4533 = vld [vmem:[#allocation11 + $0x360] sm:$0xff]
    %v4534 = vld [vmem:[#allocation11 + $0x368] sm:$0xff]
    %v4535 = vld [vmem:[#allocation11 + $0x370] sm:$0xff]
    %v4536 = vld [vmem:[#allocation11 + $0x378] sm:$0xff]
    %v4537 = vld [vmem:[%s6 + $0xe] sm:$0x1]
    %v4538 = vlaneseq
    %v4539 = vshrl.u32 %v4538, 7
    %v4540 = vsub.s32 0, %v4539
    %v4541 = vrot.slane %v4537, %v4540
    %4542 = vmatprep.subr.mxu0 0.0
    %4543 = vmatpush1.msra.mxu0 %v4521
    %4544 = vmatprep.subr.mxu0 0.0
    %4545 = vmatpush1.msra.mxu0 %v4522
    %4546 = vmatprep.subr.mxu0 0.0
    %4547 = vmatpush1.msra.mxu0 %v4523
    %4548 = vmatprep.subr.mxu0 0.0
    %4549 = vmatpush1.msra.mxu0 %v4524
    %4550 = vmatprep.subr.mxu0 0.0
    %4551 = vmatpush1.msra.mxu0 %v4525
    %4552 = vmatprep.subr.mxu0 0.0
    %4553 = vmatpush1.msra.mxu0 %v4526
    %4554 = vmatprep.subr.mxu0 0.0
    %4555 = vmatpush1.msra.mxu0 %v4527
    %4556 = vmatprep.subr.mxu0 0.0
    %4557 = vmatpush1.msra.mxu0 %v4528
    %4558 = vmatprep.subr.mxu0 0.0
    %4559 = vmatpush1.msra.mxu0 %v4529
    %4560 = vmatprep.subr.mxu0 0.0
    %4561 = vmatpush1.msra.mxu0 %v4530
    %4562 = vmatprep.subr.mxu0 0.0
    %4563 = vmatpush1.msra.mxu0 %v4531
    %4564 = vmatprep.subr.mxu0 0.0
    %4565 = vmatpush1.msra.mxu0 %v4532
    %4566 = vmatprep.subr.mxu0 0.0
    %4567 = vmatpush1.msra.mxu0 %v4533
    %4568 = vmatprep.subr.mxu0 0.0
    %4569 = vmatpush1.msra.mxu0 %v4534
    %4570 = vmatprep.subr.mxu0 0.0
    %4571 = vmatpush1.msra.mxu0 %v4535
    %4572 = vmatprep.subr.mxu0 0.0
    %4573 = vmatpush1.msra.mxu0 %v4536
    %4574 = vmatprep.subr.mxu0 0.0
    %4575 = vmatpush1.msra.mxu0 0.0
    %4576 = vmatprep.subr.mxu0 0.0
    %4577 = vmatpush1.msra.mxu0 0.0
    %4578 = vmatprep.subr.mxu0 0.0
    %4579 = vmatpush1.msra.mxu0 0.0
    %4580 = vmatprep.subr.mxu0 0.0
    %4581 = vmatpush1.msra.mxu0 0.0
    %4582 = vmatprep.subr.mxu0 0.0
    %4583 = vmatpush1.msra.mxu0 0.0
    %4584 = vmatprep.subr.mxu0 0.0
    %4585 = vmatpush1.msra.mxu0 0.0
    %4586 = vmatprep.subr.mxu0 0.0
    %4587 = vmatpush1.msra.mxu0 0.0
    %4588 = vmatprep.subr.mxu0 0.0
    %4589 = vmatpush1.msra.mxu0 0.0
    %4590 = vmatprep.subr.mxu0 0.0
    %4591 = vmatpush1.msra.mxu0 0.0
    %4592 = vmatprep.subr.mxu0 0.0
    %4593 = vmatpush1.msra.mxu0 0.0
    %4594 = vmatprep.subr.mxu0 0.0
    %4595 = vmatpush1.msra.mxu0 0.0
    %4596 = vmatprep.subr.mxu0 0.0
    %4597 = vmatpush1.msra.mxu0 0.0
    %4598 = vmatprep.subr.mxu0 0.0
    %4599 = vmatpush1.msra.mxu0 0.0
    %4600 = vmatprep.subr.mxu0 0.0
    %4601 = vmatpush1.msra.mxu0 0.0
    %4602 = vmatprep.subr.mxu0 0.0
    %4603 = vmatpush1.msra.mxu0 0.0
    %4604 = vmatprep.subr.mxu0 0.0
    %4605 = vmatpush1.msra.mxu0 0.0
    %4606 = vmatprep.mubr.f32.mxu0 0.0
    %4607 = vmatmul.mubr.f32.gmra.mrb[0].mxu0 %v4518
    %v4608 = vpop.f32.mrb[0].mxu0
    %v4609 = vadd.f32 %v4541, %v4608
    %v4610 = vpop.f32.mrb[0].mxu0
    %4611 = vdwg.mxu0
    %v4612 = vmax.f32 %v4609, 0.0
    %v4613 = vld [vmem:[#allocation11 + $0x380] sm:$0xff]
    %v4614 = vld [vmem:[#allocation11 + $0x388] sm:$0xff]
    %v4615 = vld [vmem:[#allocation11 + $0x390] sm:$0xff]
    %v4616 = vld [vmem:[#allocation11 + $0x398] sm:$0xff]
    %v4617 = vld [vmem:[#allocation11 + $0x3a0] sm:$0xff]
    %v4618 = vld [vmem:[#allocation11 + $0x3a8] sm:$0xff]
    %v4619 = vld [vmem:[#allocation11 + $0x3b0] sm:$0xff]
    %v4620 = vld [vmem:[#allocation11 + $0x3b8] sm:$0xff]
    %v4621 = vld [vmem:[#allocation11 + $0x3c0] sm:$0xff]
    %v4622 = vld [vmem:[#allocation11 + $0x3c8] sm:$0xff]
    %v4623 = vld [vmem:[#allocation11 + $0x3d0] sm:$0xff]
    %v4624 = vld [vmem:[#allocation11 + $0x3d8] sm:$0xff]
    %v4625 = vld [vmem:[#allocation11 + $0x3e0] sm:$0xff]
    %v4626 = vld [vmem:[#allocation11 + $0x3e8] sm:$0xff]
    %v4627 = vld [vmem:[#allocation11 + $0x3f0] sm:$0xff]
    %v4628 = vld [vmem:[#allocation11 + $0x3f8] sm:$0xff]
    %v4629 = vld [vmem:[%s6 + $0xf] sm:$0x1]
    %v4630 = vlaneseq
    %v4631 = vshrl.u32 %v4630, 7
    %v4632 = vsub.s32 0, %v4631
    %v4633 = vrot.slane %v4629, %v4632
    %4634 = vmatprep.subr.mxu0 0.0
    %4635 = vmatpush1.msra.mxu0 %v4613
    %4636 = vmatprep.subr.mxu0 0.0
    %4637 = vmatpush1.msra.mxu0 %v4614
    %4638 = vmatprep.subr.mxu0 0.0
    %4639 = vmatpush1.msra.mxu0 %v4615
    %4640 = vmatprep.subr.mxu0 0.0
    %4641 = vmatpush1.msra.mxu0 %v4616
    %4642 = vmatprep.subr.mxu0 0.0
    %4643 = vmatpush1.msra.mxu0 %v4617
    %4644 = vmatprep.subr.mxu0 0.0
    %4645 = vmatpush1.msra.mxu0 %v4618
    %4646 = vmatprep.subr.mxu0 0.0
    %4647 = vmatpush1.msra.mxu0 %v4619
    %4648 = vmatprep.subr.mxu0 0.0
    %4649 = vmatpush1.msra.mxu0 %v4620
    %4650 = vmatprep.subr.mxu0 0.0
    %4651 = vmatpush1.msra.mxu0 %v4621
    %4652 = vmatprep.subr.mxu0 0.0
    %4653 = vmatpush1.msra.mxu0 %v4622
    %4654 = vmatprep.subr.mxu0 0.0
    %4655 = vmatpush1.msra.mxu0 %v4623
    %4656 = vmatprep.subr.mxu0 0.0
    %4657 = vmatpush1.msra.mxu0 %v4624
    %4658 = vmatprep.subr.mxu0 0.0
    %4659 = vmatpush1.msra.mxu0 %v4625
    %4660 = vmatprep.subr.mxu0 0.0
    %4661 = vmatpush1.msra.mxu0 %v4626
    %4662 = vmatprep.subr.mxu0 0.0
    %4663 = vmatpush1.msra.mxu0 %v4627
    %4664 = vmatprep.subr.mxu0 0.0
    %4665 = vmatpush1.msra.mxu0 %v4628
    %4666 = vmatprep.subr.mxu0 0.0
    %4667 = vmatpush1.msra.mxu0 0.0
    %4668 = vmatprep.subr.mxu0 0.0
    %4669 = vmatpush1.msra.mxu0 0.0
    %4670 = vmatprep.subr.mxu0 0.0
    %4671 = vmatpush1.msra.mxu0 0.0
    %4672 = vmatprep.subr.mxu0 0.0
    %4673 = vmatpush1.msra.mxu0 0.0
    %4674 = vmatprep.subr.mxu0 0.0
    %4675 = vmatpush1.msra.mxu0 0.0
    %4676 = vmatprep.subr.mxu0 0.0
    %4677 = vmatpush1.msra.mxu0 0.0
    %4678 = vmatprep.subr.mxu0 0.0
    %4679 = vmatpush1.msra.mxu0 0.0
    %4680 = vmatprep.subr.mxu0 0.0
    %4681 = vmatpush1.msra.mxu0 0.0
    %4682 = vmatprep.subr.mxu0 0.0
    %4683 = vmatpush1.msra.mxu0 0.0
    %4684 = vmatprep.subr.mxu0 0.0
    %4685 = vmatpush1.msra.mxu0 0.0
    %4686 = vmatprep.subr.mxu0 0.0
    %4687 = vmatpush1.msra.mxu0 0.0
    %4688 = vmatprep.subr.mxu0 0.0
    %4689 = vmatpush1.msra.mxu0 0.0
    %4690 = vmatprep.subr.mxu0 0.0
    %4691 = vmatpush1.msra.mxu0 0.0
    %4692 = vmatprep.subr.mxu0 0.0
    %4693 = vmatpush1.msra.mxu0 0.0
    %4694 = vmatprep.subr.mxu0 0.0
    %4695 = vmatpush1.msra.mxu0 0.0
    %4696 = vmatprep.subr.mxu0 0.0
    %4697 = vmatpush1.msra.mxu0 0.0
    %4698 = vmatprep.mubr.f32.mxu0 0.0
    %4699 = vmatmul.mubr.f32.gmra.mrb[0].mxu0 %v4612
    %v4700 = vpop.f32.mrb[0].mxu0
    %v4701 = vadd.f32 %v4633, %v4700
    %v4702 = vpop.f32.mrb[0].mxu0
    %4703 = vdwg.mxu0
    %4704 = vst [vmem:[#allocation13] sm:$0xff] %v4701
    // Predicated region
    $region54: #{tpu_custom_call.1} parent=1 // pred_check
      _
    $region55: #{tpu_custom_call.1} parent=1 // pred_check_branch
      %4706 = sbr.rel (0) target = $region57
    $region56: #{tpu_custom_call.1} parent=1 // pred_region
      %s4708 = ssub.s32 128, 128
      %4709 = vsyncadd [#allocation4], %s4708
      %s4711 = sshll.u32 [#allocation13], 4
      %s4712 = int_to_ptr.vmem [resolvable:$true] %s4711
      %4714 = dma.vmem_to_hbm [thread:$0]  %s4712, 128, %s7, [#allocation4]
    $region57: #{tpu_custom_call.1} parent=1 // pred_fallthru
      _
    // Predicated region
    $region58: #{tpu_custom_call.1} parent=1 // pred_check
      _
    $region59: #{tpu_custom_call.1} parent=1 // pred_check_branch
      %4716 = sbr.rel (0) target = $region61
    $region60: #{tpu_custom_call.1} parent=1 // pred_region
      %4717 = dma.done [#allocation4], 128
    $region61: #{tpu_custom_call.1} parent=1 // pred_fallthru
      _
    %4718 = vsyncpa [#allocation3], 1
    %4719 = vsyncpa [#allocation6], 1
    %4720 = vsyncpa [#allocation9], 1
    %4721 = vsyncpa [#allocation12], 1
    %4722 = vsyncpa [#allocation4], 1

</llo_original>
